<compile_context>
chip_gen: v5e
topology: v5e:2x2
jax: 0.10.0
libtpu: 0.0.40
codegen_flags: <defaults>
</compile_context>

<pallas_src>
import functools
import numpy as np
import jax
import jax.numpy as jnp
from jax.experimental import pallas as pl
from jax.experimental.pallas import tpu as pltpu

BN_EPS = 1e-5
_NT = (((1,), (1,)), ((), ()))        # dot_general "A @ B^T" dimension numbers


# --------------------------- Pallas kernel 1: trunk ------------------------ #
def _trunk_kernel(xcat_ref, w0a_ref, b0a_ref, w0b_ref, b0b_ref,
                  whf_t_ref, bhf_ref,
                  xt_ref, hf_ref,
                  ypad_ref, *, Hl, Wl):
    """One batch element.  xcat_ref is the zero-padded concat input, flattened
    row-major to ((Hl+3)*(Wl+2), Ccat).  xt output is in the flat padded-width
    layout (Hl*(Wl+2), C); hf output is transposed/lane-dense (chf, Hl*(Wl+2));
    the wrapper strips the wrap-around columns."""
    Wp = Wl + 2
    HWp = Hl * Wp
    C = xt_ref.shape[1]
    bf = w0a_ref.dtype

    # Column-validity mask of the flat padded-width layout.
    col = jax.lax.broadcasted_iota(jnp.int32, (HWp, 1), 0) % Wp
    valid = col < Wl

    # Zero only the halo of the re-pad scratch (interior fully overwritten).
    ypad_ref[0:Wp + 1, :] = jnp.zeros((Wp + 1, C), ypad_ref.dtype)
    ypad_ref[Wp + 1 + HWp:(Hl + 3) * Wp, :] = jnp.zeros((2 * Wp - 1, C),
                                                        ypad_ref.dtype)

    # ---- conv0a: 3x3 conv as 9 flat-shifted-window matmuls, register acc ---
    acc = None
    center = None
    for k in range(9):
        off = (k // 3) * Wp + (k % 3)
        tap = xcat_ref[off:off + HWp, :]
        if k == 4:
            center = tap                      # reused by the h/f 1x1 conv
        contrib = jnp.dot(tap.astype(bf), w0a_ref[k],
                          preferred_element_type=jnp.float32)
        acc = contrib if acc is None else acc + contrib

    # BN scale is folded into w0a; only +bias and ReLU remain.  Wrap columns
    # are zeroed so they act as the left/right zero padding of conv0b.
    y1 = jnp.maximum(acc + b0a_ref[...], 0.0)
    ypad_ref[Wp + 1:Wp + 1 + HWp, :] = jnp.where(valid, y1, 0.0).astype(
        ypad_ref.dtype)

    # ---- conv0b: same trick on the re-padded intermediate ------------------
    acc = None
    for k in range(9):
        off = (k // 3) * Wp + (k % 3)
        tap = ypad_ref[off:off + HWp, :]
        contrib = jnp.dot(tap.astype(bf), w0b_ref[k],
                          preferred_element_type=jnp.float32)
        acc = contrib if acc is None else acc + contrib
    xt_ref[...] = jnp.maximum(acc + b0b_ref[...], 0.0).astype(xt_ref.dtype)

    # ---- h_cls / f_cls: fused 1x1 conv over the un-padded input pixels -----
    # (centre tap == interior rows); transposed/NT matmul gives a lane-dense
    # (chf, HWp) output directly.  f32 operands for the final logits.
    hf_t = jax.lax.dot_general(whf_t_ref[...], center, _NT,
                               preferred_element_type=jnp.float32)
    hf_ref[...] = (hf_t + bhf_ref[...]).astype(hf_ref.dtype)


# --------------------------- Pallas kernel 2: head ------------------------- #
def _head_kernel(a_ref, xt_ref, xl_ref,
                 w2_ref, b2_ref,
                 w3t_ref, w3l_ref, b3a_ref,
                 w3b_ref, b3b_ref,
                 wp_t_ref, bp_ref,
                 out_ref):
    """One batch element: fused bilinear upsample + all 1x1 convs as matmuls.
    Output is lane-dense transposed (cls_p, th*tw)."""
    bf = xt_ref.dtype
    # Bilinear upsample (align_corners=True): one matmul against the
    # precomputed interpolation matrix (wrap-column coefficients are zero).
    xt_up = jnp.dot(a_ref[...], xt_ref[...], preferred_element_type=jnp.float32)
    # conv2 (1x1) with folded BN scale, +bias, ReLU.
    xl48 = jnp.maximum(
        jnp.dot(xl_ref[...], w2_ref[...], preferred_element_type=jnp.float32)
        + b2_ref[...], 0.0)
    # conv3 first 1x1 over concat([xt_up, xl48]) == split matmul.
    z = (jnp.dot(xt_up.astype(bf), w3t_ref[...],
                 preferred_element_type=jnp.float32)
         + jnp.dot(xl48.astype(bf), w3l_ref[...],
                   preferred_element_type=jnp.float32))
    z = jnp.maximum(z + b3a_ref[...], 0.0)
    z = jnp.maximum(
        jnp.dot(z.astype(bf), w3b_ref[...], preferred_element_type=jnp.float32)
        + b3b_ref[...], 0.0)
    # p_cls, transposed (NT) so the narrow class dim lands on sublanes and the
    # 256-wide spatial dim on lanes; f32 operands for headroom.
    out_t = jax.lax.dot_general(wp_t_ref[...], z, _NT,
                                preferred_element_type=jnp.float32)
    out_ref[...] = (out_t + bp_ref[...]).astype(out_ref.dtype)


# ------------------------------- glue helpers ------------------------------ #
def _interp_matrix(out_size, in_size):
    """1-D bilinear interpolation matrix, align_corners=True (numpy, f32)."""
    if out_size == 1:
        src = np.zeros((1,), np.float64)
    else:
        src = np.arange(out_size, dtype=np.float64) * (in_size - 1) / (out_size - 1)
    i0 = np.clip(np.floor(src).astype(np.int64), 0, in_size - 1)
    i1 = np.clip(i0 + 1, 0, in_size - 1)
    frac = src - i0
    m = np.zeros((out_size, in_size), np.float64)
    m[np.arange(out_size), i0] += 1.0 - frac
    m[np.arange(out_size), i1] += frac
    return m.astype(np.float32)


def _fold_bn(g, b, m, v):
    scale = g / jnp.sqrt(v + BN_EPS)
    return scale, b - m * scale


# -------------------------------- forward ---------------------------------- #
@jax.jit
def final_classifier_forward(xphf, xp, xh, xf, xl, p):
    N, _, Hl, Wl = xp.shape
    _, _, th, tw = xl.shape
    C = p['w0b'].shape[0]                 # in_dim
    C48 = p['w2'].shape[0]                # 48
    cls_p = p['p_cls_w'].shape[0]
    cls_h = p['h_cls_w'].shape[0]
    cls_f = p['f_cls_w'].shape[0]
    chf = cls_h + cls_f
    bf = jnp.bfloat16

    Wp = Wl + 2
    HWp = Hl * Wp
    Lp = (Hl + 3) * Wp                    # +1 top pad, +2 bottom (pad + slack)
    thw = th * tw

    # ---- single pre-fused trunk input: concat -> NHWC -> pad -> flatten ----
    # (kept f32 so the 9 unaligned shifted-window slices stay on a 32-bit ref;
    #  taps are cast to bf16 in-register before hitting the MXU.)
    xcat = jnp.concatenate([xphf, xp, xh, xf], axis=1)
    Ccat = xcat.shape[1]
    xcat_nhwc = jnp.transpose(xcat, (0, 2, 3, 1))
    xcat_flat = jnp.pad(xcat_nhwc, ((0, 0), (1, 2), (1, 1), (0, 0))).reshape(
        N, Lp, Ccat)

    # ---- trunk params: BN scale folded into bf16 weights --------------------
    s0a, b0a = _fold_bn(p['bn0a_g'], p['bn0a_b'], p['bn0a_m'], p['bn0a_v'])
    s0b, b0b = _fold_bn(p['bn0b_g'], p['bn0b_b'], p['bn0b_m'], p['bn0b_v'])
    w0a = (jnp.transpose(p['w0a'], (2, 3, 1, 0)).reshape(9, Ccat, C)
           * s0a[None, None, :]).astype(bf)
    w0b = (jnp.transpose(p['w0b'], (2, 3, 1, 0)).reshape(9, C, C)
           * s0b[None, None, :]).astype(bf)
    whf_t = jnp.concatenate([p['h_cls_w'][:, :, 0, 0],
                             p['f_cls_w'][:, :, 0, 0]], axis=0)    # (chf, Ccat) f32
    bhf = jnp.concatenate([p['h_cls_b'], p['f_cls_b']]).reshape(chf, 1)

    trunk_flops = N * (18 * HWp * Ccat * C + 18 * HWp * C * C
                       + 2 * HWp * Ccat * chf)
    trunk_bytes = (N * Lp * Ccat * 4 + 9 * Ccat * C * 2 + 9 * C * C * 2
                   + chf * Ccat * 4 + N * HWp * C * 2 + N * chf * HWp * 4)

    xt_flat, hf_t = pl.pallas_call(
        functools.partial(_trunk_kernel, Hl=Hl, Wl=Wl),
        out_shape=(jax.ShapeDtypeStruct((N, HWp, C), bf),
                   jax.ShapeDtypeStruct((N, chf, HWp), jnp.float32)),
        grid_spec=pltpu.PrefetchScalarGridSpec(
            num_scalar_prefetch=0,
            grid=(N,),                                  # 2-way parallel (v7x)
            in_specs=[
                pl.BlockSpec((None, Lp, Ccat), lambda b: (b, 0, 0)),  # input
                pl.BlockSpec((9, Ccat, C), lambda b: (0, 0, 0)),      # w0a*s
                pl.BlockSpec((1, C), lambda b: (0, 0)),               # b0a
                pl.BlockSpec((9, C, C), lambda b: (0, 0, 0)),         # w0b*s
                pl.BlockSpec((1, C), lambda b: (0, 0)),               # b0b
                pl.BlockSpec((chf, Ccat), lambda b: (0, 0)),          # h/f w^T
                pl.BlockSpec((chf, 1), lambda b: (0, 0)),             # h/f bias
            ],
            out_specs=[
                pl.BlockSpec((None, HWp, C), lambda b: (b, 0, 0)),
                pl.BlockSpec((None, chf, HWp), lambda b: (b, 0, 0)),
            ],
            scratch_shapes=[pltpu.VMEM((Lp, C), jnp.float32)],        # padded y1
        ),
        compiler_params=pltpu.CompilerParams(dimension_semantics=("parallel",)),
        cost_estimate=pl.CostEstimate(flops=trunk_flops, transcendentals=0,
                                      bytes_accessed=trunk_bytes),
    )(xcat_flat, w0a, b0a.reshape(1, C), w0b, b0b.reshape(1, C), whf_t, bhf)

    # hf is already channel-major; just drop the wrap-around columns.
    hf = hf_t.reshape(N, chf, Hl, Wp)[:, :, :, :Wl]
    xh_seg = hf[:, :cls_h]
    xf_seg = hf[:, cls_h:]

    # ---- bilinear upsample matrix over the padded-width flat layout --------
    Ay = _interp_matrix(th, Hl)
    Ax = _interp_matrix(tw, Wl)
    A = np.kron(Ay, Ax).reshape(thw, Hl, Wl)       # row I*tw+J, col (p, q)
    A_pad = np.zeros((thw, Hl, Wp), np.float32)
    A_pad[:, :, :Wl] = A                           # wrap columns stay 0
    A_pad = jnp.asarray(A_pad.reshape(thw, HWp), bf)

    xl_flat = jnp.transpose(xl, (0, 2, 3, 1)).reshape(N, thw, C).astype(bf)

    # ---- head params: BN scale folded into bf16 weights ---------------------
    s2, b2 = _fold_bn(p['bn2_g'], p['bn2_b'], p['bn2_m'], p['bn2_v'])
    w2 = (p['w2'][:, :, 0, 0] * s2[:, None]).T.astype(bf)          # (C, 48)
    s3a, b3a = _fold_bn(p['bn3a_g'], p['bn3a_b'], p['bn3a_m'], p['bn3a_v'])
    w3a = p['w3a'][:, :, 0, 0] * s3a[:, None]                      # (C, C+48) OI
    w3a_t = w3a[:, :C].T.astype(bf)                                # (C, C)
    w3a_l = w3a[:, C:].T.astype(bf)                                # (48, C)
    s3b, b3b = _fold_bn(p['bn3b_g'], p['bn3b_b'], p['bn3b_m'], p['bn3b_v'])
    w3b = (p['w3b'][:, :, 0, 0] * s3b[:, None]).T.astype(bf)       # (C, C)
    wp_t = p['p_cls_w'][:, :, 0, 0]                                # (cls_p, C) f32
    bpc = p['p_cls_b'].reshape(cls_p, 1)

    head_flops = N * thw * 2 * (HWp * C + C * C48 + (C + C48) * C
                                + C * C + C * cls_p)
    head_bytes = (thw * HWp * 2 + N * HWp * C * 2 + N * thw * C * 2
                  + (C * C48 + 2 * C * C + C48 * C) * 2
                  + cls_p * C * 4 + N * cls_p * thw * 4)

    p_t = pl.pallas_call(
        _head_kernel,
        out_shape=jax.ShapeDtypeStruct((N, cls_p, thw), jnp.float32),
        grid_spec=pltpu.PrefetchScalarGridSpec(
            num_scalar_prefetch=0,
            grid=(N,),                                  # 2-way parallel (v7x)
            in_specs=[
                pl.BlockSpec((thw, HWp), lambda b: (0, 0)),           # A_pad
                pl.BlockSpec((None, HWp, C), lambda b: (b, 0, 0)),    # xt
                pl.BlockSpec((None, thw, C), lambda b: (b, 0, 0)),    # xl
                pl.BlockSpec((C, C48), lambda b: (0, 0)),             # w2*s
                pl.BlockSpec((1, C48), lambda b: (0, 0)),
                pl.BlockSpec((C, C), lambda b: (0, 0)),               # w3a (xt)
                pl.BlockSpec((C48, C), lambda b: (0, 0)),             # w3a (xl48)
                pl.BlockSpec((1, C), lambda b: (0, 0)),
                pl.BlockSpec((C, C), lambda b: (0, 0)),               # w3b*s
                pl.BlockSpec((1, C), lambda b: (0, 0)),
                pl.BlockSpec((cls_p, C), lambda b: (0, 0)),           # p_cls w^T
                pl.BlockSpec((cls_p, 1), lambda b: (0, 0)),           # p_cls b
            ],
            out_specs=pl.BlockSpec((None, cls_p, thw), lambda b: (b, 0, 0)),
        ),
        compiler_params=pltpu.CompilerParams(dimension_semantics=("parallel",)),
        cost_estimate=pl.CostEstimate(flops=head_flops, transcendentals=0,
                                      bytes_accessed=head_bytes),
    )(A_pad, xt_flat, xl_flat,
      w2, b2.reshape(1, C48),
      w3a_t, w3a_l, b3a.reshape(1, C),
      w3b, b3b.reshape(1, C),
      wp_t, bpc)

    xp_seg = p_t.reshape(N, cls_p, th, tw)        # already NCHW
    return xp_seg, xh_seg, xf_seg


# ------------------------------ parameters ---------------------------------- #
def init_params(key, in_dim=32, hidden_dim=4, cls_p=7, cls_h=3, cls_f=2):
    c_cat = in_dim * 3 + (cls_p + cls_h + cls_f - 2) * 2 * hidden_dim
    keys = iter(jax.random.split(key, 40))
    p = {}

    def nrm(shape, scale):
        return scale * jax.random.normal(next(keys), shape, jnp.float32)

    def add_bn(prefix, c):
        p[prefix + '_g'] = 1.0 + 0.1 * jax.random.normal(next(keys), (c,), jnp.float32)
        p[prefix + '_b'] = nrm((c,), 0.1)
        p[prefix + '_m'] = nrm((c,), 0.1)
        p[prefix + '_v'] = 0.5 + jax.random.uniform(next(keys), (c,), jnp.float32)

    p['w0a'] = nrm((in_dim, c_cat, 3, 3), 0.02);  add_bn('bn0a', in_dim)
    p['w0b'] = nrm((in_dim, in_dim, 3, 3), 0.05); add_bn('bn0b', in_dim)
    p['w2'] = nrm((48, in_dim, 1, 1), 0.1);       add_bn('bn2', 48)
    p['w3a'] = nrm((in_dim, in_dim + 48, 1, 1), 0.1); add_bn('bn3a', in_dim)
    p['w3b'] = nrm((in_dim, in_dim, 1, 1), 0.1);  add_bn('bn3b', in_dim)
    p['p_cls_w'] = nrm((cls_p, in_dim, 1, 1), 0.2)
    p['p_cls_b'] = nrm((cls_p,), 0.1)
    p['h_cls_w'] = nrm((cls_h, c_cat, 1, 1), 0.1)
    p['h_cls_b'] = nrm((cls_h,), 0.1)
    p['f_cls_w'] = nrm((cls_f, c_cat, 1, 1), 0.1)
    p['f_cls_b'] = nrm((cls_f,), 0.1)
    return p


# --------------------------- pure-JAX reference ----------------------------- #
@jax.jit
def reference_forward(xphf, xp, xh, xf, xl, p):
    _, _, Hl, Wl = xp.shape
    _, _, th, tw = xl.shape
    hi = jax.lax.Precision.HIGHEST
    dn = ('NCHW', 'OIHW', 'NCHW')

    def conv(x, w, pad):
        return jax.lax.conv_general_dilated(x, w, (1, 1), ((pad, pad), (pad, pad)),
                                            dimension_numbers=dn)

    def bn(y, prefix):
        s, b = _fold_bn(p[prefix + '_g'], p[prefix + '_b'],
                        p[prefix + '_m'], p[prefix + '_v'])
        return y * s[None, :, None, None] + b[None, :, None, None]

    xcat = jnp.concatenate([xphf, xp, xh, xf], axis=1)
    y = jax.nn.relu(bn(conv(xcat, p['w0a'], 1), 'bn0a'))
    y = jax.nn.relu(bn(conv(y, p['w0b'], 1), 'bn0b'))

    Ay = jnp.asarray(_interp_matrix(th, Hl))
    Ax = jnp.asarray(_interp_matrix(tw, Wl))
    xt = jnp.einsum('Ip,Jq,ncpq->ncIJ', Ay, Ax, y, precision=hi)

    xl48 = jax.nn.relu(bn(conv(xl, p['w2'], 0), 'bn2'))
    x = jnp.concatenate([xt, xl48], axis=1)
    z = jax.nn.relu(bn(conv(x, p['w3a'], 0), 'bn3a'))
    z = jax.nn.relu(bn(conv(z, p['w3b'], 0), 'bn3b'))

    xp_seg = conv(z, p['p_cls_w'], 0) + p['p_cls_b'][None, :, None, None]
    xh_seg = conv(xcat, p['h_cls_w'], 0) + p['h_cls_b'][None, :, None, None]
    xf_seg = conv(xcat, p['f_cls_w'], 0) + p['f_cls_b'][None, :, None, None]
    return xp_seg, xh_seg, xf_seg


# ------------------------------------ main ----------------------------------- #
if __name__ == "__main__":
    key = jax.random.PRNGKey(0)
    k = jax.random.split(key, 6)

    in_dim, hidden_dim, cls_p, cls_h, cls_f = 32, 4, 7, 3, 2
    N, Hl, Wl, th, tw = 2, 8, 8, 16, 16
    c_phf = (cls_p + cls_h + cls_f - 2) * 2 * hidden_dim      # 80

    xphf = jax.random.normal(k[0], (N, c_phf, Hl, Wl), jnp.float32)
    xp = jax.random.normal(k[1], (N, in_dim, Hl, Wl), jnp.float32)
    xh = jax.random.normal(k[2], (N, in_dim, Hl, Wl), jnp.float32)
    xf = jax.random.normal(k[3], (N, in_dim, Hl, Wl), jnp.float32)
    xl = jax.random.normal(k[4], (N, in_dim, th, tw), jnp.float32)
    params = init_params(k[5], in_dim, hidden_dim, cls_p, cls_h, cls_f)

    outs = jax.block_until_ready(final_classifier_forward(xphf, xp, xh, xf, xl, params))
    xp_seg, xh_seg, xf_seg = outs
    assert xp_seg.shape == (N, cls_p, th, tw), xp_seg.shape
    assert xh_seg.shape == (N, cls_h, Hl, Wl), xh_seg.shape
    assert xf_seg.shape == (N, cls_f, Hl, Wl), xf_seg.shape

    refs = jax.block_until_ready(reference_forward(xphf, xp, xh, xf, xl, params))
    for name, got, ref in zip(("xp_seg", "xh_seg", "xf_seg"), outs, refs):
        got = np.asarray(got)
        ref = np.asarray(ref)
        if not np.allclose(got, ref, rtol=2e-2, atol=5e-3):
            max_err = float(np.max(np.abs(got - ref)))
            raise AssertionError(f"{name} mismatch vs reference, max abs err={max_err}")

    print("KERNEL_OK")
</pallas_src>

<mosaic_0001>
module attributes {stable_mosaic.version = 11 : i64} {
  func.func @_trunk_kernel(%arg0: i32, %arg1: memref<1x110x176xf32, #tpu.memory_space<vmem>>, %arg2: memref<9x176x32xbf16, #tpu.memory_space<vmem>>, %arg3: memref<1x32xf32, #tpu.memory_space<vmem>>, %arg4: memref<9x32x32xbf16, #tpu.memory_space<vmem>>, %arg5: memref<1x32xf32, #tpu.memory_space<vmem>>, %arg6: memref<5x176xf32, #tpu.memory_space<vmem>>, %arg7: memref<5x1xf32, #tpu.memory_space<vmem>>, %arg8: memref<1x80x32xbf16, #tpu.memory_space<vmem>>, %arg9: memref<1x5x80xf32, #tpu.memory_space<vmem>>, %arg10: memref<110x32xf32, #tpu.memory_space<vmem>>) attributes {dimension_semantics = [#tpu.dimension_semantics<parallel>], iteration_bounds = array<i64: 2>, scalar_prefetch = 0 : i64, scratch_operands = 1 : i64, tpu.core_type = #tpu.core_type<tc>, window_params = [{transform_indices = @transform_0, window_bounds = array<i64: 1, 110, 176>}, {pipeline_mode = #tpu.pipeline_mode<synchronous>, transform_indices = @transform_1, window_bounds = array<i64: 9, 176, 32>}, {pipeline_mode = #tpu.pipeline_mode<synchronous>, transform_indices = @transform_2, window_bounds = array<i64: 1, 32>}, {pipeline_mode = #tpu.pipeline_mode<synchronous>, transform_indices = @transform_3, window_bounds = array<i64: 9, 32, 32>}, {pipeline_mode = #tpu.pipeline_mode<synchronous>, transform_indices = @transform_4, window_bounds = array<i64: 1, 32>}, {pipeline_mode = #tpu.pipeline_mode<synchronous>, transform_indices = @transform_5, window_bounds = array<i64: 5, 176>}, {pipeline_mode = #tpu.pipeline_mode<synchronous>, transform_indices = @transform_6, window_bounds = array<i64: 5, 1>}, {transform_indices = @transform_7, window_bounds = array<i64: 1, 80, 32>}, {transform_indices = @transform_8, window_bounds = array<i64: 1, 5, 80>}]} {
    %0 = tpu.iota {dimensions = array<i32: 0>} : vector<80x1xi32>
    %c10_i32 = arith.constant 10 : i32
    %c0_i32 = arith.constant 0 : i32
    %1 = arith.cmpi eq, %c10_i32, %c0_i32 : i32
    %c1_i32 = arith.constant 1 : i32
    %2 = arith.select %1, %c1_i32, %c10_i32 : i32
    %3 = vector.broadcast %2 : i32 to vector<80x1xi32>
    %4 = arith.remsi %0, %3 : vector<80x1xi32>
    %c0_i32_0 = arith.constant 0 : i32
    %5 = vector.broadcast %c0_i32_0 : i32 to vector<80x1xi32>
    %6 = arith.cmpi ne, %4, %5 : vector<80x1xi32>
    %c0_i32_1 = arith.constant 0 : i32
    %7 = vector.broadcast %c0_i32_1 : i32 to vector<80x1xi32>
    %8 = arith.cmpi slt, %4, %7 : vector<80x1xi32>
    %c0_i32_2 = arith.constant 0 : i32
    %9 = arith.cmpi slt, %2, %c0_i32_2 : i32
    %10 = vector.broadcast %9 : i1 to vector<80x1xi1>
    %11 = vector.broadcast %10 : vector<80x1xi1> to vector<80x1xi1>
    %12 = arith.xori %8, %11 : vector<80x1xi1>
    %13 = arith.andi %12, %6 : vector<80x1xi1>
    %14 = vector.broadcast %2 : i32 to vector<80x1xi32>
    %15 = arith.addi %4, %14 : vector<80x1xi32>
    %16 = arith.select %13, %15, %4 : vector<80x1xi1>, vector<80x1xi32>
    %c8_i32 = arith.constant 8 : i32
    %17 = vector.broadcast %c8_i32 : i32 to vector<80x1xi32>
    %18 = arith.cmpi slt, %16, %17 : vector<80x1xi32>
    %cst = arith.constant 0.000000e+00 : f32
    %19 = vector.broadcast %cst : f32 to vector<11x32xf32>
    %c0 = arith.constant 0 : index
    %c0_3 = arith.constant 0 : index
    %20 = vector.load %arg10[%c0, %c0_3] : memref<110x32xf32, #tpu.memory_space<vmem>>, vector<11x32xf32>
    tpu.vector_store %arg10[%c0, %c0_3], %19 {strides = array<i32>} : memref<110x32xf32, #tpu.memory_space<vmem>>, vector<11x32xf32>,
    %cst_4 = arith.constant 0.000000e+00 : f32
    %21 = vector.broadcast %cst_4 : f32 to vector<19x32xf32>
    %c91 = arith.constant 91 : index
    %c0_5 = arith.constant 0 : index
    %22 = vector.load %arg10[%c91, %c0_5] : memref<110x32xf32, #tpu.memory_space<vmem>>, vector<19x32xf32>
    tpu.vector_store %arg10[%c91, %c0_5], %21 {strides = array<i32>} : memref<110x32xf32, #tpu.memory_space<vmem>>, vector<19x32xf32>,
    %c0_6 = arith.constant 0 : index
    %c0_7 = arith.constant 0 : index
    %c0_8 = arith.constant 0 : index
    %23 = vector.load %arg1[%c0_6, %c0_7, %c0_8] : memref<1x110x176xf32, #tpu.memory_space<vmem>>, vector<1x80x176xf32>
    %24 = vector.shape_cast %23 : vector<1x80x176xf32> to vector<80x176xf32>
    %25 = arith.truncf %24 : vector<80x176xf32> to vector<80x176xbf16>
    %c0_9 = arith.constant 0 : index
    %c0_10 = arith.constant 0 : index
    %c0_11 = arith.constant 0 : index
    %26 = vector.load %arg2[%c0_9, %c0_10, %c0_11] : memref<9x176x32xbf16, #tpu.memory_space<vmem>>, vector<1x176x32xbf16>
    %27 = vector.shape_cast %26 : vector<1x176x32xbf16> to vector<176x32xbf16>
    %cst_12 = arith.constant dense<0.000000e+00> : vector<80x32xf32>
    %28 = tpu.matmul %25, %27, %cst_12 {dimension_numbers = #tpu.dot_dimension_numbers<[1], [0], [0], [1], [0, 0, 1, 1], [], []>} : vector<80x176xbf16>, vector<176x32xbf16>, vector<80x32xf32> -> vector<80x32xf32>
    %c0_13 = arith.constant 0 : index
    %c1 = arith.constant 1 : index
    %c0_14 = arith.constant 0 : index
    %29 = vector.load %arg1[%c0_13, %c1, %c0_14] : memref<1x110x176xf32, #tpu.memory_space<vmem>>, vector<1x80x176xf32>
    %30 = vector.shape_cast %29 : vector<1x80x176xf32> to vector<80x176xf32>
    %31 = arith.truncf %30 : vector<80x176xf32> to vector<80x176xbf16>
    %c1_15 = arith.constant 1 : index
    %c0_16 = arith.constant 0 : index
    %c0_17 = arith.constant 0 : index
    %32 = vector.load %arg2[%c1_15, %c0_16, %c0_17] : memref<9x176x32xbf16, #tpu.memory_space<vmem>>, vector<1x176x32xbf16>
    %33 = vector.shape_cast %32 : vector<1x176x32xbf16> to vector<176x32xbf16>
    %cst_18 = arith.constant dense<0.000000e+00> : vector<80x32xf32>
    %34 = tpu.matmul %31, %33, %cst_18 {dimension_numbers = #tpu.dot_dimension_numbers<[1], [0], [0], [1], [0, 0, 1, 1], [], []>} : vector<80x176xbf16>, vector<176x32xbf16>, vector<80x32xf32> -> vector<80x32xf32>
    %35 = arith.addf %28, %34 : vector<80x32xf32>
    %c0_19 = arith.constant 0 : index
    %c2 = arith.constant 2 : index
    %c0_20 = arith.constant 0 : index
    %36 = vector.load %arg1[%c0_19, %c2, %c0_20] : memref<1x110x176xf32, #tpu.memory_space<vmem>>, vector<1x80x176xf32>
    %37 = vector.shape_cast %36 : vector<1x80x176xf32> to vector<80x176xf32>
    %38 = arith.truncf %37 : vector<80x176xf32> to vector<80x176xbf16>
    %c2_21 = arith.constant 2 : index
    %c0_22 = arith.constant 0 : index
    %c0_23 = arith.constant 0 : index
    %39 = vector.load %arg2[%c2_21, %c0_22, %c0_23] : memref<9x176x32xbf16, #tpu.memory_space<vmem>>, vector<1x176x32xbf16>
    %40 = vector.shape_cast %39 : vector<1x176x32xbf16> to vector<176x32xbf16>
    %cst_24 = arith.constant dense<0.000000e+00> : vector<80x32xf32>
    %41 = tpu.matmul %38, %40, %cst_24 {dimension_numbers = #tpu.dot_dimension_numbers<[1], [0], [0], [1], [0, 0, 1, 1], [], []>} : vector<80x176xbf16>, vector<176x32xbf16>, vector<80x32xf32> -> vector<80x32xf32>
    %42 = arith.addf %35, %41 : vector<80x32xf32>
    %c0_25 = arith.constant 0 : index
    %c10 = arith.constant 10 : index
    %c0_26 = arith.constant 0 : index
    %43 = vector.load %arg1[%c0_25, %c10, %c0_26] : memref<1x110x176xf32, #tpu.memory_space<vmem>>, vector<1x80x176xf32>
    %44 = vector.shape_cast %43 : vector<1x80x176xf32> to vector<80x176xf32>
    %45 = arith.truncf %44 : vector<80x176xf32> to vector<80x176xbf16>
    %c3 = arith.constant 3 : index
    %c0_27 = arith.constant 0 : index
    %c0_28 = arith.constant 0 : index
    %46 = vector.load %arg2[%c3, %c0_27, %c0_28] : memref<9x176x32xbf16, #tpu.memory_space<vmem>>, vector<1x176x32xbf16>
    %47 = vector.shape_cast %46 : vector<1x176x32xbf16> to vector<176x32xbf16>
    %cst_29 = arith.constant dense<0.000000e+00> : vector<80x32xf32>
    %48 = tpu.matmul %45, %47, %cst_29 {dimension_numbers = #tpu.dot_dimension_numbers<[1], [0], [0], [1], [0, 0, 1, 1], [], []>} : vector<80x176xbf16>, vector<176x32xbf16>, vector<80x32xf32> -> vector<80x32xf32>
    %49 = arith.addf %42, %48 : vector<80x32xf32>
    %c0_30 = arith.constant 0 : index
    %c11 = arith.constant 11 : index
    %c0_31 = arith.constant 0 : index
    %50 = vector.load %arg1[%c0_30, %c11, %c0_31] : memref<1x110x176xf32, #tpu.memory_space<vmem>>, vector<1x80x176xf32>
    %51 = vector.shape_cast %50 : vector<1x80x176xf32> to vector<80x176xf32>
    %52 = arith.truncf %51 : vector<80x176xf32> to vector<80x176xbf16>
    %c4 = arith.constant 4 : index
    %c0_32 = arith.constant 0 : index
    %c0_33 = arith.constant 0 : index
    %53 = vector.load %arg2[%c4, %c0_32, %c0_33] : memref<9x176x32xbf16, #tpu.memory_space<vmem>>, vector<1x176x32xbf16>
    %54 = vector.shape_cast %53 : vector<1x176x32xbf16> to vector<176x32xbf16>
    %cst_34 = arith.constant dense<0.000000e+00> : vector<80x32xf32>
    %55 = tpu.matmul %52, %54, %cst_34 {dimension_numbers = #tpu.dot_dimension_numbers<[1], [0], [0], [1], [0, 0, 1, 1], [], []>} : vector<80x176xbf16>, vector<176x32xbf16>, vector<80x32xf32> -> vector<80x32xf32>
    %56 = arith.addf %49, %55 : vector<80x32xf32>
    %c0_35 = arith.constant 0 : index
    %c12 = arith.constant 12 : index
    %c0_36 = arith.constant 0 : index
    %57 = vector.load %arg1[%c0_35, %c12, %c0_36] : memref<1x110x176xf32, #tpu.memory_space<vmem>>, vector<1x80x176xf32>
    %58 = vector.shape_cast %57 : vector<1x80x176xf32> to vector<80x176xf32>
    %59 = arith.truncf %58 : vector<80x176xf32> to vector<80x176xbf16>
    %c5 = arith.constant 5 : index
    %c0_37 = arith.constant 0 : index
    %c0_38 = arith.constant 0 : index
    %60 = vector.load %arg2[%c5, %c0_37, %c0_38] : memref<9x176x32xbf16, #tpu.memory_space<vmem>>, vector<1x176x32xbf16>
    %61 = vector.shape_cast %60 : vector<1x176x32xbf16> to vector<176x32xbf16>
    %cst_39 = arith.constant dense<0.000000e+00> : vector<80x32xf32>
    %62 = tpu.matmul %59, %61, %cst_39 {dimension_numbers = #tpu.dot_dimension_numbers<[1], [0], [0], [1], [0, 0, 1, 1], [], []>} : vector<80x176xbf16>, vector<176x32xbf16>, vector<80x32xf32> -> vector<80x32xf32>
    %63 = arith.addf %56, %62 : vector<80x32xf32>
    %c0_40 = arith.constant 0 : index
    %c20 = arith.constant 20 : index
    %c0_41 = arith.constant 0 : index
    %64 = vector.load %arg1[%c0_40, %c20, %c0_41] : memref<1x110x176xf32, #tpu.memory_space<vmem>>, vector<1x80x176xf32>
    %65 = vector.shape_cast %64 : vector<1x80x176xf32> to vector<80x176xf32>
    %66 = arith.truncf %65 : vector<80x176xf32> to vector<80x176xbf16>
    %c6 = arith.constant 6 : index
    %c0_42 = arith.constant 0 : index
    %c0_43 = arith.constant 0 : index
    %67 = vector.load %arg2[%c6, %c0_42, %c0_43] : memref<9x176x32xbf16, #tpu.memory_space<vmem>>, vector<1x176x32xbf16>
    %68 = vector.shape_cast %67 : vector<1x176x32xbf16> to vector<176x32xbf16>
    %cst_44 = arith.constant dense<0.000000e+00> : vector<80x32xf32>
    %69 = tpu.matmul %66, %68, %cst_44 {dimension_numbers = #tpu.dot_dimension_numbers<[1], [0], [0], [1], [0, 0, 1, 1], [], []>} : vector<80x176xbf16>, vector<176x32xbf16>, vector<80x32xf32> -> vector<80x32xf32>
    %70 = arith.addf %63, %69 : vector<80x32xf32>
    %c0_45 = arith.constant 0 : index
    %c21 = arith.constant 21 : index
    %c0_46 = arith.constant 0 : index
    %71 = vector.load %arg1[%c0_45, %c21, %c0_46] : memref<1x110x176xf32, #tpu.memory_space<vmem>>, vector<1x80x176xf32>
    %72 = vector.shape_cast %71 : vector<1x80x176xf32> to vector<80x176xf32>
    %73 = arith.truncf %72 : vector<80x176xf32> to vector<80x176xbf16>
    %c7 = arith.constant 7 : index
    %c0_47 = arith.constant 0 : index
    %c0_48 = arith.constant 0 : index
    %74 = vector.load %arg2[%c7, %c0_47, %c0_48] : memref<9x176x32xbf16, #tpu.memory_space<vmem>>, vector<1x176x32xbf16>
    %75 = vector.shape_cast %74 : vector<1x176x32xbf16> to vector<176x32xbf16>
    %cst_49 = arith.constant dense<0.000000e+00> : vector<80x32xf32>
    %76 = tpu.matmul %73, %75, %cst_49 {dimension_numbers = #tpu.dot_dimension_numbers<[1], [0], [0], [1], [0, 0, 1, 1], [], []>} : vector<80x176xbf16>, vector<176x32xbf16>, vector<80x32xf32> -> vector<80x32xf32>
    %77 = arith.addf %70, %76 : vector<80x32xf32>
    %c0_50 = arith.constant 0 : index
    %c22 = arith.constant 22 : index
    %c0_51 = arith.constant 0 : index
    %78 = vector.load %arg1[%c0_50, %c22, %c0_51] : memref<1x110x176xf32, #tpu.memory_space<vmem>>, vector<1x80x176xf32>
    %79 = vector.shape_cast %78 : vector<1x80x176xf32> to vector<80x176xf32>
    %80 = arith.truncf %79 : vector<80x176xf32> to vector<80x176xbf16>
    %c8 = arith.constant 8 : index
    %c0_52 = arith.constant 0 : index
    %c0_53 = arith.constant 0 : index
    %81 = vector.load %arg2[%c8, %c0_52, %c0_53] : memref<9x176x32xbf16, #tpu.memory_space<vmem>>, vector<1x176x32xbf16>
    %82 = vector.shape_cast %81 : vector<1x176x32xbf16> to vector<176x32xbf16>
    %cst_54 = arith.constant dense<0.000000e+00> : vector<80x32xf32>
    %83 = tpu.matmul %80, %82, %cst_54 {dimension_numbers = #tpu.dot_dimension_numbers<[1], [0], [0], [1], [0, 0, 1, 1], [], []>} : vector<80x176xbf16>, vector<176x32xbf16>, vector<80x32xf32> -> vector<80x32xf32>
    %84 = arith.addf %77, %83 : vector<80x32xf32>
    %c0_55 = arith.constant 0 : index
    %c0_56 = arith.constant 0 : index
    %85 = vector.load %arg3[%c0_55, %c0_56] : memref<1x32xf32, #tpu.memory_space<vmem>>, vector<1x32xf32>
    %86 = vector.broadcast %85 : vector<1x32xf32> to vector<80x32xf32>
    %87 = arith.addf %84, %86 : vector<80x32xf32>
    %cst_57 = arith.constant 0.000000e+00 : f32
    %88 = vector.broadcast %cst_57 : f32 to vector<80x32xf32>
    %89 = arith.maximumf %87, %88 : vector<80x32xf32>
    %cst_58 = arith.constant 0.000000e+00 : f32
    %90 = vector.shape_cast %18 : vector<80x1xi1> to vector<80x1xi1>
    %91 = vector.broadcast %90 : vector<80x1xi1> to vector<80x32xi1>
    %92 = vector.broadcast %cst_58 : f32 to vector<80x32xf32>
    %93 = arith.select %91, %89, %92 : vector<80x32xi1>, vector<80x32xf32>
    %c11_59 = arith.constant 11 : index
    %c0_60 = arith.constant 0 : index
    %94 = vector.load %arg10[%c11_59, %c0_60] : memref<110x32xf32, #tpu.memory_space<vmem>>, vector<80x32xf32>
    tpu.vector_store %arg10[%c11_59, %c0_60], %93 {strides = array<i32>} : memref<110x32xf32, #tpu.memory_space<vmem>>, vector<80x32xf32>,
    %c0_61 = arith.constant 0 : index
    %c0_62 = arith.constant 0 : index
    %95 = vector.load %arg10[%c0_61, %c0_62] : memref<110x32xf32, #tpu.memory_space<vmem>>, vector<80x32xf32>
    %96 = arith.truncf %95 : vector<80x32xf32> to vector<80x32xbf16>
    %c0_63 = arith.constant 0 : index
    %c0_64 = arith.constant 0 : index
    %c0_65 = arith.constant 0 : index
    %97 = vector.load %arg4[%c0_63, %c0_64, %c0_65] : memref<9x32x32xbf16, #tpu.memory_space<vmem>>, vector<1x32x32xbf16>
    %98 = vector.shape_cast %97 : vector<1x32x32xbf16> to vector<32x32xbf16>
    %cst_66 = arith.constant dense<0.000000e+00> : vector<80x32xf32>
    %99 = tpu.matmul %96, %98, %cst_66 {dimension_numbers = #tpu.dot_dimension_numbers<[1], [0], [0], [1], [0, 0, 1, 1], [], []>} : vector<80x32xbf16>, vector<32x32xbf16>, vector<80x32xf32> -> vector<80x32xf32>
    %c1_67 = arith.constant 1 : index
    %c0_68 = arith.constant 0 : index
    %100 = vector.load %arg10[%c1_67, %c0_68] : memref<110x32xf32, #tpu.memory_space<vmem>>, vector<80x32xf32>
    %101 = arith.truncf %100 : vector<80x32xf32> to vector<80x32xbf16>
    %c1_69 = arith.constant 1 : index
    %c0_70 = arith.constant 0 : index
    %c0_71 = arith.constant 0 : index
    %102 = vector.load %arg4[%c1_69, %c0_70, %c0_71] : memref<9x32x32xbf16, #tpu.memory_space<vmem>>, vector<1x32x32xbf16>
    %103 = vector.shape_cast %102 : vector<1x32x32xbf16> to vector<32x32xbf16>
    %cst_72 = arith.constant dense<0.000000e+00> : vector<80x32xf32>
    %104 = tpu.matmul %101, %103, %cst_72 {dimension_numbers = #tpu.dot_dimension_numbers<[1], [0], [0], [1], [0, 0, 1, 1], [], []>} : vector<80x32xbf16>, vector<32x32xbf16>, vector<80x32xf32> -> vector<80x32xf32>
    %105 = arith.addf %99, %104 : vector<80x32xf32>
    %c2_73 = arith.constant 2 : index
    %c0_74 = arith.constant 0 : index
    %106 = vector.load %arg10[%c2_73, %c0_74] : memref<110x32xf32, #tpu.memory_space<vmem>>, vector<80x32xf32>
    %107 = arith.truncf %106 : vector<80x32xf32> to vector<80x32xbf16>
    %c2_75 = arith.constant 2 : index
    %c0_76 = arith.constant 0 : index
    %c0_77 = arith.constant 0 : index
    %108 = vector.load %arg4[%c2_75, %c0_76, %c0_77] : memref<9x32x32xbf16, #tpu.memory_space<vmem>>, vector<1x32x32xbf16>
    %109 = vector.shape_cast %108 : vector<1x32x32xbf16> to vector<32x32xbf16>
    %cst_78 = arith.constant dense<0.000000e+00> : vector<80x32xf32>
    %110 = tpu.matmul %107, %109, %cst_78 {dimension_numbers = #tpu.dot_dimension_numbers<[1], [0], [0], [1], [0, 0, 1, 1], [], []>} : vector<80x32xbf16>, vector<32x32xbf16>, vector<80x32xf32> -> vector<80x32xf32>
    %111 = arith.addf %105, %110 : vector<80x32xf32>
    %c10_79 = arith.constant 10 : index
    %c0_80 = arith.constant 0 : index
    %112 = vector.load %arg10[%c10_79, %c0_80] : memref<110x32xf32, #tpu.memory_space<vmem>>, vector<80x32xf32>
    %113 = arith.truncf %112 : vector<80x32xf32> to vector<80x32xbf16>
    %c3_81 = arith.constant 3 : index
    %c0_82 = arith.constant 0 : index
    %c0_83 = arith.constant 0 : index
    %114 = vector.load %arg4[%c3_81, %c0_82, %c0_83] : memref<9x32x32xbf16, #tpu.memory_space<vmem>>, vector<1x32x32xbf16>
    %115 = vector.shape_cast %114 : vector<1x32x32xbf16> to vector<32x32xbf16>
    %cst_84 = arith.constant dense<0.000000e+00> : vector<80x32xf32>
    %116 = tpu.matmul %113, %115, %cst_84 {dimension_numbers = #tpu.dot_dimension_numbers<[1], [0], [0], [1], [0, 0, 1, 1], [], []>} : vector<80x32xbf16>, vector<32x32xbf16>, vector<80x32xf32> -> vector<80x32xf32>
    %117 = arith.addf %111, %116 : vector<80x32xf32>
    %c11_85 = arith.constant 11 : index
    %c0_86 = arith.constant 0 : index
    %118 = vector.load %arg10[%c11_85, %c0_86] : memref<110x32xf32, #tpu.memory_space<vmem>>, vector<80x32xf32>
    %119 = arith.truncf %118 : vector<80x32xf32> to vector<80x32xbf16>
    %c4_87 = arith.constant 4 : index
    %c0_88 = arith.constant 0 : index
    %c0_89 = arith.constant 0 : index
    %120 = vector.load %arg4[%c4_87, %c0_88, %c0_89] : memref<9x32x32xbf16, #tpu.memory_space<vmem>>, vector<1x32x32xbf16>
    %121 = vector.shape_cast %120 : vector<1x32x32xbf16> to vector<32x32xbf16>
    %cst_90 = arith.constant dense<0.000000e+00> : vector<80x32xf32>
    %122 = tpu.matmul %119, %121, %cst_90 {dimension_numbers = #tpu.dot_dimension_numbers<[1], [0], [0], [1], [0, 0, 1, 1], [], []>} : vector<80x32xbf16>, vector<32x32xbf16>, vector<80x32xf32> -> vector<80x32xf32>
    %123 = arith.addf %117, %122 : vector<80x32xf32>
    %c12_91 = arith.constant 12 : index
    %c0_92 = arith.constant 0 : index
    %124 = vector.load %arg10[%c12_91, %c0_92] : memref<110x32xf32, #tpu.memory_space<vmem>>, vector<80x32xf32>
    %125 = arith.truncf %124 : vector<80x32xf32> to vector<80x32xbf16>
    %c5_93 = arith.constant 5 : index
    %c0_94 = arith.constant 0 : index
    %c0_95 = arith.constant 0 : index
    %126 = vector.load %arg4[%c5_93, %c0_94, %c0_95] : memref<9x32x32xbf16, #tpu.memory_space<vmem>>, vector<1x32x32xbf16>
    %127 = vector.shape_cast %126 : vector<1x32x32xbf16> to vector<32x32xbf16>
    %cst_96 = arith.constant dense<0.000000e+00> : vector<80x32xf32>
    %128 = tpu.matmul %125, %127, %cst_96 {dimension_numbers = #tpu.dot_dimension_numbers<[1], [0], [0], [1], [0, 0, 1, 1], [], []>} : vector<80x32xbf16>, vector<32x32xbf16>, vector<80x32xf32> -> vector<80x32xf32>
    %129 = arith.addf %123, %128 : vector<80x32xf32>
    %c20_97 = arith.constant 20 : index
    %c0_98 = arith.constant 0 : index
    %130 = vector.load %arg10[%c20_97, %c0_98] : memref<110x32xf32, #tpu.memory_space<vmem>>, vector<80x32xf32>
    %131 = arith.truncf %130 : vector<80x32xf32> to vector<80x32xbf16>
    %c6_99 = arith.constant 6 : index
    %c0_100 = arith.constant 0 : index
    %c0_101 = arith.constant 0 : index
    %132 = vector.load %arg4[%c6_99, %c0_100, %c0_101] : memref<9x32x32xbf16, #tpu.memory_space<vmem>>, vector<1x32x32xbf16>
    %133 = vector.shape_cast %132 : vector<1x32x32xbf16> to vector<32x32xbf16>
    %cst_102 = arith.constant dense<0.000000e+00> : vector<80x32xf32>
    %134 = tpu.matmul %131, %133, %cst_102 {dimension_numbers = #tpu.dot_dimension_numbers<[1], [0], [0], [1], [0, 0, 1, 1], [], []>} : vector<80x32xbf16>, vector<32x32xbf16>, vector<80x32xf32> -> vector<80x32xf32>
    %135 = arith.addf %129, %134 : vector<80x32xf32>
    %c21_103 = arith.constant 21 : index
    %c0_104 = arith.constant 0 : index
    %136 = vector.load %arg10[%c21_103, %c0_104] : memref<110x32xf32, #tpu.memory_space<vmem>>, vector<80x32xf32>
    %137 = arith.truncf %136 : vector<80x32xf32> to vector<80x32xbf16>
    %c7_105 = arith.constant 7 : index
    %c0_106 = arith.constant 0 : index
    %c0_107 = arith.constant 0 : index
    %138 = vector.load %arg4[%c7_105, %c0_106, %c0_107] : memref<9x32x32xbf16, #tpu.memory_space<vmem>>, vector<1x32x32xbf16>
    %139 = vector.shape_cast %138 : vector<1x32x32xbf16> to vector<32x32xbf16>
    %cst_108 = arith.constant dense<0.000000e+00> : vector<80x32xf32>
    %140 = tpu.matmul %137, %139, %cst_108 {dimension_numbers = #tpu.dot_dimension_numbers<[1], [0], [0], [1], [0, 0, 1, 1], [], []>} : vector<80x32xbf16>, vector<32x32xbf16>, vector<80x32xf32> -> vector<80x32xf32>
    %141 = arith.addf %135, %140 : vector<80x32xf32>
    %c22_109 = arith.constant 22 : index
    %c0_110 = arith.constant 0 : index
    %142 = vector.load %arg10[%c22_109, %c0_110] : memref<110x32xf32, #tpu.memory_space<vmem>>, vector<80x32xf32>
    %143 = arith.truncf %142 : vector<80x32xf32> to vector<80x32xbf16>
    %c8_111 = arith.constant 8 : index
    %c0_112 = arith.constant 0 : index
    %c0_113 = arith.constant 0 : index
    %144 = vector.load %arg4[%c8_111, %c0_112, %c0_113] : memref<9x32x32xbf16, #tpu.memory_space<vmem>>, vector<1x32x32xbf16>
    %145 = vector.shape_cast %144 : vector<1x32x32xbf16> to vector<32x32xbf16>
    %cst_114 = arith.constant dense<0.000000e+00> : vector<80x32xf32>
    %146 = tpu.matmul %143, %145, %cst_114 {dimension_numbers = #tpu.dot_dimension_numbers<[1], [0], [0], [1], [0, 0, 1, 1], [], []>} : vector<80x32xbf16>, vector<32x32xbf16>, vector<80x32xf32> -> vector<80x32xf32>
    %147 = arith.addf %141, %146 : vector<80x32xf32>
    %c0_115 = arith.constant 0 : index
    %c0_116 = arith.constant 0 : index
    %148 = vector.load %arg5[%c0_115, %c0_116] : memref<1x32xf32, #tpu.memory_space<vmem>>, vector<1x32xf32>
    %149 = vector.broadcast %148 : vector<1x32xf32> to vector<80x32xf32>
    %150 = arith.addf %147, %149 : vector<80x32xf32>
    %cst_117 = arith.constant 0.000000e+00 : f32
    %151 = vector.broadcast %cst_117 : f32 to vector<80x32xf32>
    %152 = arith.maximumf %150, %151 : vector<80x32xf32>
    %153 = arith.truncf %152 : vector<80x32xf32> to vector<80x32xbf16>
    %c0_118 = arith.constant 0 : index
    %c0_119 = arith.constant 0 : index
    %c0_120 = arith.constant 0 : index
    %154 = vector.load %arg8[%c0_118, %c0_119, %c0_120] : memref<1x80x32xbf16, #tpu.memory_space<vmem>>, vector<1x80x32xbf16>
    %155 = vector.shape_cast %154 : vector<1x80x32xbf16> to vector<80x32xbf16>
    %156 = vector.shape_cast %153 : vector<80x32xbf16> to vector<1x80x32xbf16>
    tpu.vector_store %arg8[%c0_118, %c0_119, %c0_120], %156 {strides = array<i32>} : memref<1x80x32xbf16, #tpu.memory_space<vmem>>, vector<1x80x32xbf16>,
    %c0_121 = arith.constant 0 : index
    %c0_122 = arith.constant 0 : index
    %157 = vector.load %arg6[%c0_121, %c0_122] : memref<5x176xf32, #tpu.memory_space<vmem>>, vector<5x176xf32>
    %cst_123 = arith.constant dense<0.000000e+00> : vector<5x80xf32>
    %158 = tpu.matmul %157, %51, %cst_123 {dimension_numbers = #tpu.dot_dimension_numbers<[1], [1], [0], [0], [0, 0, 1, 0], [], []>} : vector<5x176xf32>, vector<80x176xf32>, vector<5x80xf32> -> vector<5x80xf32>
    %c0_124 = arith.constant 0 : index
    %c0_125 = arith.constant 0 : index
    %159 = vector.load %arg7[%c0_124, %c0_125] : memref<5x1xf32, #tpu.memory_space<vmem>>, vector<5x1xf32>
    %160 = vector.broadcast %159 : vector<5x1xf32> to vector<5x80xf32>
    %161 = arith.addf %158, %160 : vector<5x80xf32>
    %c0_126 = arith.constant 0 : index
    %c0_127 = arith.constant 0 : index
    %c0_128 = arith.constant 0 : index
    %162 = vector.load %arg9[%c0_126, %c0_127, %c0_128] : memref<1x5x80xf32, #tpu.memory_space<vmem>>, vector<1x5x80xf32>
    %163 = vector.shape_cast %162 : vector<1x5x80xf32> to vector<5x80xf32>
    %164 = vector.shape_cast %161 : vector<5x80xf32> to vector<1x5x80xf32>
    tpu.vector_store %arg9[%c0_126, %c0_127, %c0_128], %164 {strides = array<i32>} : memref<1x5x80xf32, #tpu.memory_space<vmem>>, vector<1x5x80xf32>,
    return
  }
  func.func @transform_0(%arg0: i32) -> (i32, i32, i32) {
    %c0_i32 = arith.constant 0 : i32
    %c0_i32_0 = arith.constant 0 : i32
    %c0_i32_1 = arith.constant 0 : i32
    return %arg0, %c0_i32, %c0_i32_0 : i32, i32, i32
  }
  func.func @transform_1(%arg0: i32) -> (i32, i32, i32) {
    %c0_i32 = arith.constant 0 : i32
    %c0_i32_0 = arith.constant 0 : i32
    %c0_i32_1 = arith.constant 0 : i32
    %c0_i32_2 = arith.constant 0 : i32
    return %c0_i32, %c0_i32_0, %c0_i32_1 : i32, i32, i32
  }
  func.func @transform_2(%arg0: i32) -> (i32, i32) {
    %c0_i32 = arith.constant 0 : i32
    %c0_i32_0 = arith.constant 0 : i32
    %c0_i32_1 = arith.constant 0 : i32
    return %c0_i32, %c0_i32_0 : i32, i32
  }
  func.func @transform_3(%arg0: i32) -> (i32, i32, i32) {
    %c0_i32 = arith.constant 0 : i32
    %c0_i32_0 = arith.constant 0 : i32
    %c0_i32_1 = arith.constant 0 : i32
    %c0_i32_2 = arith.constant 0 : i32
    return %c0_i32, %c0_i32_0, %c0_i32_1 : i32, i32, i32
  }
  func.func @transform_4(%arg0: i32) -> (i32, i32) {
    %c0_i32 = arith.constant 0 : i32
    %c0_i32_0 = arith.constant 0 : i32
    %c0_i32_1 = arith.constant 0 : i32
    return %c0_i32, %c0_i32_0 : i32, i32
  }
  func.func @transform_5(%arg0: i32) -> (i32, i32) {
    %c0_i32 = arith.constant 0 : i32
    %c0_i32_0 = arith.constant 0 : i32
    %c0_i32_1 = arith.constant 0 : i32
    return %c0_i32, %c0_i32_0 : i32, i32
  }
  func.func @transform_6(%arg0: i32) -> (i32, i32) {
    %c0_i32 = arith.constant 0 : i32
    %c0_i32_0 = arith.constant 0 : i32
    %c0_i32_1 = arith.constant 0 : i32
    return %c0_i32, %c0_i32_0 : i32, i32
  }
  func.func @transform_7(%arg0: i32) -> (i32, i32, i32) {
    %c0_i32 = arith.constant 0 : i32
    %c0_i32_0 = arith.constant 0 : i32
    %c0_i32_1 = arith.constant 0 : i32
    return %arg0, %c0_i32, %c0_i32_0 : i32, i32, i32
  }
  func.func @transform_8(%arg0: i32) -> (i32, i32, i32) {
    %c0_i32 = arith.constant 0 : i32
    %c0_i32_0 = arith.constant 0 : i32
    %c0_i32_1 = arith.constant 0 : i32
    return %arg0, %c0_i32, %c0_i32_0 : i32, i32, i32
  }
}

module attributes {stable_mosaic.version = 11 : i64} {
  func.func @_head_kernel(%arg0: i32, %arg1: memref<256x80xbf16, #tpu.memory_space<vmem>>, %arg2: memref<1x80x32xbf16, #tpu.memory_space<vmem>>, %arg3: memref<1x256x32xbf16, #tpu.memory_space<vmem>>, %arg4: memref<32x48xbf16, #tpu.memory_space<vmem>>, %arg5: memref<1x48xf32, #tpu.memory_space<vmem>>, %arg6: memref<32x32xbf16, #tpu.memory_space<vmem>>, %arg7: memref<48x32xbf16, #tpu.memory_space<vmem>>, %arg8: memref<1x32xf32, #tpu.memory_space<vmem>>, %arg9: memref<32x32xbf16, #tpu.memory_space<vmem>>, %arg10: memref<1x32xf32, #tpu.memory_space<vmem>>, %arg11: memref<7x32xf32, #tpu.memory_space<vmem>>, %arg12: memref<7x1xf32, #tpu.memory_space<vmem>>, %arg13: memref<1x7x256xf32, #tpu.memory_space<vmem>>) attributes {dimension_semantics = [#tpu.dimension_semantics<parallel>], iteration_bounds = array<i64: 2>, scalar_prefetch = 0 : i64, scratch_operands = 0 : i64, tpu.core_type = #tpu.core_type<tc>, window_params = [{pipeline_mode = #tpu.pipeline_mode<synchronous>, transform_indices = @transform_0, window_bounds = array<i64: 256, 80>}, {transform_indices = @transform_1, window_bounds = array<i64: 1, 80, 32>}, {transform_indices = @transform_2, window_bounds = array<i64: 1, 256, 32>}, {pipeline_mode = #tpu.pipeline_mode<synchronous>, transform_indices = @transform_3, window_bounds = array<i64: 32, 48>}, {pipeline_mode = #tpu.pipeline_mode<synchronous>, transform_indices = @transform_4, window_bounds = array<i64: 1, 48>}, {pipeline_mode = #tpu.pipeline_mode<synchronous>, transform_indices = @transform_5, window_bounds = array<i64: 32, 32>}, {pipeline_mode = #tpu.pipeline_mode<synchronous>, transform_indices = @transform_6, window_bounds = array<i64: 48, 32>}, {pipeline_mode = #tpu.pipeline_mode<synchronous>, transform_indices = @transform_7, window_bounds = array<i64: 1, 32>}, {pipeline_mode = #tpu.pipeline_mode<synchronous>, transform_indices = @transform_8, window_bounds = array<i64: 32, 32>}, {pipeline_mode = #tpu.pipeline_mode<synchronous>, transform_indices = @transform_9, window_bounds = array<i64: 1, 32>}, {pipeline_mode = #tpu.pipeline_mode<synchronous>, transform_indices = @transform_10, window_bounds = array<i64: 7, 32>}, {pipeline_mode = #tpu.pipeline_mode<synchronous>, transform_indices = @transform_11, window_bounds = array<i64: 7, 1>}, {transform_indices = @transform_12, window_bounds = array<i64: 1, 7, 256>}]} {
    %c0 = arith.constant 0 : index
    %c0_0 = arith.constant 0 : index
    %0 = vector.load %arg1[%c0, %c0_0] : memref<256x80xbf16, #tpu.memory_space<vmem>>, vector<256x80xbf16>
    %c0_1 = arith.constant 0 : index
    %c0_2 = arith.constant 0 : index
    %c0_3 = arith.constant 0 : index
    %1 = vector.load %arg2[%c0_1, %c0_2, %c0_3] : memref<1x80x32xbf16, #tpu.memory_space<vmem>>, vector<1x80x32xbf16>
    %2 = vector.shape_cast %1 : vector<1x80x32xbf16> to vector<80x32xbf16>
    %cst = arith.constant dense<0.000000e+00> : vector<256x32xf32>
    %3 = tpu.matmul %0, %2, %cst {dimension_numbers = #tpu.dot_dimension_numbers<[1], [0], [0], [1], [0, 0, 1, 1], [], []>} : vector<256x80xbf16>, vector<80x32xbf16>, vector<256x32xf32> -> vector<256x32xf32>
    %c0_4 = arith.constant 0 : index
    %c0_5 = arith.constant 0 : index
    %c0_6 = arith.constant 0 : index
    %4 = vector.load %arg3[%c0_4, %c0_5, %c0_6] : memref<1x256x32xbf16, #tpu.memory_space<vmem>>, vector<1x256x32xbf16>
    %5 = vector.shape_cast %4 : vector<1x256x32xbf16> to vector<256x32xbf16>
    %c0_7 = arith.constant 0 : index
    %c0_8 = arith.constant 0 : index
    %6 = vector.load %arg4[%c0_7, %c0_8] : memref<32x48xbf16, #tpu.memory_space<vmem>>, vector<32x48xbf16>
    %cst_9 = arith.constant dense<0.000000e+00> : vector<256x48xf32>
    %7 = tpu.matmul %5, %6, %cst_9 {dimension_numbers = #tpu.dot_dimension_numbers<[1], [0], [0], [1], [0, 0, 1, 1], [], []>} : vector<256x32xbf16>, vector<32x48xbf16>, vector<256x48xf32> -> vector<256x48xf32>
    %c0_10 = arith.constant 0 : index
    %c0_11 = arith.constant 0 : index
    %8 = vector.load %arg5[%c0_10, %c0_11] : memref<1x48xf32, #tpu.memory_space<vmem>>, vector<1x48xf32>
    %9 = vector.broadcast %8 : vector<1x48xf32> to vector<256x48xf32>
    %10 = arith.addf %7, %9 : vector<256x48xf32>
    %cst_12 = arith.constant 0.000000e+00 : f32
    %11 = vector.broadcast %cst_12 : f32 to vector<256x48xf32>
    %12 = arith.maximumf %10, %11 : vector<256x48xf32>
    %13 = arith.truncf %3 : vector<256x32xf32> to vector<256x32xbf16>
    %c0_13 = arith.constant 0 : index
    %c0_14 = arith.constant 0 : index
    %14 = vector.load %arg6[%c0_13, %c0_14] : memref<32x32xbf16, #tpu.memory_space<vmem>>, vector<32x32xbf16>
    %cst_15 = arith.constant dense<0.000000e+00> : vector<256x32xf32>
    %15 = tpu.matmul %13, %14, %cst_15 {dimension_numbers = #tpu.dot_dimension_numbers<[1], [0], [0], [1], [0, 0, 1, 1], [], []>} : vector<256x32xbf16>, vector<32x32xbf16>, vector<256x32xf32> -> vector<256x32xf32>
    %16 = arith.truncf %12 : vector<256x48xf32> to vector<256x48xbf16>
    %c0_16 = arith.constant 0 : index
    %c0_17 = arith.constant 0 : index
    %17 = vector.load %arg7[%c0_16, %c0_17] : memref<48x32xbf16, #tpu.memory_space<vmem>>, vector<48x32xbf16>
    %cst_18 = arith.constant dense<0.000000e+00> : vector<256x32xf32>
    %18 = tpu.matmul %16, %17, %cst_18 {dimension_numbers = #tpu.dot_dimension_numbers<[1], [0], [0], [1], [0, 0, 1, 1], [], []>} : vector<256x48xbf16>, vector<48x32xbf16>, vector<256x32xf32> -> vector<256x32xf32>
    %19 = arith.addf %15, %18 : vector<256x32xf32>
    %c0_19 = arith.constant 0 : index
    %c0_20 = arith.constant 0 : index
    %20 = vector.load %arg8[%c0_19, %c0_20] : memref<1x32xf32, #tpu.memory_space<vmem>>, vector<1x32xf32>
    %21 = vector.broadcast %20 : vector<1x32xf32> to vector<256x32xf32>
    %22 = arith.addf %19, %21 : vector<256x32xf32>
    %cst_21 = arith.constant 0.000000e+00 : f32
    %23 = vector.broadcast %cst_21 : f32 to vector<256x32xf32>
    %24 = arith.maximumf %22, %23 : vector<256x32xf32>
    %25 = arith.truncf %24 : vector<256x32xf32> to vector<256x32xbf16>
    %c0_22 = arith.constant 0 : index
    %c0_23 = arith.constant 0 : index
    %26 = vector.load %arg9[%c0_22, %c0_23] : memref<32x32xbf16, #tpu.memory_space<vmem>>, vector<32x32xbf16>
    %cst_24 = arith.constant dense<0.000000e+00> : vector<256x32xf32>
    %27 = tpu.matmul %25, %26, %cst_24 {dimension_numbers = #tpu.dot_dimension_numbers<[1], [0], [0], [1], [0, 0, 1, 1], [], []>} : vector<256x32xbf16>, vector<32x32xbf16>, vector<256x32xf32> -> vector<256x32xf32>
    %c0_25 = arith.constant 0 : index
    %c0_26 = arith.constant 0 : index
    %28 = vector.load %arg10[%c0_25, %c0_26] : memref<1x32xf32, #tpu.memory_space<vmem>>, vector<1x32xf32>
    %29 = vector.broadcast %28 : vector<1x32xf32> to vector<256x32xf32>
    %30 = arith.addf %27, %29 : vector<256x32xf32>
    %cst_27 = arith.constant 0.000000e+00 : f32
    %31 = vector.broadcast %cst_27 : f32 to vector<256x32xf32>
    %32 = arith.maximumf %30, %31 : vector<256x32xf32>
    %c0_28 = arith.constant 0 : index
    %c0_29 = arith.constant 0 : index
    %33 = vector.load %arg11[%c0_28, %c0_29] : memref<7x32xf32, #tpu.memory_space<vmem>>, vector<7x32xf32>
    %cst_30 = arith.constant dense<0.000000e+00> : vector<7x256xf32>
    %34 = tpu.matmul %33, %32, %cst_30 {dimension_numbers = #tpu.dot_dimension_numbers<[1], [1], [0], [0], [0, 0, 1, 0], [], []>} : vector<7x32xf32>, vector<256x32xf32>, vector<7x256xf32> -> vector<7x256xf32>
    %c0_31 = arith.constant 0 : index
    %c0_32 = arith.constant 0 : index
    %35 = vector.load %arg12[%c0_31, %c0_32] : memref<7x1xf32, #tpu.memory_space<vmem>>, vector<7x1xf32>
    %36 = vector.broadcast %35 : vector<7x1xf32> to vector<7x256xf32>
    %37 = arith.addf %34, %36 : vector<7x256xf32>
    %c0_33 = arith.constant 0 : index
    %c0_34 = arith.constant 0 : index
    %c0_35 = arith.constant 0 : index
    %38 = vector.load %arg13[%c0_33, %c0_34, %c0_35] : memref<1x7x256xf32, #tpu.memory_space<vmem>>, vector<1x7x256xf32>
    %39 = vector.shape_cast %38 : vector<1x7x256xf32> to vector<7x256xf32>
    %40 = vector.shape_cast %37 : vector<7x256xf32> to vector<1x7x256xf32>
    tpu.vector_store %arg13[%c0_33, %c0_34, %c0_35], %40 {strides = array<i32>} : memref<1x7x256xf32, #tpu.memory_space<vmem>>, vector<1x7x256xf32>,
    return
  }
  func.func @transform_0(%arg0: i32) -> (i32, i32) {
    %c0_i32 = arith.constant 0 : i32
    %c0_i32_0 = arith.constant 0 : i32
    %c0_i32_1 = arith.constant 0 : i32
    return %c0_i32, %c0_i32_0 : i32, i32
  }
  func.func @transform_1(%arg0: i32) -> (i32, i32, i32) {
    %c0_i32 = arith.constant 0 : i32
    %c0_i32_0 = arith.constant 0 : i32
    %c0_i32_1 = arith.constant 0 : i32
    return %arg0, %c0_i32, %c0_i32_0 : i32, i32, i32
  }
  func.func @transform_2(%arg0: i32) -> (i32, i32, i32) {
    %c0_i32 = arith.constant 0 : i32
    %c0_i32_0 = arith.constant 0 : i32
    %c0_i32_1 = arith.constant 0 : i32
    return %arg0, %c0_i32, %c0_i32_0 : i32, i32, i32
  }
  func.func @transform_3(%arg0: i32) -> (i32, i32) {
    %c0_i32 = arith.constant 0 : i32
    %c0_i32_0 = arith.constant 0 : i32
    %c0_i32_1 = arith.constant 0 : i32
    return %c0_i32, %c0_i32_0 : i32, i32
  }
  func.func @transform_4(%arg0: i32) -> (i32, i32) {
    %c0_i32 = arith.constant 0 : i32
    %c0_i32_0 = arith.constant 0 : i32
    %c0_i32_1 = arith.constant 0 : i32
    return %c0_i32, %c0_i32_0 : i32, i32
  }
  func.func @transform_5(%arg0: i32) -> (i32, i32) {
    %c0_i32 = arith.constant 0 : i32
    %c0_i32_0 = arith.constant 0 : i32
    %c0_i32_1 = arith.constant 0 : i32
    return %c0_i32, %c0_i32_0 : i32, i32
  }
  func.func @transform_6(%arg0: i32) -> (i32, i32) {
    %c0_i32 = arith.constant 0 : i32
    %c0_i32_0 = arith.constant 0 : i32
    %c0_i32_1 = arith.constant 0 : i32
    return %c0_i32, %c0_i32_0 : i32, i32
  }
  func.func @transform_7(%arg0: i32) -> (i32, i32) {
    %c0_i32 = arith.constant 0 : i32
    %c0_i32_0 = arith.constant 0 : i32
    %c0_i32_1 = arith.constant 0 : i32
    return %c0_i32, %c0_i32_0 : i32, i32
  }
  func.func @transform_8(%arg0: i32) -> (i32, i32) {
    %c0_i32 = arith.constant 0 : i32
    %c0_i32_0 = arith.constant 0 : i32
    %c0_i32_1 = arith.constant 0 : i32
    return %c0_i32, %c0_i32_0 : i32, i32
  }
  func.func @transform_9(%arg0: i32) -> (i32, i32) {
    %c0_i32 = arith.constant 0 : i32
    %c0_i32_0 = arith.constant 0 : i32
    %c0_i32_1 = arith.constant 0 : i32
    return %c0_i32, %c0_i32_0 : i32, i32
  }
  func.func @transform_10(%arg0: i32) -> (i32, i32) {
    %c0_i32 = arith.constant 0 : i32
    %c0_i32_0 = arith.constant 0 : i32
    %c0_i32_1 = arith.constant 0 : i32
    return %c0_i32, %c0_i32_0 : i32, i32
  }
  func.func @transform_11(%arg0: i32) -> (i32, i32) {
    %c0_i32 = arith.constant 0 : i32
    %c0_i32_0 = arith.constant 0 : i32
    %c0_i32_1 = arith.constant 0 : i32
    return %c0_i32, %c0_i32_0 : i32, i32
  }
  func.func @transform_12(%arg0: i32) -> (i32, i32, i32) {
    %c0_i32 = arith.constant 0 : i32
    %c0_i32_0 = arith.constant 0 : i32
    %c0_i32_1 = arith.constant 0 : i32
    return %arg0, %c0_i32, %c0_i32_0 : i32, i32, i32
  }
}

</mosaic_0001>

<llo_original>
// kernel: final_classifier_forward.3
$region0: #{final_classifier_forward.3}
  #allocation0 [shape = 'u32[]', space=smem, size = 0x4, offset = 0x4, fixed_abs, tag = 'smem constant byte address 0x4 - core index']
  #allocation1 [shape = 'u32[72,128]{1,0:T(1,128)}', space=vmem, size = 0x9000, scoped, tag = 'internal scratch']
  %s0 = inlined_call_operand.vmem [shape: bf16[256,80], index: 0, kind: input, shape index: {}]
  %s1 = inlined_call_operand.vmem [shape: bf16[2,80,32], index: 1, kind: input, shape index: {}]
  %s2 = inlined_call_operand.vmem [shape: bf16[2,256,32], index: 2, kind: input, shape index: {}]
  %s3 = inlined_call_operand.vmem [shape: bf16[32,48], index: 3, kind: input, shape index: {}]
  %s4 = inlined_call_operand.vmem [shape: f32[1,48], index: 4, kind: input, shape index: {}]
  %s5 = inlined_call_operand.vmem [shape: bf16[32,32], index: 5, kind: input, shape index: {}]
  %s6 = inlined_call_operand.vmem [shape: bf16[48,32], index: 6, kind: input, shape index: {}]
  %s7 = inlined_call_operand.vmem [shape: f32[1,32], index: 7, kind: input, shape index: {}]
  %s8 = inlined_call_operand.vmem [shape: bf16[32,32], index: 8, kind: input, shape index: {}]
  %s9 = inlined_call_operand.vmem [shape: f32[1,32], index: 9, kind: input, shape index: {}]
  %s10 = inlined_call_operand.vmem [shape: f32[7,32], index: 10, kind: input, shape index: {}]
  %s11 = inlined_call_operand.vmem [shape: f32[7,1], index: 11, kind: input, shape index: {}]
  %s12 = inlined_call_operand.vmem [shape: f32[2,7,256], index: 12, kind: output, shape index: {}]
  %s13 = sld [smem:[#allocation0]]
  $region81: #{final_classifier_forward.3} parent=0
    _
  %s15 = ssub.s32 1, %s13
  %s16 = scalar_select 0, %s15, %s13
  loop: start=0, step=1, limit=4
  $region2: #{final_classifier_forward.3} parent=0 // loop_pre_header
    _
  $region3: #{final_classifier_forward.3} parent=0 // loop_header
    %s18 = sphi 0, %s22
    %p19 = scmp.ge.s32.totalorder %s18, 4
    %s26 = sphi 0, %s26
    %s28 = sphi 0, %s26
    %s29 = sphi 0, %s28
    %s43 = sphi 0, %s29
    %s49 = sphi 0, %s51
    %s52 = sphi 0, %s49
    %s53 = sphi 0, %s52
    %s69 = sphi 0, %s53
    %s75 = sphi 0, %s77
    %s78 = sphi 0, %s75
    %s79 = sphi 0, %s78
    %s95 = sphi 0, %s79
    %s99 = sphi 0, %s99
    %s101 = sphi 0, %s99
    %s102 = sphi 0, %s101
    %s116 = sphi 0, %s102
    %s120 = sphi 0, %s120
    %s122 = sphi 0, %s120
    %s123 = sphi 0, %s122
    %s137 = sphi 0, %s123
    %s141 = sphi 0, %s141
    %s143 = sphi 0, %s141
    %s144 = sphi 0, %s143
    %s158 = sphi 0, %s144
    %s162 = sphi 0, %s162
    %s164 = sphi 0, %s162
    %s165 = sphi 0, %s164
    %s179 = sphi 0, %s165
    %s183 = sphi 0, %s183
    %s185 = sphi 0, %s183
    %s186 = sphi 0, %s185
    %s200 = sphi 0, %s186
    %s204 = sphi 0, %s204
    %s206 = sphi 0, %s204
    %s207 = sphi 0, %s206
    %s221 = sphi 0, %s207
    %s225 = sphi 0, %s225
    %s227 = sphi 0, %s225
    %s228 = sphi 0, %s227
    %s242 = sphi 0, %s228
    %s246 = sphi 0, %s246
    %s248 = sphi 0, %s246
    %s249 = sphi 0, %s248
    %s263 = sphi 0, %s249
    %s267 = sphi 0, %s267
    %s269 = sphi 0, %s267
    %s270 = sphi 0, %s269
    %s284 = sphi 0, %s270
    %s290 = sphi 0, %s292
    %s293 = sphi 0, %s290
    %s294 = sphi 0, %s293
    %s310 = sphi 0, %s294
  $region4: #{final_classifier_forward.3} parent=0 // loop_header_branch
    %21 = sbr.rel (%p19) target = $region8
  $region5: #{final_classifier_forward.3} parent=0 // loop_body
    %s23 = ssub.s32 %s18, 1
    %s24 = ssub.s32 %s18, 2
    %s25 = sadd.s32 %s18, 1
    %s27 = sadd.s32 %s26, 1
    %p30 = scmp.eq.s32.totalorder %s18, 1
    %p31 = scmp.ne.s32.totalorder %s26, %s28
    %p32 = scmp.eq.s32.totalorder %s18, 0
    %p33 = por %p31, %p32
    %p34 = scmp.ne.s32.totalorder %s26, %s28
    %p35 = scmp.eq.s32.totalorder %s23, 1
    %p36 = por %p34, %p35
    %p37 = scmp.ne.s32.totalorder %s28, %s29
    %p38 = scmp.eq.s32.totalorder %s23, 0
    %p39 = por %p37, %p38
    %p40 = scmp.ne.s32.totalorder %s28, %s29
    %p41 = scmp.eq.s32.totalorder %s24, 1
    %p42 = por %p40, %p41
    %p44 = scmp.ne.s32.totalorder %s29, %s43
    %p45 = scmp.eq.s32.totalorder %s24, 0
    %p46 = por %p44, %p45
    %s47 = ssub.s32 %s18, %s25
    %p48 = scmp.eq.s32.totalorder %s47, 0
    %s50 = sadd.s32 %s49, 1
    %s51 = scalar_select %p48, %s49, %s50
    %p54 = pneg %p48
    %p55 = scmp.eq.s32.totalorder %s18, 1
    %p56 = por %p54, %p55
    %p57 = scmp.ne.s32.totalorder %s49, %s52
    %p58 = scmp.eq.s32.totalorder %s18, 0
    %p59 = por %p57, %p58
    %p60 = scmp.ne.s32.totalorder %s49, %s52
    %p61 = scmp.eq.s32.totalorder %s23, 1
    %p62 = por %p60, %p61
    %p63 = scmp.ne.s32.totalorder %s52, %s53
    %p64 = scmp.eq.s32.totalorder %s23, 0
    %p65 = por %p63, %p64
    %p66 = scmp.ne.s32.totalorder %s52, %s53
    %p67 = scmp.eq.s32.totalorder %s24, 1
    %p68 = por %p66, %p67
    %p70 = scmp.ne.s32.totalorder %s53, %s69
    %p71 = scmp.eq.s32.totalorder %s24, 0
    %p72 = por %p70, %p71
    %s73 = ssub.s32 %s18, %s25
    %p74 = scmp.eq.s32.totalorder %s73, 0
    %s76 = sadd.s32 %s75, 1
    %s77 = scalar_select %p74, %s75, %s76
    %p80 = pneg %p74
    %p81 = scmp.eq.s32.totalorder %s18, 1
    %p82 = por %p80, %p81
    %p83 = scmp.ne.s32.totalorder %s75, %s78
    %p84 = scmp.eq.s32.totalorder %s18, 0
    %p85 = por %p83, %p84
    %p86 = scmp.ne.s32.totalorder %s75, %s78
    %p87 = scmp.eq.s32.totalorder %s23, 1
    %p88 = por %p86, %p87
    %p89 = scmp.ne.s32.totalorder %s78, %s79
    %p90 = scmp.eq.s32.totalorder %s23, 0
    %p91 = por %p89, %p90
    %p92 = scmp.ne.s32.totalorder %s78, %s79
    %p93 = scmp.eq.s32.totalorder %s24, 1
    %p94 = por %p92, %p93
    %p96 = scmp.ne.s32.totalorder %s79, %s95
    %p97 = scmp.eq.s32.totalorder %s24, 0
    %p98 = por %p96, %p97
    %s100 = sadd.s32 %s99, 1
    %p103 = scmp.eq.s32.totalorder %s18, 1
    %p104 = scmp.ne.s32.totalorder %s99, %s101
    %p105 = scmp.eq.s32.totalorder %s18, 0
    %p106 = por %p104, %p105
    %p107 = scmp.ne.s32.totalorder %s99, %s101
    %p108 = scmp.eq.s32.totalorder %s23, 1
    %p109 = por %p107, %p108
    %p110 = scmp.ne.s32.totalorder %s101, %s102
    %p111 = scmp.eq.s32.totalorder %s23, 0
    %p112 = por %p110, %p111
    %p113 = scmp.ne.s32.totalorder %s101, %s102
    %p114 = scmp.eq.s32.totalorder %s24, 1
    %p115 = por %p113, %p114
    %p117 = scmp.ne.s32.totalorder %s102, %s116
    %p118 = scmp.eq.s32.totalorder %s24, 0
    %p119 = por %p117, %p118
    %s121 = sadd.s32 %s120, 1
    %p124 = scmp.eq.s32.totalorder %s18, 1
    %p125 = scmp.ne.s32.totalorder %s120, %s122
    %p126 = scmp.eq.s32.totalorder %s18, 0
    %p127 = por %p125, %p126
    %p128 = scmp.ne.s32.totalorder %s120, %s122
    %p129 = scmp.eq.s32.totalorder %s23, 1
    %p130 = por %p128, %p129
    %p131 = scmp.ne.s32.totalorder %s122, %s123
    %p132 = scmp.eq.s32.totalorder %s23, 0
    %p133 = por %p131, %p132
    %p134 = scmp.ne.s32.totalorder %s122, %s123
    %p135 = scmp.eq.s32.totalorder %s24, 1
    %p136 = por %p134, %p135
    %p138 = scmp.ne.s32.totalorder %s123, %s137
    %p139 = scmp.eq.s32.totalorder %s24, 0
    %p140 = por %p138, %p139
    %s142 = sadd.s32 %s141, 1
    %p145 = scmp.eq.s32.totalorder %s18, 1
    %p146 = scmp.ne.s32.totalorder %s141, %s143
    %p147 = scmp.eq.s32.totalorder %s18, 0
    %p148 = por %p146, %p147
    %p149 = scmp.ne.s32.totalorder %s141, %s143
    %p150 = scmp.eq.s32.totalorder %s23, 1
    %p151 = por %p149, %p150
    %p152 = scmp.ne.s32.totalorder %s143, %s144
    %p153 = scmp.eq.s32.totalorder %s23, 0
    %p154 = por %p152, %p153
    %p155 = scmp.ne.s32.totalorder %s143, %s144
    %p156 = scmp.eq.s32.totalorder %s24, 1
    %p157 = por %p155, %p156
    %p159 = scmp.ne.s32.totalorder %s144, %s158
    %p160 = scmp.eq.s32.totalorder %s24, 0
    %p161 = por %p159, %p160
    %s163 = sadd.s32 %s162, 1
    %p166 = scmp.eq.s32.totalorder %s18, 1
    %p167 = scmp.ne.s32.totalorder %s162, %s164
    %p168 = scmp.eq.s32.totalorder %s18, 0
    %p169 = por %p167, %p168
    %p170 = scmp.ne.s32.totalorder %s162, %s164
    %p171 = scmp.eq.s32.totalorder %s23, 1
    %p172 = por %p170, %p171
    %p173 = scmp.ne.s32.totalorder %s164, %s165
    %p174 = scmp.eq.s32.totalorder %s23, 0
    %p175 = por %p173, %p174
    %p176 = scmp.ne.s32.totalorder %s164, %s165
    %p177 = scmp.eq.s32.totalorder %s24, 1
    %p178 = por %p176, %p177
    %p180 = scmp.ne.s32.totalorder %s165, %s179
    %p181 = scmp.eq.s32.totalorder %s24, 0
    %p182 = por %p180, %p181
    %s184 = sadd.s32 %s183, 1
    %p187 = scmp.eq.s32.totalorder %s18, 1
    %p188 = scmp.ne.s32.totalorder %s183, %s185
    %p189 = scmp.eq.s32.totalorder %s18, 0
    %p190 = por %p188, %p189
    %p191 = scmp.ne.s32.totalorder %s183, %s185
    %p192 = scmp.eq.s32.totalorder %s23, 1
    %p193 = por %p191, %p192
    %p194 = scmp.ne.s32.totalorder %s185, %s186
    %p195 = scmp.eq.s32.totalorder %s23, 0
    %p196 = por %p194, %p195
    %p197 = scmp.ne.s32.totalorder %s185, %s186
    %p198 = scmp.eq.s32.totalorder %s24, 1
    %p199 = por %p197, %p198
    %p201 = scmp.ne.s32.totalorder %s186, %s200
    %p202 = scmp.eq.s32.totalorder %s24, 0
    %p203 = por %p201, %p202
    %s205 = sadd.s32 %s204, 1
    %p208 = scmp.eq.s32.totalorder %s18, 1
    %p209 = scmp.ne.s32.totalorder %s204, %s206
    %p210 = scmp.eq.s32.totalorder %s18, 0
    %p211 = por %p209, %p210
    %p212 = scmp.ne.s32.totalorder %s204, %s206
    %p213 = scmp.eq.s32.totalorder %s23, 1
    %p214 = por %p212, %p213
    %p215 = scmp.ne.s32.totalorder %s206, %s207
    %p216 = scmp.eq.s32.totalorder %s23, 0
    %p217 = por %p215, %p216
    %p218 = scmp.ne.s32.totalorder %s206, %s207
    %p219 = scmp.eq.s32.totalorder %s24, 1
    %p220 = por %p218, %p219
    %p222 = scmp.ne.s32.totalorder %s207, %s221
    %p223 = scmp.eq.s32.totalorder %s24, 0
    %p224 = por %p222, %p223
    %s226 = sadd.s32 %s225, 1
    %p229 = scmp.eq.s32.totalorder %s18, 1
    %p230 = scmp.ne.s32.totalorder %s225, %s227
    %p231 = scmp.eq.s32.totalorder %s18, 0
    %p232 = por %p230, %p231
    %p233 = scmp.ne.s32.totalorder %s225, %s227
    %p234 = scmp.eq.s32.totalorder %s23, 1
    %p235 = por %p233, %p234
    %p236 = scmp.ne.s32.totalorder %s227, %s228
    %p237 = scmp.eq.s32.totalorder %s23, 0
    %p238 = por %p236, %p237
    %p239 = scmp.ne.s32.totalorder %s227, %s228
    %p240 = scmp.eq.s32.totalorder %s24, 1
    %p241 = por %p239, %p240
    %p243 = scmp.ne.s32.totalorder %s228, %s242
    %p244 = scmp.eq.s32.totalorder %s24, 0
    %p245 = por %p243, %p244
    %s247 = sadd.s32 %s246, 1
    %p250 = scmp.eq.s32.totalorder %s18, 1
    %p251 = scmp.ne.s32.totalorder %s246, %s248
    %p252 = scmp.eq.s32.totalorder %s18, 0
    %p253 = por %p251, %p252
    %p254 = scmp.ne.s32.totalorder %s246, %s248
    %p255 = scmp.eq.s32.totalorder %s23, 1
    %p256 = por %p254, %p255
    %p257 = scmp.ne.s32.totalorder %s248, %s249
    %p258 = scmp.eq.s32.totalorder %s23, 0
    %p259 = por %p257, %p258
    %p260 = scmp.ne.s32.totalorder %s248, %s249
    %p261 = scmp.eq.s32.totalorder %s24, 1
    %p262 = por %p260, %p261
    %p264 = scmp.ne.s32.totalorder %s249, %s263
    %p265 = scmp.eq.s32.totalorder %s24, 0
    %p266 = por %p264, %p265
    %s268 = sadd.s32 %s267, 1
    %p271 = scmp.eq.s32.totalorder %s18, 1
    %p272 = scmp.ne.s32.totalorder %s267, %s269
    %p273 = scmp.eq.s32.totalorder %s18, 0
    %p274 = por %p272, %p273
    %p275 = scmp.ne.s32.totalorder %s267, %s269
    %p276 = scmp.eq.s32.totalorder %s23, 1
    %p277 = por %p275, %p276
    %p278 = scmp.ne.s32.totalorder %s269, %s270
    %p279 = scmp.eq.s32.totalorder %s23, 0
    %p280 = por %p278, %p279
    %p281 = scmp.ne.s32.totalorder %s269, %s270
    %p282 = scmp.eq.s32.totalorder %s24, 1
    %p283 = por %p281, %p282
    %p285 = scmp.ne.s32.totalorder %s270, %s284
    %p286 = scmp.eq.s32.totalorder %s24, 0
    %p287 = por %p285, %p286
    %s288 = ssub.s32 %s18, %s25
    %p289 = scmp.eq.s32.totalorder %s288, 0
    %s291 = sadd.s32 %s290, 1
    %s292 = scalar_select %p289, %s290, %s291
    %p295 = pneg %p289
    %p296 = scmp.eq.s32.totalorder %s18, 1
    %p297 = por %p295, %p296
    %p298 = scmp.ne.s32.totalorder %s290, %s293
    %p299 = scmp.eq.s32.totalorder %s18, 0
    %p300 = por %p298, %p299
    %p301 = scmp.ne.s32.totalorder %s290, %s293
    %p302 = scmp.eq.s32.totalorder %s23, 1
    %p303 = por %p301, %p302
    %p304 = scmp.ne.s32.totalorder %s293, %s294
    %p305 = scmp.eq.s32.totalorder %s23, 0
    %p306 = por %p304, %p305
    %p307 = scmp.ne.s32.totalorder %s293, %s294
    %p308 = scmp.eq.s32.totalorder %s24, 1
    %p309 = por %p307, %p308
    %p311 = scmp.ne.s32.totalorder %s294, %s310
    %p312 = scmp.eq.s32.totalorder %s24, 0
    %p313 = por %p311, %p312
    %p314 = scmp.le.s32.totalorder 1, %s18
    %p315 = scmp.lt.s32.totalorder %s18, 3
    %p316 = pnand %p314, %p315
    %p317 = pneg %p316
    // Predicated region
    $region9: #{final_classifier_forward.3} parent=5 // pred_check
      _
    $region10: #{final_classifier_forward.3} parent=5 // pred_check_branch
      %319 = sbr.rel (%p316) target = $region12
    $region11: #{final_classifier_forward.3} parent=5 // pred_region
      %s320 = ssub.s32 %s18, 1
      // Predicated region
      $region13: #{final_classifier_forward.3} parent=11 // pred_check
        %p321 = pneg %p39
      $region14: #{final_classifier_forward.3} parent=11 // pred_check_branch
        %323 = sbr.rel (%p321) target = $region16
      $region15: #{final_classifier_forward.3} parent=11 // pred_region
        _
      $region16: #{final_classifier_forward.3} parent=11 // pred_fallthru
        _
      // Predicated region
      $region17: #{final_classifier_forward.3} parent=11 // pred_check
        %p324 = pneg %p112
      $region18: #{final_classifier_forward.3} parent=11 // pred_check_branch
        %326 = sbr.rel (%p324) target = $region20
      $region19: #{final_classifier_forward.3} parent=11 // pred_region
        _
      $region20: #{final_classifier_forward.3} parent=11 // pred_fallthru
        _
      // Predicated region
      $region21: #{final_classifier_forward.3} parent=11 // pred_check
        %p327 = pneg %p133
      $region22: #{final_classifier_forward.3} parent=11 // pred_check_branch
        %329 = sbr.rel (%p327) target = $region24
      $region23: #{final_classifier_forward.3} parent=11 // pred_region
        _
      $region24: #{final_classifier_forward.3} parent=11 // pred_fallthru
        _
      // Predicated region
      $region25: #{final_classifier_forward.3} parent=11 // pred_check
        %p330 = pneg %p154
      $region26: #{final_classifier_forward.3} parent=11 // pred_check_branch
        %332 = sbr.rel (%p330) target = $region28
      $region27: #{final_classifier_forward.3} parent=11 // pred_region
        _
      $region28: #{final_classifier_forward.3} parent=11 // pred_fallthru
        _
      // Predicated region
      $region29: #{final_classifier_forward.3} parent=11 // pred_check
        %p333 = pneg %p175
      $region30: #{final_classifier_forward.3} parent=11 // pred_check_branch
        %335 = sbr.rel (%p333) target = $region32
      $region31: #{final_classifier_forward.3} parent=11 // pred_region
        _
      $region32: #{final_classifier_forward.3} parent=11 // pred_fallthru
        _
      // Predicated region
      $region33: #{final_classifier_forward.3} parent=11 // pred_check
        %p336 = pneg %p196
      $region34: #{final_classifier_forward.3} parent=11 // pred_check_branch
        %338 = sbr.rel (%p336) target = $region36
      $region35: #{final_classifier_forward.3} parent=11 // pred_region
        _
      $region36: #{final_classifier_forward.3} parent=11 // pred_fallthru
        _
      // Predicated region
      $region37: #{final_classifier_forward.3} parent=11 // pred_check
        %p339 = pneg %p217
      $region38: #{final_classifier_forward.3} parent=11 // pred_check_branch
        %341 = sbr.rel (%p339) target = $region40
      $region39: #{final_classifier_forward.3} parent=11 // pred_region
        _
      $region40: #{final_classifier_forward.3} parent=11 // pred_fallthru
        _
      // Predicated region
      $region41: #{final_classifier_forward.3} parent=11 // pred_check
        %p342 = pneg %p238
      $region42: #{final_classifier_forward.3} parent=11 // pred_check_branch
        %344 = sbr.rel (%p342) target = $region44
      $region43: #{final_classifier_forward.3} parent=11 // pred_region
        _
      $region44: #{final_classifier_forward.3} parent=11 // pred_fallthru
        _
      // Predicated region
      $region45: #{final_classifier_forward.3} parent=11 // pred_check
        %p345 = pneg %p259
      $region46: #{final_classifier_forward.3} parent=11 // pred_check_branch
        %347 = sbr.rel (%p345) target = $region48
      $region47: #{final_classifier_forward.3} parent=11 // pred_region
        _
      $region48: #{final_classifier_forward.3} parent=11 // pred_fallthru
        _
      // Predicated region
      $region49: #{final_classifier_forward.3} parent=11 // pred_check
        %p348 = pneg %p280
      $region50: #{final_classifier_forward.3} parent=11 // pred_check_branch
        %350 = sbr.rel (%p348) target = $region52
      $region51: #{final_classifier_forward.3} parent=11 // pred_region
        _
      $region52: #{final_classifier_forward.3} parent=11 // pred_fallthru
        _
    $region12: #{final_classifier_forward.3} parent=5 // pred_fallthru
      _
    %p351 = scmp.lt.s32.totalorder %s18, 2
    // Predicated region
    $region53: #{final_classifier_forward.3} parent=5 // pred_check
      %p352 = pneg %p351
    $region54: #{final_classifier_forward.3} parent=5 // pred_check_branch
      %354 = sbr.rel (%p352) target = $region56
    $region55: #{final_classifier_forward.3} parent=5 // pred_region
      // Predicated region
      $region57: #{final_classifier_forward.3} parent=55 // pred_check
        %p355 = pneg %p59
      $region58: #{final_classifier_forward.3} parent=55 // pred_check_branch
        %357 = sbr.rel (%p355) target = $region60
      $region59: #{final_classifier_forward.3} parent=55 // pred_region
        %p358 = scmp.lt.s32.totalorder %s18, 1
        %s359 = scalar_select %p358, %s18, 1
        %s360 = smul.addr %s359, 10
        %s361 = smul.addr %s360, 4
        %s362 = scalar_lea.vmem %s1, %s361
      $region60: #{final_classifier_forward.3} parent=55 // pred_fallthru
        _
      // Predicated region
      $region61: #{final_classifier_forward.3} parent=55 // pred_check
        %p363 = pneg %p85
      $region62: #{final_classifier_forward.3} parent=55 // pred_check_branch
        %365 = sbr.rel (%p363) target = $region64
      $region63: #{final_classifier_forward.3} parent=55 // pred_region
        %p366 = scmp.lt.s32.totalorder %s18, 1
        %s367 = scalar_select %p366, %s18, 1
        %s368 = smul.addr %s367, 32
        %s369 = smul.addr %s368, 4
        %s370 = scalar_lea.vmem %s2, %s369
      $region64: #{final_classifier_forward.3} parent=55 // pred_fallthru
        _
    $region56: #{final_classifier_forward.3} parent=5 // pred_fallthru
      _
    %p371 = scmp.le.s32.totalorder 1, %s18
    %p372 = scmp.lt.s32.totalorder %s18, 3
    %p373 = pnand %p371, %p372
    %p374 = pneg %p373
    // Predicated region
    $region65: #{final_classifier_forward.3} parent=5 // pred_check
      _
    $region66: #{final_classifier_forward.3} parent=5 // pred_check_branch
      %376 = sbr.rel (%p373) target = $region68
    $region67: #{final_classifier_forward.3} parent=5 // pred_region
      %s377 = ssub.s32 %s18, 1
      %p378 = pneg %p39
      %p379 = pneg %p36
      %p380 = scmp.lt.s32.totalorder %s23, 1
      %s381 = scalar_select %p380, %s23, 1
      %s382 = smul.addr %s381, 10
      %s383 = smul.addr %s382, 4
      %s384 = scalar_lea.vmem %s1, %s383
      %p385 = pneg %p65
      %p386 = pneg %p62
      %p387 = scmp.lt.s32.totalorder %s23, 1
      %s388 = scalar_select %p387, %s23, 1
      %s389 = smul.addr %s388, 32
      %s390 = smul.addr %s389, 4
      %s391 = scalar_lea.vmem %s2, %s390
      %p392 = pneg %p91
      %p393 = pneg %p88
      %p394 = pneg %p112
      %p395 = pneg %p109
      %p396 = pneg %p133
      %p397 = pneg %p130
      %p398 = pneg %p154
      %p399 = pneg %p151
      %p400 = pneg %p175
      %p401 = pneg %p172
      %p402 = pneg %p196
      %p403 = pneg %p193
      %p404 = pneg %p217
      %p405 = pneg %p214
      %p406 = pneg %p238
      %p407 = pneg %p235
      %p408 = pneg %p259
      %p409 = pneg %p256
      %p410 = pneg %p280
      %p411 = pneg %p277
      %p412 = pneg %p306
      %p413 = pneg %p303
      %p414 = scmp.lt.s32.totalorder %s23, 1
      %s415 = scalar_select %p414, %s23, 1
      %s416 = smul.addr %s415, 2
      %s417 = smul.addr %s416, 8
      %s418 = scalar_lea.vmem %s12, %s417
      %p419 = scmp.lt.s32.totalorder %s23, 1
      %s420 = scalar_select %p419, %s23, 1
      %s421 = smul.addr %s420, 10
      %s422 = smul.addr %s421, 4
      %s423 = scalar_lea.vmem %s1, %s422
      %p424 = scmp.lt.s32.totalorder %s23, 1
      %s425 = scalar_select %p424, %s23, 1
      %s426 = smul.addr %s425, 32
      %s427 = smul.addr %s426, 4
      %s428 = scalar_lea.vmem %s2, %s427
      %p429 = scmp.lt.s32.totalorder %s23, 1
      %s430 = scalar_select %p429, %s23, 1
      %s431 = smul.addr %s430, 2
      %s432 = smul.addr %s431, 8
      %s433 = scalar_lea.vmem %s12, %s432
      %v435 = vld [vmem:[%s0] sm:$0xf]
      %v436 = vld [vmem:[%s0 + $0x4] sm:$0xf]
      %v437 = vld [vmem:[%s0 + $0x8] sm:$0xf]
      %v438 = vld [vmem:[%s0 + $0xc] sm:$0xf]
      %v439 = vld [vmem:[%s0 + $0x10] sm:$0xf]
      %v440 = vld [vmem:[%s0 + $0x14] sm:$0xf]
      %v441 = vld [vmem:[%s0 + $0x18] sm:$0xf]
      %v442 = vld [vmem:[%s0 + $0x1c] sm:$0xf]
      %v443 = vld [vmem:[%s0 + $0x20] sm:$0xf]
      %v444 = vld [vmem:[%s0 + $0x24] sm:$0xf]
      %v445 = vld [vmem:[%s0 + $0x28] sm:$0xf]
      %v446 = vld [vmem:[%s0 + $0x2c] sm:$0xf]
      %v447 = vld [vmem:[%s0 + $0x30] sm:$0xf]
      %v448 = vld [vmem:[%s0 + $0x34] sm:$0xf]
      %v449 = vld [vmem:[%s0 + $0x38] sm:$0xf]
      %v450 = vld [vmem:[%s0 + $0x3c] sm:$0xf]
      %v451 = vld [vmem:[%s0 + $0x40] sm:$0xf]
      %v452 = vld [vmem:[%s0 + $0x44] sm:$0xf]
      %v453 = vld [vmem:[%s0 + $0x48] sm:$0xf]
      %v454 = vld [vmem:[%s0 + $0x4c] sm:$0xf]
      %v455 = vld [vmem:[%s0 + $0x50] sm:$0xf]
      %v456 = vld [vmem:[%s0 + $0x54] sm:$0xf]
      %v457 = vld [vmem:[%s0 + $0x58] sm:$0xf]
      %v458 = vld [vmem:[%s0 + $0x5c] sm:$0xf]
      %v459 = vld [vmem:[%s0 + $0x60] sm:$0xf]
      %v460 = vld [vmem:[%s0 + $0x64] sm:$0xf]
      %v461 = vld [vmem:[%s0 + $0x68] sm:$0xf]
      %v462 = vld [vmem:[%s0 + $0x6c] sm:$0xf]
      %v463 = vld [vmem:[%s0 + $0x70] sm:$0xf]
      %v464 = vld [vmem:[%s0 + $0x74] sm:$0xf]
      %v465 = vld [vmem:[%s0 + $0x78] sm:$0xf]
      %v466 = vld [vmem:[%s0 + $0x7c] sm:$0xf]
      %v467 = vld [vmem:[%s423] sm:$0xf]
      %v468 = vld [vmem:[%s423 + $0x4] sm:$0xf]
      %v469 = vld [vmem:[%s423 + $0x8] sm:$0xf]
      %v470 = vld [vmem:[%s423 + $0xc] sm:$0xf]
      %v471 = vld [vmem:[%s423 + $0x10] sm:$0xf]
      %v472 = vld [vmem:[%s423 + $0x14] sm:$0xf]
      %v473 = vld [vmem:[%s423 + $0x18] sm:$0xf]
      %v474 = vld [vmem:[%s423 + $0x1c] sm:$0xf]
      %v475 = vld [vmem:[%s423 + $0x20] sm:$0xf]
      %v476 = vld [vmem:[%s423 + $0x24] sm:$0xf]
      %v509 = vunpack.c.l.b16 %v435
      %v510 = vunpack.c.l.b16 %v436
      %v511 = vunpack.c.l.b16 %v437
      %v512 = vunpack.c.l.b16 %v438
      %v513 = vunpack.c.l.b16 %v439
      %v514 = vunpack.c.l.b16 %v440
      %v515 = vunpack.c.l.b16 %v441
      %v516 = vunpack.c.l.b16 %v442
      %v517 = vunpack.c.l.b16 %v443
      %v518 = vunpack.c.l.b16 %v444
      %v519 = vunpack.c.l.b16 %v445
      %v520 = vunpack.c.l.b16 %v446
      %v521 = vunpack.c.l.b16 %v447
      %v522 = vunpack.c.l.b16 %v448
      %v523 = vunpack.c.l.b16 %v449
      %v524 = vunpack.c.l.b16 %v450
      %v525 = vunpack.c.l.b16 %v451
      %v526 = vunpack.c.l.b16 %v452
      %v527 = vunpack.c.l.b16 %v453
      %v528 = vunpack.c.l.b16 %v454
      %v529 = vunpack.c.l.b16 %v455
      %v530 = vunpack.c.l.b16 %v456
      %v531 = vunpack.c.l.b16 %v457
      %v532 = vunpack.c.l.b16 %v458
      %v533 = vunpack.c.l.b16 %v459
      %v534 = vunpack.c.l.b16 %v460
      %v535 = vunpack.c.l.b16 %v461
      %v536 = vunpack.c.l.b16 %v462
      %v537 = vunpack.c.l.b16 %v463
      %v538 = vunpack.c.l.b16 %v464
      %v539 = vunpack.c.l.b16 %v465
      %v540 = vunpack.c.l.b16 %v466
      %v541 = vpack.c.b16 %v510, %v509
      %v542 = vpack.c.b16 %v512, %v511
      %v543 = vpack.c.b16 %v514, %v513
      %v544 = vpack.c.b16 %v516, %v515
      %v545 = vpack.c.b16 %v518, %v517
      %v546 = vpack.c.b16 %v520, %v519
      %v547 = vpack.c.b16 %v522, %v521
      %v548 = vpack.c.b16 %v524, %v523
      %v549 = vpack.c.b16 %v526, %v525
      %v550 = vpack.c.b16 %v528, %v527
      %v551 = vpack.c.b16 %v530, %v529
      %v552 = vpack.c.b16 %v532, %v531
      %v553 = vpack.c.b16 %v534, %v533
      %v554 = vpack.c.b16 %v536, %v535
      %v555 = vpack.c.b16 %v538, %v537
      %v556 = vpack.c.b16 %v540, %v539
      %v567 = vunpack.c.l.b16 %v467
      %v568 = vunpack.c.l.b16 %v468
      %v569 = vunpack.c.l.b16 %v469
      %v570 = vunpack.c.l.b16 %v470
      %v571 = vunpack.c.l.b16 %v471
      %v572 = vunpack.c.l.b16 %v472
      %v573 = vunpack.c.l.b16 %v473
      %v574 = vunpack.c.l.b16 %v474
      %v575 = vunpack.c.l.b16 %v475
      %v576 = vunpack.c.l.b16 %v476
      %v577 = vpack.c.b16 %v568, %v567
      %v578 = vpack.c.b16 %v570, %v569
      %v579 = vpack.c.b16 %v572, %v571
      %v580 = vpack.c.b16 %v574, %v573
      %v581 = vpack.c.b16 %v576, %v575
      %vm587 = vcmask 654336
      %v589 = vsel %vm587, %v541, 0
      %v592 = vsel %vm587, %v542, 0
      %v595 = vsel %vm587, %v543, 0
      %v598 = vsel %vm587, %v544, 0
      %v601 = vsel %vm587, %v545, 0
      %v604 = vsel %vm587, %v546, 0
      %v607 = vsel %vm587, %v547, 0
      %v610 = vsel %vm587, %v548, 0
      %v613 = vsel %vm587, %v549, 0
      %v616 = vsel %vm587, %v550, 0
      %v619 = vsel %vm587, %v551, 0
      %v622 = vsel %vm587, %v552, 0
      %v625 = vsel %vm587, %v553, 0
      %v628 = vsel %vm587, %v554, 0
      %v631 = vsel %vm587, %v555, 0
      %v634 = vsel %vm587, %v556, 0
      %636 = vmatpush.bf16.msra.mxu0 0
      %637 = vmatpush.bf16.msra.mxu0 0
      %638 = vmatpush.bf16.msra.mxu0 0
      %639 = vmatpush.bf16.msra.mxu0 %v581
      %640 = vmatpush.bf16.msra.mxu0 %v580
      %641 = vmatpush.bf16.msra.mxu0 %v579
      %642 = vmatpush.bf16.msra.mxu0 %v578
      %643 = vmatpush.bf16.msra.mxu0 %v577
      %644 = vmatmul.bf16.gmra.mxu0 %v589
      %v645 = vpop.f32.mrf.mxu0
      %v646 = vadd.f32 0.0, %v645
      %v647 = vpop.f32.mrf.mxu0
      %v648 = vadd.f32 0.0, %v647
      %649 = vmatmul.bf16.gmra.mxu0 %v592
      %v650 = vpop.f32.mrf.mxu0
      %v651 = vadd.f32 0.0, %v650
      %v652 = vpop.f32.mrf.mxu0
      %v653 = vadd.f32 0.0, %v652
      %654 = vmatmul.bf16.gmra.mxu0 %v595
      %v655 = vpop.f32.mrf.mxu0
      %v656 = vadd.f32 0.0, %v655
      %v657 = vpop.f32.mrf.mxu0
      %v658 = vadd.f32 0.0, %v657
      %659 = vmatmul.bf16.gmra.mxu0 %v598
      %v660 = vpop.f32.mrf.mxu0
      %v661 = vadd.f32 0.0, %v660
      %v662 = vpop.f32.mrf.mxu0
      %v663 = vadd.f32 0.0, %v662
      %664 = vmatmul.bf16.gmra.mxu0 %v601
      %v665 = vpop.f32.mrf.mxu0
      %v666 = vadd.f32 0.0, %v665
      %v667 = vpop.f32.mrf.mxu0
      %v668 = vadd.f32 0.0, %v667
      %669 = vmatmul.bf16.gmra.mxu0 %v604
      %v670 = vpop.f32.mrf.mxu0
      %v671 = vadd.f32 0.0, %v670
      %v672 = vpop.f32.mrf.mxu0
      %v673 = vadd.f32 0.0, %v672
      %674 = vmatmul.bf16.gmra.mxu0 %v607
      %v675 = vpop.f32.mrf.mxu0
      %v676 = vadd.f32 0.0, %v675
      %v677 = vpop.f32.mrf.mxu0
      %v678 = vadd.f32 0.0, %v677
      %679 = vmatmul.bf16.gmra.mxu0 %v610
      %v680 = vpop.f32.mrf.mxu0
      %v681 = vadd.f32 0.0, %v680
      %v682 = vpop.f32.mrf.mxu0
      %v683 = vadd.f32 0.0, %v682
      %684 = vmatmul.bf16.gmra.mxu0 %v613
      %v685 = vpop.f32.mrf.mxu0
      %v686 = vadd.f32 0.0, %v685
      %v687 = vpop.f32.mrf.mxu0
      %v688 = vadd.f32 0.0, %v687
      %689 = vmatmul.bf16.gmra.mxu0 %v616
      %v690 = vpop.f32.mrf.mxu0
      %v691 = vadd.f32 0.0, %v690
      %v692 = vpop.f32.mrf.mxu0
      %v693 = vadd.f32 0.0, %v692
      %694 = vmatmul.bf16.gmra.mxu0 %v619
      %v695 = vpop.f32.mrf.mxu0
      %v696 = vadd.f32 0.0, %v695
      %v697 = vpop.f32.mrf.mxu0
      %v698 = vadd.f32 0.0, %v697
      %699 = vmatmul.bf16.gmra.mxu0 %v622
      %v700 = vpop.f32.mrf.mxu0
      %v701 = vadd.f32 0.0, %v700
      %v702 = vpop.f32.mrf.mxu0
      %v703 = vadd.f32 0.0, %v702
      %704 = vmatmul.bf16.gmra.mxu0 %v625
      %v705 = vpop.f32.mrf.mxu0
      %v706 = vadd.f32 0.0, %v705
      %v707 = vpop.f32.mrf.mxu0
      %v708 = vadd.f32 0.0, %v707
      %709 = vmatmul.bf16.gmra.mxu0 %v628
      %v710 = vpop.f32.mrf.mxu0
      %v711 = vadd.f32 0.0, %v710
      %v712 = vpop.f32.mrf.mxu0
      %v713 = vadd.f32 0.0, %v712
      %714 = vmatmul.bf16.gmra.mxu0 %v631
      %v715 = vpop.f32.mrf.mxu0
      %v716 = vadd.f32 0.0, %v715
      %v717 = vpop.f32.mrf.mxu0
      %v718 = vadd.f32 0.0, %v717
      %719 = vmatmul.bf16.gmra.mxu0 %v634
      %v720 = vpop.f32.mrf.mxu0
      %v721 = vadd.f32 0.0, %v720
      %v722 = vpop.f32.mrf.mxu0
      %v723 = vadd.f32 0.0, %v722
      %724 = vdwg.mxu0
      %v725 = vld [vmem:[%s428] sm:$0xf]
      %v726 = vld [vmem:[%s428 + $0x4] sm:$0xf]
      %v727 = vld [vmem:[%s428 + $0x8] sm:$0xf]
      %v728 = vld [vmem:[%s428 + $0xc] sm:$0xf]
      %v729 = vld [vmem:[%s428 + $0x10] sm:$0xf]
      %v730 = vld [vmem:[%s428 + $0x14] sm:$0xf]
      %v731 = vld [vmem:[%s428 + $0x18] sm:$0xf]
      %v732 = vld [vmem:[%s428 + $0x1c] sm:$0xf]
      %v733 = vld [vmem:[%s428 + $0x20] sm:$0xf]
      %v734 = vld [vmem:[%s428 + $0x24] sm:$0xf]
      %v735 = vld [vmem:[%s428 + $0x28] sm:$0xf]
      %v736 = vld [vmem:[%s428 + $0x2c] sm:$0xf]
      %v737 = vld [vmem:[%s428 + $0x30] sm:$0xf]
      %v738 = vld [vmem:[%s428 + $0x34] sm:$0xf]
      %v739 = vld [vmem:[%s428 + $0x38] sm:$0xf]
      %v740 = vld [vmem:[%s428 + $0x3c] sm:$0xf]
      %v741 = vld [vmem:[%s428 + $0x40] sm:$0xf]
      %v742 = vld [vmem:[%s428 + $0x44] sm:$0xf]
      %v743 = vld [vmem:[%s428 + $0x48] sm:$0xf]
      %v744 = vld [vmem:[%s428 + $0x4c] sm:$0xf]
      %v745 = vld [vmem:[%s428 + $0x50] sm:$0xf]
      %v746 = vld [vmem:[%s428 + $0x54] sm:$0xf]
      %v747 = vld [vmem:[%s428 + $0x58] sm:$0xf]
      %v748 = vld [vmem:[%s428 + $0x5c] sm:$0xf]
      %v749 = vld [vmem:[%s428 + $0x60] sm:$0xf]
      %v750 = vld [vmem:[%s428 + $0x64] sm:$0xf]
      %v751 = vld [vmem:[%s428 + $0x68] sm:$0xf]
      %v752 = vld [vmem:[%s428 + $0x6c] sm:$0xf]
      %v753 = vld [vmem:[%s428 + $0x70] sm:$0xf]
      %v754 = vld [vmem:[%s428 + $0x74] sm:$0xf]
      %v755 = vld [vmem:[%s428 + $0x78] sm:$0xf]
      %v756 = vld [vmem:[%s428 + $0x7c] sm:$0xf]
      %v757 = vld [vmem:[%s3] sm:$0xf]
      %v758 = vld [vmem:[%s3 + $0x4] sm:$0xf]
      %v759 = vld [vmem:[%s3 + $0x8] sm:$0xf]
      %v760 = vld [vmem:[%s3 + $0xc] sm:$0xf]
      %v761 = vld [vmem:[%s4] sm:$0x1]
      %v763 = vperm.slane %v761, 0
      %v797 = vunpack.c.l.b16 %v725
      %v798 = vunpack.c.l.b16 %v726
      %v799 = vunpack.c.l.b16 %v727
      %v800 = vunpack.c.l.b16 %v728
      %v801 = vunpack.c.l.b16 %v729
      %v802 = vunpack.c.l.b16 %v730
      %v803 = vunpack.c.l.b16 %v731
      %v804 = vunpack.c.l.b16 %v732
      %v805 = vunpack.c.l.b16 %v733
      %v806 = vunpack.c.l.b16 %v734
      %v807 = vunpack.c.l.b16 %v735
      %v808 = vunpack.c.l.b16 %v736
      %v809 = vunpack.c.l.b16 %v737
      %v810 = vunpack.c.l.b16 %v738
      %v811 = vunpack.c.l.b16 %v739
      %v812 = vunpack.c.l.b16 %v740
      %v813 = vunpack.c.l.b16 %v741
      %v814 = vunpack.c.l.b16 %v742
      %v815 = vunpack.c.l.b16 %v743
      %v816 = vunpack.c.l.b16 %v744
      %v817 = vunpack.c.l.b16 %v745
      %v818 = vunpack.c.l.b16 %v746
      %v819 = vunpack.c.l.b16 %v747
      %v820 = vunpack.c.l.b16 %v748
      %v821 = vunpack.c.l.b16 %v749
      %v822 = vunpack.c.l.b16 %v750
      %v823 = vunpack.c.l.b16 %v751
      %v824 = vunpack.c.l.b16 %v752
      %v825 = vunpack.c.l.b16 %v753
      %v826 = vunpack.c.l.b16 %v754
      %v827 = vunpack.c.l.b16 %v755
      %v828 = vunpack.c.l.b16 %v756
      %v829 = vpack.c.b16 %v798, %v797
      %v830 = vpack.c.b16 %v800, %v799
      %v831 = vpack.c.b16 %v802, %v801
      %v832 = vpack.c.b16 %v804, %v803
      %v833 = vpack.c.b16 %v806, %v805
      %v834 = vpack.c.b16 %v808, %v807
      %v835 = vpack.c.b16 %v810, %v809
      %v836 = vpack.c.b16 %v812, %v811
      %v837 = vpack.c.b16 %v814, %v813
      %v838 = vpack.c.b16 %v816, %v815
      %v839 = vpack.c.b16 %v818, %v817
      %v840 = vpack.c.b16 %v820, %v819
      %v841 = vpack.c.b16 %v822, %v821
      %v842 = vpack.c.b16 %v824, %v823
      %v843 = vpack.c.b16 %v826, %v825
      %v844 = vpack.c.b16 %v828, %v827
      %v849 = vunpack.c.l.b16 %v757
      %v850 = vunpack.c.l.b16 %v758
      %v851 = vunpack.c.l.b16 %v759
      %v852 = vunpack.c.l.b16 %v760
      %v853 = vpack.c.b16 %v850, %v849
      %v854 = vpack.c.b16 %v852, %v851
      %vm857 = vcmask 261120
      %v859 = vsel %vm857, %v829, 0
      %v862 = vsel %vm857, %v830, 0
      %v865 = vsel %vm857, %v831, 0
      %v868 = vsel %vm857, %v832, 0
      %v871 = vsel %vm857, %v833, 0
      %v874 = vsel %vm857, %v834, 0
      %v877 = vsel %vm857, %v835, 0
      %v880 = vsel %vm857, %v836, 0
      %v883 = vsel %vm857, %v837, 0
      %v886 = vsel %vm857, %v838, 0
      %v889 = vsel %vm857, %v839, 0
      %v892 = vsel %vm857, %v840, 0
      %v895 = vsel %vm857, %v841, 0
      %v898 = vsel %vm857, %v842, 0
      %v901 = vsel %vm857, %v843, 0
      %v904 = vsel %vm857, %v844, 0
      %906 = vmatpush.bf16.msra.mxu0 0
      %907 = vmatpush.bf16.msra.mxu0 0
      %908 = vmatpush.bf16.msra.mxu0 0
      %909 = vmatpush.bf16.msra.mxu0 0
      %910 = vmatpush.bf16.msra.mxu0 0
      %911 = vmatpush.bf16.msra.mxu0 0
      %912 = vmatpush.bf16.msra.mxu0 %v854
      %913 = vmatpush.bf16.msra.mxu0 %v853
      %914 = vmatmul.bf16.gmra.mxu0 %v859
      %v915 = vpop.f32.mrf.mxu0
      %v916 = vadd.f32 %v763, %v915
      %v917 = vpop.f32.mrf.mxu0
      %v918 = vadd.f32 %v763, %v917
      %919 = vmatmul.bf16.gmra.mxu0 %v862
      %v920 = vpop.f32.mrf.mxu0
      %v921 = vadd.f32 %v763, %v920
      %v922 = vpop.f32.mrf.mxu0
      %v923 = vadd.f32 %v763, %v922
      %924 = vmatmul.bf16.gmra.mxu0 %v865
      %v925 = vpop.f32.mrf.mxu0
      %v926 = vadd.f32 %v763, %v925
      %v927 = vpop.f32.mrf.mxu0
      %v928 = vadd.f32 %v763, %v927
      %929 = vmatmul.bf16.gmra.mxu0 %v868
      %v930 = vpop.f32.mrf.mxu0
      %v931 = vadd.f32 %v763, %v930
      %v932 = vpop.f32.mrf.mxu0
      %v933 = vadd.f32 %v763, %v932
      %934 = vmatmul.bf16.gmra.mxu0 %v871
      %v935 = vpop.f32.mrf.mxu0
      %v936 = vadd.f32 %v763, %v935
      %v937 = vpop.f32.mrf.mxu0
      %v938 = vadd.f32 %v763, %v937
      %939 = vmatmul.bf16.gmra.mxu0 %v874
      %v940 = vpop.f32.mrf.mxu0
      %v941 = vadd.f32 %v763, %v940
      %v942 = vpop.f32.mrf.mxu0
      %v943 = vadd.f32 %v763, %v942
      %944 = vmatmul.bf16.gmra.mxu0 %v877
      %v945 = vpop.f32.mrf.mxu0
      %v946 = vadd.f32 %v763, %v945
      %v947 = vpop.f32.mrf.mxu0
      %v948 = vadd.f32 %v763, %v947
      %949 = vmatmul.bf16.gmra.mxu0 %v880
      %v950 = vpop.f32.mrf.mxu0
      %v951 = vadd.f32 %v763, %v950
      %v952 = vpop.f32.mrf.mxu0
      %v953 = vadd.f32 %v763, %v952
      %954 = vmatmul.bf16.gmra.mxu0 %v883
      %v955 = vpop.f32.mrf.mxu0
      %v956 = vadd.f32 %v763, %v955
      %v957 = vpop.f32.mrf.mxu0
      %v958 = vadd.f32 %v763, %v957
      %959 = vmatmul.bf16.gmra.mxu0 %v886
      %v960 = vpop.f32.mrf.mxu0
      %v961 = vadd.f32 %v763, %v960
      %v962 = vpop.f32.mrf.mxu0
      %v963 = vadd.f32 %v763, %v962
      %964 = vmatmul.bf16.gmra.mxu0 %v889
      %v965 = vpop.f32.mrf.mxu0
      %v966 = vadd.f32 %v763, %v965
      %v967 = vpop.f32.mrf.mxu0
      %v968 = vadd.f32 %v763, %v967
      %969 = vmatmul.bf16.gmra.mxu0 %v892
      %v970 = vpop.f32.mrf.mxu0
      %v971 = vadd.f32 %v763, %v970
      %v972 = vpop.f32.mrf.mxu0
      %v973 = vadd.f32 %v763, %v972
      %974 = vmatmul.bf16.gmra.mxu0 %v895
      %v975 = vpop.f32.mrf.mxu0
      %v976 = vadd.f32 %v763, %v975
      %v977 = vpop.f32.mrf.mxu0
      %v978 = vadd.f32 %v763, %v977
      %979 = vmatmul.bf16.gmra.mxu0 %v898
      %v980 = vpop.f32.mrf.mxu0
      %v981 = vadd.f32 %v763, %v980
      %v982 = vpop.f32.mrf.mxu0
      %v983 = vadd.f32 %v763, %v982
      %984 = vmatmul.bf16.gmra.mxu0 %v901
      %v985 = vpop.f32.mrf.mxu0
      %v986 = vadd.f32 %v763, %v985
      %v987 = vpop.f32.mrf.mxu0
      %v988 = vadd.f32 %v763, %v987
      %989 = vmatmul.bf16.gmra.mxu0 %v904
      %v990 = vpop.f32.mrf.mxu0
      %v991 = vadd.f32 %v763, %v990
      %v992 = vpop.f32.mrf.mxu0
      %v993 = vadd.f32 %v763, %v992
      %994 = vdwg.mxu0
      %v995 = vmax.f32 %v916, 0.0
      %v996 = vmax.f32 %v918, 0.0
      %v997 = vmax.f32 %v921, 0.0
      %v998 = vmax.f32 %v923, 0.0
      %v999 = vmax.f32 %v926, 0.0
      %v1000 = vmax.f32 %v928, 0.0
      %v1001 = vmax.f32 %v931, 0.0
      %v1002 = vmax.f32 %v933, 0.0
      %v1003 = vmax.f32 %v936, 0.0
      %v1004 = vmax.f32 %v938, 0.0
      %v1005 = vmax.f32 %v941, 0.0
      %v1006 = vmax.f32 %v943, 0.0
      %v1007 = vmax.f32 %v946, 0.0
      %v1008 = vmax.f32 %v948, 0.0
      %v1009 = vmax.f32 %v951, 0.0
      %v1010 = vmax.f32 %v953, 0.0
      %v1011 = vmax.f32 %v956, 0.0
      %v1012 = vmax.f32 %v958, 0.0
      %v1013 = vmax.f32 %v961, 0.0
      %v1014 = vmax.f32 %v963, 0.0
      %v1015 = vmax.f32 %v966, 0.0
      %v1016 = vmax.f32 %v968, 0.0
      %v1017 = vmax.f32 %v971, 0.0
      %v1018 = vmax.f32 %v973, 0.0
      %v1019 = vmax.f32 %v976, 0.0
      %v1020 = vmax.f32 %v978, 0.0
      %v1021 = vmax.f32 %v981, 0.0
      %v1022 = vmax.f32 %v983, 0.0
      %v1023 = vmax.f32 %v986, 0.0
      %v1024 = vmax.f32 %v988, 0.0
      %v1025 = vmax.f32 %v991, 0.0
      %v1026 = vmax.f32 %v993, 0.0
      %v1027 = vpack.c.bf16 %v648, %v646
      %v1028 = vpack.c.bf16 %v653, %v651
      %v1029 = vpack.c.bf16 %v658, %v656
      %v1030 = vpack.c.bf16 %v663, %v661
      %v1031 = vpack.c.bf16 %v668, %v666
      %v1032 = vpack.c.bf16 %v673, %v671
      %v1033 = vpack.c.bf16 %v678, %v676
      %v1034 = vpack.c.bf16 %v683, %v681
      %v1035 = vpack.c.bf16 %v688, %v686
      %v1036 = vpack.c.bf16 %v693, %v691
      %v1037 = vpack.c.bf16 %v698, %v696
      %v1038 = vpack.c.bf16 %v703, %v701
      %v1039 = vpack.c.bf16 %v708, %v706
      %v1040 = vpack.c.bf16 %v713, %v711
      %v1041 = vpack.c.bf16 %v718, %v716
      %v1042 = vpack.c.bf16 %v723, %v721
      %v1043 = vld [vmem:[%s5] sm:$0xf]
      %v1044 = vld [vmem:[%s5 + $0x4] sm:$0xf]
      %v1045 = vld [vmem:[%s5 + $0x8] sm:$0xf]
      %v1046 = vld [vmem:[%s5 + $0xc] sm:$0xf]
      %v1047 = vpack.c.bf16 %v996, %v995
      %v1048 = vpack.c.bf16 %v998, %v997
      %v1049 = vpack.c.bf16 %v1000, %v999
      %v1050 = vpack.c.bf16 %v1002, %v1001
      %v1051 = vpack.c.bf16 %v1004, %v1003
      %v1052 = vpack.c.bf16 %v1006, %v1005
      %v1053 = vpack.c.bf16 %v1008, %v1007
      %v1054 = vpack.c.bf16 %v1010, %v1009
      %v1055 = vpack.c.bf16 %v1012, %v1011
      %v1056 = vpack.c.bf16 %v1014, %v1013
      %v1057 = vpack.c.bf16 %v1016, %v1015
      %v1058 = vpack.c.bf16 %v1018, %v1017
      %v1059 = vpack.c.bf16 %v1020, %v1019
      %v1060 = vpack.c.bf16 %v1022, %v1021
      %v1061 = vpack.c.bf16 %v1024, %v1023
      %v1062 = vpack.c.bf16 %v1026, %v1025
      %v1063 = vld [vmem:[%s6] sm:$0xf]
      %v1064 = vld [vmem:[%s6 + $0x4] sm:$0xf]
      %v1065 = vld [vmem:[%s6 + $0x8] sm:$0xf]
      %v1066 = vld [vmem:[%s6 + $0xc] sm:$0xf]
      %v1067 = vld [vmem:[%s6 + $0x10] sm:$0xf]
      %v1068 = vld [vmem:[%s6 + $0x14] sm:$0xf]
      %v1075 = vunpack.c.l.b16 %v1063
      %v1076 = vunpack.c.l.b16 %v1064
      %v1077 = vunpack.c.l.b16 %v1065
      %v1078 = vunpack.c.l.b16 %v1066
      %v1079 = vunpack.c.l.b16 %v1067
      %v1080 = vunpack.c.l.b16 %v1068
      %v1081 = vpack.c.b16 %v1076, %v1075
      %v1082 = vpack.c.b16 %v1078, %v1077
      %v1083 = vpack.c.b16 %v1080, %v1079
      %vm1087 = vcmask 392192
      %v1089 = vsel %vm1087, %v1047, 0
      %v1092 = vsel %vm1087, %v1048, 0
      %v1095 = vsel %vm1087, %v1049, 0
      %v1098 = vsel %vm1087, %v1050, 0
      %v1101 = vsel %vm1087, %v1051, 0
      %v1104 = vsel %vm1087, %v1052, 0
      %v1107 = vsel %vm1087, %v1053, 0
      %v1110 = vsel %vm1087, %v1054, 0
      %v1113 = vsel %vm1087, %v1055, 0
      %v1116 = vsel %vm1087, %v1056, 0
      %v1119 = vsel %vm1087, %v1057, 0
      %v1122 = vsel %vm1087, %v1058, 0
      %v1125 = vsel %vm1087, %v1059, 0
      %v1128 = vsel %vm1087, %v1060, 0
      %v1131 = vsel %vm1087, %v1061, 0
      %v1134 = vsel %vm1087, %v1062, 0
      %1136 = vmatpush.bf16.msra.mxu0 0
      %1137 = vmatpush.bf16.msra.mxu0 0
      %1138 = vmatpush.bf16.msra.mxu0 0
      %1139 = vmatpush.bf16.msra.mxu0 0
      %1140 = vmatpush.bf16.msra.mxu0 0
      %1141 = vmatpush.bf16.msra.mxu0 %v1083
      %1142 = vmatpush.bf16.msra.mxu0 %v1082
      %1143 = vmatpush.bf16.msra.mxu0 %v1081
      %1144 = vmatmul.bf16.gmra.mxu0 %v1089
      %v1145 = vpop.f32.mrf.mxu0
      %v1146 = vadd.f32 0.0, %v1145
      %v1147 = vpop.f32.mrf.mxu0
      %v1148 = vadd.f32 0.0, %v1147
      %1149 = vmatmul.bf16.gmra.mxu0 %v1092
      %v1150 = vpop.f32.mrf.mxu0
      %v1151 = vadd.f32 0.0, %v1150
      %v1152 = vpop.f32.mrf.mxu0
      %v1153 = vadd.f32 0.0, %v1152
      %1154 = vmatmul.bf16.gmra.mxu0 %v1095
      %v1155 = vpop.f32.mrf.mxu0
      %v1156 = vadd.f32 0.0, %v1155
      %v1157 = vpop.f32.mrf.mxu0
      %v1158 = vadd.f32 0.0, %v1157
      %1159 = vmatmul.bf16.gmra.mxu0 %v1098
      %v1160 = vpop.f32.mrf.mxu0
      %v1161 = vadd.f32 0.0, %v1160
      %v1162 = vpop.f32.mrf.mxu0
      %v1163 = vadd.f32 0.0, %v1162
      %1164 = vmatmul.bf16.gmra.mxu0 %v1101
      %v1165 = vpop.f32.mrf.mxu0
      %v1166 = vadd.f32 0.0, %v1165
      %v1167 = vpop.f32.mrf.mxu0
      %v1168 = vadd.f32 0.0, %v1167
      %1169 = vmatmul.bf16.gmra.mxu0 %v1104
      %v1170 = vpop.f32.mrf.mxu0
      %v1171 = vadd.f32 0.0, %v1170
      %v1172 = vpop.f32.mrf.mxu0
      %v1173 = vadd.f32 0.0, %v1172
      %1174 = vmatmul.bf16.gmra.mxu0 %v1107
      %v1175 = vpop.f32.mrf.mxu0
      %v1176 = vadd.f32 0.0, %v1175
      %v1177 = vpop.f32.mrf.mxu0
      %v1178 = vadd.f32 0.0, %v1177
      %1179 = vmatmul.bf16.gmra.mxu0 %v1110
      %v1180 = vpop.f32.mrf.mxu0
      %v1181 = vadd.f32 0.0, %v1180
      %v1182 = vpop.f32.mrf.mxu0
      %v1183 = vadd.f32 0.0, %v1182
      %1184 = vmatmul.bf16.gmra.mxu0 %v1113
      %v1185 = vpop.f32.mrf.mxu0
      %v1186 = vadd.f32 0.0, %v1185
      %v1187 = vpop.f32.mrf.mxu0
      %v1188 = vadd.f32 0.0, %v1187
      %1189 = vmatmul.bf16.gmra.mxu0 %v1116
      %v1190 = vpop.f32.mrf.mxu0
      %v1191 = vadd.f32 0.0, %v1190
      %v1192 = vpop.f32.mrf.mxu0
      %v1193 = vadd.f32 0.0, %v1192
      %1194 = vmatmul.bf16.gmra.mxu0 %v1119
      %v1195 = vpop.f32.mrf.mxu0
      %v1196 = vadd.f32 0.0, %v1195
      %v1197 = vpop.f32.mrf.mxu0
      %v1198 = vadd.f32 0.0, %v1197
      %1199 = vmatmul.bf16.gmra.mxu0 %v1122
      %v1200 = vpop.f32.mrf.mxu0
      %v1201 = vadd.f32 0.0, %v1200
      %v1202 = vpop.f32.mrf.mxu0
      %v1203 = vadd.f32 0.0, %v1202
      %1204 = vmatmul.bf16.gmra.mxu0 %v1125
      %v1205 = vpop.f32.mrf.mxu0
      %v1206 = vadd.f32 0.0, %v1205
      %v1207 = vpop.f32.mrf.mxu0
      %v1208 = vadd.f32 0.0, %v1207
      %1209 = vmatmul.bf16.gmra.mxu0 %v1128
      %v1210 = vpop.f32.mrf.mxu0
      %v1211 = vadd.f32 0.0, %v1210
      %v1212 = vpop.f32.mrf.mxu0
      %v1213 = vadd.f32 0.0, %v1212
      %1214 = vmatmul.bf16.gmra.mxu0 %v1131
      %v1215 = vpop.f32.mrf.mxu0
      %v1216 = vadd.f32 0.0, %v1215
      %v1217 = vpop.f32.mrf.mxu0
      %v1218 = vadd.f32 0.0, %v1217
      %1219 = vmatmul.bf16.gmra.mxu0 %v1134
      %v1220 = vpop.f32.mrf.mxu0
      %v1221 = vadd.f32 0.0, %v1220
      %v1222 = vpop.f32.mrf.mxu0
      %v1223 = vadd.f32 0.0, %v1222
      %1224 = vdwg.mxu0
      %v1229 = vunpack.c.l.b16 %v1043
      %v1230 = vunpack.c.l.b16 %v1044
      %v1231 = vunpack.c.l.b16 %v1045
      %v1232 = vunpack.c.l.b16 %v1046
      %v1233 = vpack.c.b16 %v1230, %v1229
      %v1234 = vpack.c.b16 %v1232, %v1231
      %v1238 = vsel %vm857, %v1027, 0
      %v1241 = vsel %vm857, %v1028, 0
      %v1244 = vsel %vm857, %v1029, 0
      %v1247 = vsel %vm857, %v1030, 0
      %v1250 = vsel %vm857, %v1031, 0
      %v1253 = vsel %vm857, %v1032, 0
      %v1256 = vsel %vm857, %v1033, 0
      %v1259 = vsel %vm857, %v1034, 0
      %v1262 = vsel %vm857, %v1035, 0
      %v1265 = vsel %vm857, %v1036, 0
      %v1268 = vsel %vm857, %v1037, 0
      %v1271 = vsel %vm857, %v1038, 0
      %v1274 = vsel %vm857, %v1039, 0
      %v1277 = vsel %vm857, %v1040, 0
      %v1280 = vsel %vm857, %v1041, 0
      %v1283 = vsel %vm857, %v1042, 0
      %1285 = vmatpush.bf16.msra.mxu0 0
      %1286 = vmatpush.bf16.msra.mxu0 0
      %1287 = vmatpush.bf16.msra.mxu0 0
      %1288 = vmatpush.bf16.msra.mxu0 0
      %1289 = vmatpush.bf16.msra.mxu0 0
      %1290 = vmatpush.bf16.msra.mxu0 0
      %1291 = vmatpush.bf16.msra.mxu0 %v1234
      %1292 = vmatpush.bf16.msra.mxu0 %v1233
      %1293 = vmatmul.bf16.gmra.mxu0 %v1238
      %v1294 = vpop.f32.mrf.mxu0
      %v1295 = vadd.f32 %v1146, %v1294
      %v1296 = vpop.f32.mrf.mxu0
      %v1297 = vadd.f32 %v1148, %v1296
      %1298 = vmatmul.bf16.gmra.mxu0 %v1241
      %v1299 = vpop.f32.mrf.mxu0
      %v1300 = vadd.f32 %v1151, %v1299
      %v1301 = vpop.f32.mrf.mxu0
      %v1302 = vadd.f32 %v1153, %v1301
      %1303 = vmatmul.bf16.gmra.mxu0 %v1244
      %v1304 = vpop.f32.mrf.mxu0
      %v1305 = vadd.f32 %v1156, %v1304
      %v1306 = vpop.f32.mrf.mxu0
      %v1307 = vadd.f32 %v1158, %v1306
      %1308 = vmatmul.bf16.gmra.mxu0 %v1247
      %v1309 = vpop.f32.mrf.mxu0
      %v1310 = vadd.f32 %v1161, %v1309
      %v1311 = vpop.f32.mrf.mxu0
      %v1312 = vadd.f32 %v1163, %v1311
      %1313 = vmatmul.bf16.gmra.mxu0 %v1250
      %v1314 = vpop.f32.mrf.mxu0
      %v1315 = vadd.f32 %v1166, %v1314
      %v1316 = vpop.f32.mrf.mxu0
      %v1317 = vadd.f32 %v1168, %v1316
      %1318 = vmatmul.bf16.gmra.mxu0 %v1253
      %v1319 = vpop.f32.mrf.mxu0
      %v1320 = vadd.f32 %v1171, %v1319
      %v1321 = vpop.f32.mrf.mxu0
      %v1322 = vadd.f32 %v1173, %v1321
      %1323 = vmatmul.bf16.gmra.mxu0 %v1256
      %v1324 = vpop.f32.mrf.mxu0
      %v1325 = vadd.f32 %v1176, %v1324
      %v1326 = vpop.f32.mrf.mxu0
      %v1327 = vadd.f32 %v1178, %v1326
      %1328 = vmatmul.bf16.gmra.mxu0 %v1259
      %v1329 = vpop.f32.mrf.mxu0
      %v1330 = vadd.f32 %v1181, %v1329
      %v1331 = vpop.f32.mrf.mxu0
      %v1332 = vadd.f32 %v1183, %v1331
      %1333 = vmatmul.bf16.gmra.mxu0 %v1262
      %v1334 = vpop.f32.mrf.mxu0
      %v1335 = vadd.f32 %v1186, %v1334
      %v1336 = vpop.f32.mrf.mxu0
      %v1337 = vadd.f32 %v1188, %v1336
      %1338 = vmatmul.bf16.gmra.mxu0 %v1265
      %v1339 = vpop.f32.mrf.mxu0
      %v1340 = vadd.f32 %v1191, %v1339
      %v1341 = vpop.f32.mrf.mxu0
      %v1342 = vadd.f32 %v1193, %v1341
      %1343 = vmatmul.bf16.gmra.mxu0 %v1268
      %v1344 = vpop.f32.mrf.mxu0
      %v1345 = vadd.f32 %v1196, %v1344
      %v1346 = vpop.f32.mrf.mxu0
      %v1347 = vadd.f32 %v1198, %v1346
      %1348 = vmatmul.bf16.gmra.mxu0 %v1271
      %v1349 = vpop.f32.mrf.mxu0
      %v1350 = vadd.f32 %v1201, %v1349
      %v1351 = vpop.f32.mrf.mxu0
      %v1352 = vadd.f32 %v1203, %v1351
      %1353 = vmatmul.bf16.gmra.mxu0 %v1274
      %v1354 = vpop.f32.mrf.mxu0
      %v1355 = vadd.f32 %v1206, %v1354
      %v1356 = vpop.f32.mrf.mxu0
      %v1357 = vadd.f32 %v1208, %v1356
      %1358 = vmatmul.bf16.gmra.mxu0 %v1277
      %v1359 = vpop.f32.mrf.mxu0
      %v1360 = vadd.f32 %v1211, %v1359
      %v1361 = vpop.f32.mrf.mxu0
      %v1362 = vadd.f32 %v1213, %v1361
      %1363 = vmatmul.bf16.gmra.mxu0 %v1280
      %v1364 = vpop.f32.mrf.mxu0
      %v1365 = vadd.f32 %v1216, %v1364
      %v1366 = vpop.f32.mrf.mxu0
      %v1367 = vadd.f32 %v1218, %v1366
      %1368 = vmatmul.bf16.gmra.mxu0 %v1283
      %v1369 = vpop.f32.mrf.mxu0
      %v1370 = vadd.f32 %v1221, %v1369
      %v1371 = vpop.f32.mrf.mxu0
      %v1372 = vadd.f32 %v1223, %v1371
      %1373 = vdwg.mxu0
      %v1374 = vld [vmem:[%s7] sm:$0x1]
      %v1376 = vperm.slane %v1374, 0
      %v1378 = vadd.f32 %v1295, %v1376
      %v1379 = vadd.f32 %v1297, %v1376
      %v1380 = vadd.f32 %v1300, %v1376
      %v1381 = vadd.f32 %v1302, %v1376
      %v1382 = vadd.f32 %v1305, %v1376
      %v1383 = vadd.f32 %v1307, %v1376
      %v1384 = vadd.f32 %v1310, %v1376
      %v1385 = vadd.f32 %v1312, %v1376
      %v1386 = vadd.f32 %v1315, %v1376
      %v1387 = vadd.f32 %v1317, %v1376
      %v1388 = vadd.f32 %v1320, %v1376
      %v1389 = vadd.f32 %v1322, %v1376
      %v1390 = vadd.f32 %v1325, %v1376
      %v1391 = vadd.f32 %v1327, %v1376
      %v1392 = vadd.f32 %v1330, %v1376
      %v1393 = vadd.f32 %v1332, %v1376
      %v1394 = vadd.f32 %v1335, %v1376
      %v1395 = vadd.f32 %v1337, %v1376
      %v1396 = vadd.f32 %v1340, %v1376
      %v1397 = vadd.f32 %v1342, %v1376
      %v1398 = vadd.f32 %v1345, %v1376
      %v1399 = vadd.f32 %v1347, %v1376
      %v1400 = vadd.f32 %v1350, %v1376
      %v1401 = vadd.f32 %v1352, %v1376
      %v1402 = vadd.f32 %v1355, %v1376
      %v1403 = vadd.f32 %v1357, %v1376
      %v1404 = vadd.f32 %v1360, %v1376
      %v1405 = vadd.f32 %v1362, %v1376
      %v1406 = vadd.f32 %v1365, %v1376
      %v1407 = vadd.f32 %v1367, %v1376
      %v1408 = vadd.f32 %v1370, %v1376
      %v1409 = vadd.f32 %v1372, %v1376
      %v1410 = vmax.f32 %v1378, 0.0
      %v1411 = vmax.f32 %v1379, 0.0
      %v1412 = vmax.f32 %v1380, 0.0
      %v1413 = vmax.f32 %v1381, 0.0
      %v1414 = vmax.f32 %v1382, 0.0
      %v1415 = vmax.f32 %v1383, 0.0
      %v1416 = vmax.f32 %v1384, 0.0
      %v1417 = vmax.f32 %v1385, 0.0
      %v1418 = vmax.f32 %v1386, 0.0
      %v1419 = vmax.f32 %v1387, 0.0
      %v1420 = vmax.f32 %v1388, 0.0
      %v1421 = vmax.f32 %v1389, 0.0
      %v1422 = vmax.f32 %v1390, 0.0
      %v1423 = vmax.f32 %v1391, 0.0
      %v1424 = vmax.f32 %v1392, 0.0
      %v1425 = vmax.f32 %v1393, 0.0
      %v1426 = vmax.f32 %v1394, 0.0
      %v1427 = vmax.f32 %v1395, 0.0
      %v1428 = vmax.f32 %v1396, 0.0
      %v1429 = vmax.f32 %v1397, 0.0
      %v1430 = vmax.f32 %v1398, 0.0
      %v1431 = vmax.f32 %v1399, 0.0
      %v1432 = vmax.f32 %v1400, 0.0
      %v1433 = vmax.f32 %v1401, 0.0
      %v1434 = vmax.f32 %v1402, 0.0
      %v1435 = vmax.f32 %v1403, 0.0
      %v1436 = vmax.f32 %v1404, 0.0
      %v1437 = vmax.f32 %v1405, 0.0
      %v1438 = vmax.f32 %v1406, 0.0
      %v1439 = vmax.f32 %v1407, 0.0
      %v1440 = vmax.f32 %v1408, 0.0
      %v1441 = vmax.f32 %v1409, 0.0
      %v1442 = vpack.c.bf16 %v1411, %v1410
      %v1443 = vpack.c.bf16 %v1413, %v1412
      %v1444 = vpack.c.bf16 %v1415, %v1414
      %v1445 = vpack.c.bf16 %v1417, %v1416
      %v1446 = vpack.c.bf16 %v1419, %v1418
      %v1447 = vpack.c.bf16 %v1421, %v1420
      %v1448 = vpack.c.bf16 %v1423, %v1422
      %v1449 = vpack.c.bf16 %v1425, %v1424
      %v1450 = vpack.c.bf16 %v1427, %v1426
      %v1451 = vpack.c.bf16 %v1429, %v1428
      %v1452 = vpack.c.bf16 %v1431, %v1430
      %v1453 = vpack.c.bf16 %v1433, %v1432
      %v1454 = vpack.c.bf16 %v1435, %v1434
      %v1455 = vpack.c.bf16 %v1437, %v1436
      %v1456 = vpack.c.bf16 %v1439, %v1438
      %v1457 = vpack.c.bf16 %v1441, %v1440
      %v1458 = vld [vmem:[%s8] sm:$0xf]
      %v1459 = vld [vmem:[%s8 + $0x4] sm:$0xf]
      %v1460 = vld [vmem:[%s8 + $0x8] sm:$0xf]
      %v1461 = vld [vmem:[%s8 + $0xc] sm:$0xf]
      %v1462 = vld [vmem:[%s9] sm:$0x1]
      %v1464 = vperm.slane %v1462, 0
      %v1470 = vunpack.c.l.b16 %v1458
      %v1471 = vunpack.c.l.b16 %v1459
      %v1472 = vunpack.c.l.b16 %v1460
      %v1473 = vunpack.c.l.b16 %v1461
      %v1474 = vpack.c.b16 %v1471, %v1470
      %v1475 = vpack.c.b16 %v1473, %v1472
      %v1479 = vsel %vm857, %v1442, 0
      %v1482 = vsel %vm857, %v1443, 0
      %v1485 = vsel %vm857, %v1444, 0
      %v1488 = vsel %vm857, %v1445, 0
      %v1491 = vsel %vm857, %v1446, 0
      %v1494 = vsel %vm857, %v1447, 0
      %v1497 = vsel %vm857, %v1448, 0
      %v1500 = vsel %vm857, %v1449, 0
      %v1503 = vsel %vm857, %v1450, 0
      %v1506 = vsel %vm857, %v1451, 0
      %v1509 = vsel %vm857, %v1452, 0
      %v1512 = vsel %vm857, %v1453, 0
      %v1515 = vsel %vm857, %v1454, 0
      %v1518 = vsel %vm857, %v1455, 0
      %v1521 = vsel %vm857, %v1456, 0
      %v1524 = vsel %vm857, %v1457, 0
      %1526 = vmatpush.bf16.msra.mxu0 0
      %1527 = vmatpush.bf16.msra.mxu0 0
      %1528 = vmatpush.bf16.msra.mxu0 0
      %1529 = vmatpush.bf16.msra.mxu0 0
      %1530 = vmatpush.bf16.msra.mxu0 0
      %1531 = vmatpush.bf16.msra.mxu0 0
      %1532 = vmatpush.bf16.msra.mxu0 %v1475
      %1533 = vmatpush.bf16.msra.mxu0 %v1474
      %1534 = vmatmul.bf16.gmra.mxu0 %v1479
      %v1535 = vpop.f32.mrf.mxu0
      %v1536 = vadd.f32 %v1464, %v1535
      %v1537 = vpop.f32.mrf.mxu0
      %v1538 = vadd.f32 %v1464, %v1537
      %1539 = vmatmul.bf16.gmra.mxu0 %v1482
      %v1540 = vpop.f32.mrf.mxu0
      %v1541 = vadd.f32 %v1464, %v1540
      %v1542 = vpop.f32.mrf.mxu0
      %v1543 = vadd.f32 %v1464, %v1542
      %1544 = vmatmul.bf16.gmra.mxu0 %v1485
      %v1545 = vpop.f32.mrf.mxu0
      %v1546 = vadd.f32 %v1464, %v1545
      %v1547 = vpop.f32.mrf.mxu0
      %v1548 = vadd.f32 %v1464, %v1547
      %1549 = vmatmul.bf16.gmra.mxu0 %v1488
      %v1550 = vpop.f32.mrf.mxu0
      %v1551 = vadd.f32 %v1464, %v1550
      %v1552 = vpop.f32.mrf.mxu0
      %v1553 = vadd.f32 %v1464, %v1552
      %1554 = vmatmul.bf16.gmra.mxu0 %v1491
      %v1555 = vpop.f32.mrf.mxu0
      %v1556 = vadd.f32 %v1464, %v1555
      %v1557 = vpop.f32.mrf.mxu0
      %v1558 = vadd.f32 %v1464, %v1557
      %1559 = vmatmul.bf16.gmra.mxu0 %v1494
      %v1560 = vpop.f32.mrf.mxu0
      %v1561 = vadd.f32 %v1464, %v1560
      %v1562 = vpop.f32.mrf.mxu0
      %v1563 = vadd.f32 %v1464, %v1562
      %1564 = vmatmul.bf16.gmra.mxu0 %v1497
      %v1565 = vpop.f32.mrf.mxu0
      %v1566 = vadd.f32 %v1464, %v1565
      %v1567 = vpop.f32.mrf.mxu0
      %v1568 = vadd.f32 %v1464, %v1567
      %1569 = vmatmul.bf16.gmra.mxu0 %v1500
      %v1570 = vpop.f32.mrf.mxu0
      %v1571 = vadd.f32 %v1464, %v1570
      %v1572 = vpop.f32.mrf.mxu0
      %v1573 = vadd.f32 %v1464, %v1572
      %1574 = vmatmul.bf16.gmra.mxu0 %v1503
      %v1575 = vpop.f32.mrf.mxu0
      %v1576 = vadd.f32 %v1464, %v1575
      %v1577 = vpop.f32.mrf.mxu0
      %v1578 = vadd.f32 %v1464, %v1577
      %1579 = vmatmul.bf16.gmra.mxu0 %v1506
      %v1580 = vpop.f32.mrf.mxu0
      %v1581 = vadd.f32 %v1464, %v1580
      %v1582 = vpop.f32.mrf.mxu0
      %v1583 = vadd.f32 %v1464, %v1582
      %1584 = vmatmul.bf16.gmra.mxu0 %v1509
      %v1585 = vpop.f32.mrf.mxu0
      %v1586 = vadd.f32 %v1464, %v1585
      %v1587 = vpop.f32.mrf.mxu0
      %v1588 = vadd.f32 %v1464, %v1587
      %1589 = vmatmul.bf16.gmra.mxu0 %v1512
      %v1590 = vpop.f32.mrf.mxu0
      %v1591 = vadd.f32 %v1464, %v1590
      %v1592 = vpop.f32.mrf.mxu0
      %v1593 = vadd.f32 %v1464, %v1592
      %1594 = vmatmul.bf16.gmra.mxu0 %v1515
      %v1595 = vpop.f32.mrf.mxu0
      %v1596 = vadd.f32 %v1464, %v1595
      %v1597 = vpop.f32.mrf.mxu0
      %v1598 = vadd.f32 %v1464, %v1597
      %1599 = vmatmul.bf16.gmra.mxu0 %v1518
      %v1600 = vpop.f32.mrf.mxu0
      %v1601 = vadd.f32 %v1464, %v1600
      %v1602 = vpop.f32.mrf.mxu0
      %v1603 = vadd.f32 %v1464, %v1602
      %1604 = vmatmul.bf16.gmra.mxu0 %v1521
      %v1605 = vpop.f32.mrf.mxu0
      %v1606 = vadd.f32 %v1464, %v1605
      %v1607 = vpop.f32.mrf.mxu0
      %v1608 = vadd.f32 %v1464, %v1607
      %1609 = vmatmul.bf16.gmra.mxu0 %v1524
      %v1610 = vpop.f32.mrf.mxu0
      %v1611 = vadd.f32 %v1464, %v1610
      %v1612 = vpop.f32.mrf.mxu0
      %v1613 = vadd.f32 %v1464, %v1612
      %1614 = vdwg.mxu0
      %v1615 = vmax.f32 %v1536, 0.0
      %v1616 = vmax.f32 %v1538, 0.0
      %v1617 = vmax.f32 %v1541, 0.0
      %v1618 = vmax.f32 %v1543, 0.0
      %v1619 = vmax.f32 %v1546, 0.0
      %v1620 = vmax.f32 %v1548, 0.0
      %v1621 = vmax.f32 %v1551, 0.0
      %v1622 = vmax.f32 %v1553, 0.0
      %v1623 = vmax.f32 %v1556, 0.0
      %v1624 = vmax.f32 %v1558, 0.0
      %v1625 = vmax.f32 %v1561, 0.0
      %v1626 = vmax.f32 %v1563, 0.0
      %v1627 = vmax.f32 %v1566, 0.0
      %v1628 = vmax.f32 %v1568, 0.0
      %v1629 = vmax.f32 %v1571, 0.0
      %v1630 = vmax.f32 %v1573, 0.0
      %v1631 = vmax.f32 %v1576, 0.0
      %v1632 = vmax.f32 %v1578, 0.0
      %v1633 = vmax.f32 %v1581, 0.0
      %v1634 = vmax.f32 %v1583, 0.0
      %v1635 = vmax.f32 %v1586, 0.0
      %v1636 = vmax.f32 %v1588, 0.0
      %v1637 = vmax.f32 %v1591, 0.0
      %v1638 = vmax.f32 %v1593, 0.0
      %v1639 = vmax.f32 %v1596, 0.0
      %v1640 = vmax.f32 %v1598, 0.0
      %v1641 = vmax.f32 %v1601, 0.0
      %v1642 = vmax.f32 %v1603, 0.0
      %v1643 = vmax.f32 %v1606, 0.0
      %v1644 = vmax.f32 %v1608, 0.0
      %v1645 = vmax.f32 %v1611, 0.0
      %v1646 = vmax.f32 %v1613, 0.0
      %v1647 = vld [vmem:[%s10] sm:$0x7f]
      %v1648 = vld [vmem:[%s11] sm:$0x7f]
      %1650 = vset.pattern.permute.xlu0 0
      %1651 = vperm.xlu0 %1650, %v1648
      %v1652 = vpop.permute.xlu0 %1651
      %v1655 = vsel %vm857, %v1647, 0
      %v1658 = vsel %vm857, %v1615, 0
      %v1661 = vsel %vm857, %v1616, 0
      %v1664 = vsel %vm857, %v1617, 0
      %v1667 = vsel %vm857, %v1618, 0
      %v1670 = vsel %vm857, %v1619, 0
      %v1673 = vsel %vm857, %v1620, 0
      %v1676 = vsel %vm857, %v1621, 0
      %v1679 = vsel %vm857, %v1622, 0
      %v1682 = vsel %vm857, %v1623, 0
      %v1685 = vsel %vm857, %v1624, 0
      %v1688 = vsel %vm857, %v1625, 0
      %v1691 = vsel %vm857, %v1626, 0
      %v1694 = vsel %vm857, %v1627, 0
      %v1697 = vsel %vm857, %v1628, 0
      %v1700 = vsel %vm857, %v1629, 0
      %v1703 = vsel %vm857, %v1630, 0
      %v1706 = vsel %vm857, %v1631, 0
      %v1709 = vsel %vm857, %v1632, 0
      %v1712 = vsel %vm857, %v1633, 0
      %v1715 = vsel %vm857, %v1634, 0
      %v1718 = vsel %vm857, %v1635, 0
      %v1721 = vsel %vm857, %v1636, 0
      %v1724 = vsel %vm857, %v1637, 0
      %v1727 = vsel %vm857, %v1638, 0
      %v1730 = vsel %vm857, %v1639, 0
      %v1733 = vsel %vm857, %v1640, 0
      %v1736 = vsel %vm857, %v1641, 0
      %v1739 = vsel %vm857, %v1642, 0
      %v1742 = vsel %vm857, %v1643, 0
      %v1745 = vsel %vm857, %v1644, 0
      %v1748 = vsel %vm857, %v1645, 0
      %v1751 = vsel %vm857, %v1646, 0
      %1753 = vmatpush.xpose.msra.mxu0 %v1703
      %1754 = vmatpush.xpose.msra.mxu0 %v1700
      %1755 = vmatpush.xpose.msra.mxu0 %v1697
      %1756 = vmatpush.xpose.msra.mxu0 %v1694
      %1757 = vmatpush.xpose.msra.mxu0 %v1691
      %1758 = vmatpush.xpose.msra.mxu0 %v1688
      %1759 = vmatpush.xpose.msra.mxu0 %v1685
      %1760 = vmatpush.xpose.msra.mxu0 %v1682
      %1761 = vmatpush.xpose.msra.mxu0 %v1679
      %1762 = vmatpush.xpose.msra.mxu0 %v1676
      %1763 = vmatpush.xpose.msra.mxu0 %v1673
      %1764 = vmatpush.xpose.msra.mxu0 %v1670
      %1765 = vmatpush.xpose.msra.mxu0 %v1667
      %1766 = vmatpush.xpose.msra.mxu0 %v1664
      %1767 = vmatpush.xpose.msra.mxu0 %v1661
      %1768 = vmatpush.xpose.msra.mxu0 %v1658
      %1769 = vmatmul.f32.gmra.mxu0 %v1655
      %v1770 = vpop.f32.mrf.mxu0
      %v1771 = vadd.f32 %v1652, %v1770
      %1772 = vdwg.mxu0
      %1773 = vmatpush.xpose.msra.mxu0 %v1751
      %1774 = vmatpush.xpose.msra.mxu0 %v1748
      %1775 = vmatpush.xpose.msra.mxu0 %v1745
      %1776 = vmatpush.xpose.msra.mxu0 %v1742
      %1777 = vmatpush.xpose.msra.mxu0 %v1739
      %1778 = vmatpush.xpose.msra.mxu0 %v1736
      %1779 = vmatpush.xpose.msra.mxu0 %v1733
      %1780 = vmatpush.xpose.msra.mxu0 %v1730
      %1781 = vmatpush.xpose.msra.mxu0 %v1727
      %1782 = vmatpush.xpose.msra.mxu0 %v1724
      %1783 = vmatpush.xpose.msra.mxu0 %v1721
      %1784 = vmatpush.xpose.msra.mxu0 %v1718
      %1785 = vmatpush.xpose.msra.mxu0 %v1715
      %1786 = vmatpush.xpose.msra.mxu0 %v1712
      %1787 = vmatpush.xpose.msra.mxu0 %v1709
      %1788 = vmatpush.xpose.msra.mxu0 %v1706
      %1789 = vmatmul.f32.gmra.mxu0 %v1655
      %v1790 = vpop.f32.mrf.mxu0
      %v1791 = vadd.f32 %v1652, %v1790
      %1792 = vdwg.mxu0
      %1793 = vst [vmem:[%s433] sm:$0x7f] %v1771
      %1794 = vst [vmem:[%s433 + $0x8] sm:$0x7f] %v1791
      %p1795 = scmp.lt.s32.totalorder %s23, 1
      %s1796 = scalar_select %p1795, %s23, 1
      %s1797 = smul.addr %s1796, 2
      %s1798 = smul.addr %s1797, 8
      %s1799 = scalar_lea.vmem %s12, %s1798
      // Predicated region
      $region69: #{final_classifier_forward.3} parent=67 // pred_check
        %p1800 = pneg %p303
      $region70: #{final_classifier_forward.3} parent=67 // pred_check_branch
        %1802 = sbr.rel (%p1800) target = $region72
      $region71: #{final_classifier_forward.3} parent=67 // pred_region
        _
      $region72: #{final_classifier_forward.3} parent=67 // pred_fallthru
        _
    $region68: #{final_classifier_forward.3} parent=5 // pred_fallthru
      _
    %p1803 = scmp.le.s32.totalorder 2, %s18
    // Predicated region
    $region73: #{final_classifier_forward.3} parent=5 // pred_check
      %p1804 = pneg %p1803
    $region74: #{final_classifier_forward.3} parent=5 // pred_check_branch
      %1806 = sbr.rel (%p1804) target = $region76
    $region75: #{final_classifier_forward.3} parent=5 // pred_region
      %s1807 = ssub.s32 %s18, 2
      // Predicated region
      $region77: #{final_classifier_forward.3} parent=75 // pred_check
        %p1808 = pneg %p309
      $region78: #{final_classifier_forward.3} parent=75 // pred_check_branch
        %1810 = sbr.rel (%p1808) target = $region80
      $region79: #{final_classifier_forward.3} parent=75 // pred_region
        %p1811 = scmp.lt.s32.totalorder %s24, 1
        %s1812 = scalar_select %p1811, %s24, 1
        %s1813 = smul.addr %s1812, 2
        %s1814 = smul.addr %s1813, 8
        %s1815 = scalar_lea.vmem %s12, %s1814
      $region80: #{final_classifier_forward.3} parent=75 // pred_fallthru
        _
    $region76: #{final_classifier_forward.3} parent=5 // pred_fallthru
      _
  $region6: #{final_classifier_forward.3} parent=0 // loop_footer
    %s22 = sadd.s32 1, %s18
  $region7: #{final_classifier_forward.3} parent=0 // loop_footer_branch
    %17 = sbr.rel target = $region3
  $region8: #{final_classifier_forward.3} parent=0 // loop_exit
    _

// kernel: final_classifier_forward.2
$region0: #{final_classifier_forward.2}
  #allocation0 [shape = 'u32[]', space=smem, size = 0x4, offset = 0x4, fixed_abs, tag = 'smem constant byte address 0x4 - core index']
  #allocation1 [shape = 'u32[72,128]{1,0:T(1,128)}', space=vmem, size = 0x9000, scoped, tag = 'internal scratch']
  #allocation2 [shape = 'f32[110,32]{1,0:T(8,128)}', space=vmem, size = 0xe000, scoped, tag = 'scratch operand']
  %s0 = inlined_call_operand.vmem [shape: f32[2,110,176], index: 0, kind: input, shape index: {}]
  %s1 = inlined_call_operand.vmem [shape: bf16[9,176,32], index: 1, kind: input, shape index: {}]
  %s2 = inlined_call_operand.vmem [shape: f32[1,32], index: 2, kind: input, shape index: {}]
  %s3 = inlined_call_operand.vmem [shape: bf16[9,32,32], index: 3, kind: input, shape index: {}]
  %s4 = inlined_call_operand.vmem [shape: f32[1,32], index: 4, kind: input, shape index: {}]
  %s5 = inlined_call_operand.vmem [shape: f32[5,176], index: 5, kind: input, shape index: {}]
  %s6 = inlined_call_operand.vmem [shape: f32[5,1], index: 6, kind: input, shape index: {}]
  %s7 = inlined_call_operand.vmem [shape: bf16[2,80,32], index: 7, kind: output, shape index: {0}]
  %s8 = inlined_call_operand.vmem [shape: f32[2,5,80], index: 8, kind: output, shape index: {1}]
  %9 = xla_tuple %s7, %s8
  %s10 = sld [smem:[#allocation0]]
  $region69: #{final_classifier_forward.2} parent=0
    _
  %s12 = ssub.s32 1, %s10
  %s13 = scalar_select 0, %s12, %s10
  loop: start=0, step=1, limit=4
  $region2: #{final_classifier_forward.2} parent=0 // loop_pre_header
    _
  $region3: #{final_classifier_forward.2} parent=0 // loop_header
    %s15 = sphi 0, %s19
    %p16 = scmp.ge.s32.totalorder %s15, 4
    %s25 = sphi 0, %s27
    %s28 = sphi 0, %s25
    %s29 = sphi 0, %s28
    %s45 = sphi 0, %s29
    %s49 = sphi 0, %s49
    %s51 = sphi 0, %s49
    %s52 = sphi 0, %s51
    %s66 = sphi 0, %s52
    %s70 = sphi 0, %s70
    %s72 = sphi 0, %s70
    %s73 = sphi 0, %s72
    %s87 = sphi 0, %s73
    %s91 = sphi 0, %s91
    %s93 = sphi 0, %s91
    %s94 = sphi 0, %s93
    %s108 = sphi 0, %s94
    %s112 = sphi 0, %s112
    %s114 = sphi 0, %s112
    %s115 = sphi 0, %s114
    %s129 = sphi 0, %s115
    %s133 = sphi 0, %s133
    %s135 = sphi 0, %s133
    %s136 = sphi 0, %s135
    %s150 = sphi 0, %s136
    %s154 = sphi 0, %s154
    %s156 = sphi 0, %s154
    %s157 = sphi 0, %s156
    %s171 = sphi 0, %s157
    %s177 = sphi 0, %s179
    %s180 = sphi 0, %s177
    %s181 = sphi 0, %s180
    %s197 = sphi 0, %s181
    %s203 = sphi 0, %s205
    %s206 = sphi 0, %s203
    %s207 = sphi 0, %s206
    %s223 = sphi 0, %s207
  $region4: #{final_classifier_forward.2} parent=0 // loop_header_branch
    %18 = sbr.rel (%p16) target = $region8
  $region5: #{final_classifier_forward.2} parent=0 // loop_body
    %s20 = ssub.s32 %s15, 1
    %s21 = ssub.s32 %s15, 2
    %s22 = sadd.s32 %s15, 1
    %s23 = ssub.s32 %s15, %s22
    %p24 = scmp.eq.s32.totalorder %s23, 0
    %s26 = sadd.s32 %s25, 1
    %s27 = scalar_select %p24, %s25, %s26
    %p30 = pneg %p24
    %p31 = scmp.eq.s32.totalorder %s15, 1
    %p32 = por %p30, %p31
    %p33 = scmp.ne.s32.totalorder %s25, %s28
    %p34 = scmp.eq.s32.totalorder %s15, 0
    %p35 = por %p33, %p34
    %p36 = scmp.ne.s32.totalorder %s25, %s28
    %p37 = scmp.eq.s32.totalorder %s20, 1
    %p38 = por %p36, %p37
    %p39 = scmp.ne.s32.totalorder %s28, %s29
    %p40 = scmp.eq.s32.totalorder %s20, 0
    %p41 = por %p39, %p40
    %p42 = scmp.ne.s32.totalorder %s28, %s29
    %p43 = scmp.eq.s32.totalorder %s21, 1
    %p44 = por %p42, %p43
    %p46 = scmp.ne.s32.totalorder %s29, %s45
    %p47 = scmp.eq.s32.totalorder %s21, 0
    %p48 = por %p46, %p47
    %s50 = sadd.s32 %s49, 1
    %p53 = scmp.eq.s32.totalorder %s15, 1
    %p54 = scmp.ne.s32.totalorder %s49, %s51
    %p55 = scmp.eq.s32.totalorder %s15, 0
    %p56 = por %p54, %p55
    %p57 = scmp.ne.s32.totalorder %s49, %s51
    %p58 = scmp.eq.s32.totalorder %s20, 1
    %p59 = por %p57, %p58
    %p60 = scmp.ne.s32.totalorder %s51, %s52
    %p61 = scmp.eq.s32.totalorder %s20, 0
    %p62 = por %p60, %p61
    %p63 = scmp.ne.s32.totalorder %s51, %s52
    %p64 = scmp.eq.s32.totalorder %s21, 1
    %p65 = por %p63, %p64
    %p67 = scmp.ne.s32.totalorder %s52, %s66
    %p68 = scmp.eq.s32.totalorder %s21, 0
    %p69 = por %p67, %p68
    %s71 = sadd.s32 %s70, 1
    %p74 = scmp.eq.s32.totalorder %s15, 1
    %p75 = scmp.ne.s32.totalorder %s70, %s72
    %p76 = scmp.eq.s32.totalorder %s15, 0
    %p77 = por %p75, %p76
    %p78 = scmp.ne.s32.totalorder %s70, %s72
    %p79 = scmp.eq.s32.totalorder %s20, 1
    %p80 = por %p78, %p79
    %p81 = scmp.ne.s32.totalorder %s72, %s73
    %p82 = scmp.eq.s32.totalorder %s20, 0
    %p83 = por %p81, %p82
    %p84 = scmp.ne.s32.totalorder %s72, %s73
    %p85 = scmp.eq.s32.totalorder %s21, 1
    %p86 = por %p84, %p85
    %p88 = scmp.ne.s32.totalorder %s73, %s87
    %p89 = scmp.eq.s32.totalorder %s21, 0
    %p90 = por %p88, %p89
    %s92 = sadd.s32 %s91, 1
    %p95 = scmp.eq.s32.totalorder %s15, 1
    %p96 = scmp.ne.s32.totalorder %s91, %s93
    %p97 = scmp.eq.s32.totalorder %s15, 0
    %p98 = por %p96, %p97
    %p99 = scmp.ne.s32.totalorder %s91, %s93
    %p100 = scmp.eq.s32.totalorder %s20, 1
    %p101 = por %p99, %p100
    %p102 = scmp.ne.s32.totalorder %s93, %s94
    %p103 = scmp.eq.s32.totalorder %s20, 0
    %p104 = por %p102, %p103
    %p105 = scmp.ne.s32.totalorder %s93, %s94
    %p106 = scmp.eq.s32.totalorder %s21, 1
    %p107 = por %p105, %p106
    %p109 = scmp.ne.s32.totalorder %s94, %s108
    %p110 = scmp.eq.s32.totalorder %s21, 0
    %p111 = por %p109, %p110
    %s113 = sadd.s32 %s112, 1
    %p116 = scmp.eq.s32.totalorder %s15, 1
    %p117 = scmp.ne.s32.totalorder %s112, %s114
    %p118 = scmp.eq.s32.totalorder %s15, 0
    %p119 = por %p117, %p118
    %p120 = scmp.ne.s32.totalorder %s112, %s114
    %p121 = scmp.eq.s32.totalorder %s20, 1
    %p122 = por %p120, %p121
    %p123 = scmp.ne.s32.totalorder %s114, %s115
    %p124 = scmp.eq.s32.totalorder %s20, 0
    %p125 = por %p123, %p124
    %p126 = scmp.ne.s32.totalorder %s114, %s115
    %p127 = scmp.eq.s32.totalorder %s21, 1
    %p128 = por %p126, %p127
    %p130 = scmp.ne.s32.totalorder %s115, %s129
    %p131 = scmp.eq.s32.totalorder %s21, 0
    %p132 = por %p130, %p131
    %s134 = sadd.s32 %s133, 1
    %p137 = scmp.eq.s32.totalorder %s15, 1
    %p138 = scmp.ne.s32.totalorder %s133, %s135
    %p139 = scmp.eq.s32.totalorder %s15, 0
    %p140 = por %p138, %p139
    %p141 = scmp.ne.s32.totalorder %s133, %s135
    %p142 = scmp.eq.s32.totalorder %s20, 1
    %p143 = por %p141, %p142
    %p144 = scmp.ne.s32.totalorder %s135, %s136
    %p145 = scmp.eq.s32.totalorder %s20, 0
    %p146 = por %p144, %p145
    %p147 = scmp.ne.s32.totalorder %s135, %s136
    %p148 = scmp.eq.s32.totalorder %s21, 1
    %p149 = por %p147, %p148
    %p151 = scmp.ne.s32.totalorder %s136, %s150
    %p152 = scmp.eq.s32.totalorder %s21, 0
    %p153 = por %p151, %p152
    %s155 = sadd.s32 %s154, 1
    %p158 = scmp.eq.s32.totalorder %s15, 1
    %p159 = scmp.ne.s32.totalorder %s154, %s156
    %p160 = scmp.eq.s32.totalorder %s15, 0
    %p161 = por %p159, %p160
    %p162 = scmp.ne.s32.totalorder %s154, %s156
    %p163 = scmp.eq.s32.totalorder %s20, 1
    %p164 = por %p162, %p163
    %p165 = scmp.ne.s32.totalorder %s156, %s157
    %p166 = scmp.eq.s32.totalorder %s20, 0
    %p167 = por %p165, %p166
    %p168 = scmp.ne.s32.totalorder %s156, %s157
    %p169 = scmp.eq.s32.totalorder %s21, 1
    %p170 = por %p168, %p169
    %p172 = scmp.ne.s32.totalorder %s157, %s171
    %p173 = scmp.eq.s32.totalorder %s21, 0
    %p174 = por %p172, %p173
    %s175 = ssub.s32 %s15, %s22
    %p176 = scmp.eq.s32.totalorder %s175, 0
    %s178 = sadd.s32 %s177, 1
    %s179 = scalar_select %p176, %s177, %s178
    %p182 = pneg %p176
    %p183 = scmp.eq.s32.totalorder %s15, 1
    %p184 = por %p182, %p183
    %p185 = scmp.ne.s32.totalorder %s177, %s180
    %p186 = scmp.eq.s32.totalorder %s15, 0
    %p187 = por %p185, %p186
    %p188 = scmp.ne.s32.totalorder %s177, %s180
    %p189 = scmp.eq.s32.totalorder %s20, 1
    %p190 = por %p188, %p189
    %p191 = scmp.ne.s32.totalorder %s180, %s181
    %p192 = scmp.eq.s32.totalorder %s20, 0
    %p193 = por %p191, %p192
    %p194 = scmp.ne.s32.totalorder %s180, %s181
    %p195 = scmp.eq.s32.totalorder %s21, 1
    %p196 = por %p194, %p195
    %p198 = scmp.ne.s32.totalorder %s181, %s197
    %p199 = scmp.eq.s32.totalorder %s21, 0
    %p200 = por %p198, %p199
    %s201 = ssub.s32 %s15, %s22
    %p202 = scmp.eq.s32.totalorder %s201, 0
    %s204 = sadd.s32 %s203, 1
    %s205 = scalar_select %p202, %s203, %s204
    %p208 = pneg %p202
    %p209 = scmp.eq.s32.totalorder %s15, 1
    %p210 = por %p208, %p209
    %p211 = scmp.ne.s32.totalorder %s203, %s206
    %p212 = scmp.eq.s32.totalorder %s15, 0
    %p213 = por %p211, %p212
    %p214 = scmp.ne.s32.totalorder %s203, %s206
    %p215 = scmp.eq.s32.totalorder %s20, 1
    %p216 = por %p214, %p215
    %p217 = scmp.ne.s32.totalorder %s206, %s207
    %p218 = scmp.eq.s32.totalorder %s20, 0
    %p219 = por %p217, %p218
    %p220 = scmp.ne.s32.totalorder %s206, %s207
    %p221 = scmp.eq.s32.totalorder %s21, 1
    %p222 = por %p220, %p221
    %p224 = scmp.ne.s32.totalorder %s207, %s223
    %p225 = scmp.eq.s32.totalorder %s21, 0
    %p226 = por %p224, %p225
    %p227 = scmp.le.s32.totalorder 1, %s15
    %p228 = scmp.lt.s32.totalorder %s15, 3
    %p229 = pnand %p227, %p228
    %p230 = pneg %p229
    // Predicated region
    $region9: #{final_classifier_forward.2} parent=5 // pred_check
      _
    $region10: #{final_classifier_forward.2} parent=5 // pred_check_branch
      %232 = sbr.rel (%p229) target = $region12
    $region11: #{final_classifier_forward.2} parent=5 // pred_region
      %s233 = ssub.s32 %s15, 1
      // Predicated region
      $region13: #{final_classifier_forward.2} parent=11 // pred_check
        %p234 = pneg %p62
      $region14: #{final_classifier_forward.2} parent=11 // pred_check_branch
        %236 = sbr.rel (%p234) target = $region16
      $region15: #{final_classifier_forward.2} parent=11 // pred_region
        _
      $region16: #{final_classifier_forward.2} parent=11 // pred_fallthru
        _
      // Predicated region
      $region17: #{final_classifier_forward.2} parent=11 // pred_check
        %p237 = pneg %p83
      $region18: #{final_classifier_forward.2} parent=11 // pred_check_branch
        %239 = sbr.rel (%p237) target = $region20
      $region19: #{final_classifier_forward.2} parent=11 // pred_region
        _
      $region20: #{final_classifier_forward.2} parent=11 // pred_fallthru
        _
      // Predicated region
      $region21: #{final_classifier_forward.2} parent=11 // pred_check
        %p240 = pneg %p104
      $region22: #{final_classifier_forward.2} parent=11 // pred_check_branch
        %242 = sbr.rel (%p240) target = $region24
      $region23: #{final_classifier_forward.2} parent=11 // pred_region
        _
      $region24: #{final_classifier_forward.2} parent=11 // pred_fallthru
        _
      // Predicated region
      $region25: #{final_classifier_forward.2} parent=11 // pred_check
        %p243 = pneg %p125
      $region26: #{final_classifier_forward.2} parent=11 // pred_check_branch
        %245 = sbr.rel (%p243) target = $region28
      $region27: #{final_classifier_forward.2} parent=11 // pred_region
        _
      $region28: #{final_classifier_forward.2} parent=11 // pred_fallthru
        _
      // Predicated region
      $region29: #{final_classifier_forward.2} parent=11 // pred_check
        %p246 = pneg %p146
      $region30: #{final_classifier_forward.2} parent=11 // pred_check_branch
        %248 = sbr.rel (%p246) target = $region32
      $region31: #{final_classifier_forward.2} parent=11 // pred_region
        _
      $region32: #{final_classifier_forward.2} parent=11 // pred_fallthru
        _
      // Predicated region
      $region33: #{final_classifier_forward.2} parent=11 // pred_check
        %p249 = pneg %p167
      $region34: #{final_classifier_forward.2} parent=11 // pred_check_branch
        %251 = sbr.rel (%p249) target = $region36
      $region35: #{final_classifier_forward.2} parent=11 // pred_region
        _
      $region36: #{final_classifier_forward.2} parent=11 // pred_fallthru
        _
    $region12: #{final_classifier_forward.2} parent=5 // pred_fallthru
      _
    %p252 = scmp.lt.s32.totalorder %s15, 2
    // Predicated region
    $region37: #{final_classifier_forward.2} parent=5 // pred_check
      %p253 = pneg %p252
    $region38: #{final_classifier_forward.2} parent=5 // pred_check_branch
      %255 = sbr.rel (%p253) target = $region40
    $region39: #{final_classifier_forward.2} parent=5 // pred_region
      // Predicated region
      $region41: #{final_classifier_forward.2} parent=39 // pred_check
        %p256 = pneg %p35
      $region42: #{final_classifier_forward.2} parent=39 // pred_check_branch
        %258 = sbr.rel (%p256) target = $region44
      $region43: #{final_classifier_forward.2} parent=39 // pred_region
        %p259 = scmp.lt.s32.totalorder %s15, 1
        %s260 = scalar_select %p259, %s15, 1
        %s261 = smul.addr %s260, 28
        %s262 = smul.addr %s261, 8
        %s263 = scalar_lea.vmem %s0, %s262
      $region44: #{final_classifier_forward.2} parent=39 // pred_fallthru
        _
    $region40: #{final_classifier_forward.2} parent=5 // pred_fallthru
      _
    %p264 = scmp.le.s32.totalorder 1, %s15
    %p265 = scmp.lt.s32.totalorder %s15, 3
    %p266 = pnand %p264, %p265
    %p267 = pneg %p266
    // Predicated region
    $region45: #{final_classifier_forward.2} parent=5 // pred_check
      _
    $region46: #{final_classifier_forward.2} parent=5 // pred_check_branch
      %269 = sbr.rel (%p266) target = $region48
    $region47: #{final_classifier_forward.2} parent=5 // pred_region
      %s270 = ssub.s32 %s15, 1
      %p271 = scmp.lt.s32.totalorder %s20, 1
      %s272 = scalar_select %p271, %s20, 1
      %s273 = smul.addr %s272, 28
      %s274 = smul.addr %s273, 8
      %s275 = scalar_lea.vmem %s0, %s274
      %p276 = pneg %p41
      %p277 = pneg %p38
      %p278 = pneg %p62
      %p279 = pneg %p59
      %p280 = pneg %p83
      %p281 = pneg %p80
      %p282 = pneg %p104
      %p283 = pneg %p101
      %p284 = pneg %p125
      %p285 = pneg %p122
      %p286 = pneg %p146
      %p287 = pneg %p143
      %p288 = pneg %p167
      %p289 = pneg %p164
      %p290 = pneg %p193
      %p291 = pneg %p190
      %p292 = scmp.lt.s32.totalorder %s20, 1
      %s293 = scalar_select %p292, %s20, 1
      %s294 = smul.addr %s293, 10
      %s295 = smul.addr %s294, 4
      %s296 = scalar_lea.vmem %s7, %s295
      %p297 = pneg %p219
      %p298 = pneg %p216
      %p299 = scmp.lt.s32.totalorder %s20, 1
      %s300 = scalar_select %p299, %s20, 1
      %s301 = smul.addr %s300, 8
      %s302 = scalar_lea.vmem %s8, %s301
      %p303 = scmp.lt.s32.totalorder %s20, 1
      %s304 = scalar_select %p303, %s20, 1
      %s305 = smul.addr %s304, 28
      %s306 = smul.addr %s305, 8
      %s307 = scalar_lea.vmem %s0, %s306
      %p308 = scmp.lt.s32.totalorder %s20, 1
      %s309 = scalar_select %p308, %s20, 1
      %s310 = smul.addr %s309, 10
      %s311 = smul.addr %s310, 4
      %s312 = scalar_lea.vmem %s7, %s311
      %p313 = scmp.lt.s32.totalorder %s20, 1
      %s314 = scalar_select %p313, %s20, 1
      %s315 = smul.addr %s314, 8
      %s316 = scalar_lea.vmem %s8, %s315
      %v318 = vlaneseq
      %v319 = vshrl.u32 %v318, 7
      %v320 = vadd.s32 %v319, 8
      %v321 = vadd.s32 %v319, 16
      %v322 = vadd.s32 %v319, 24
      %v323 = vadd.s32 %v319, 32
      %v324 = vadd.s32 %v319, 40
      %v325 = vadd.s32 %v319, 48
      %v326 = vadd.s32 %v319, 56
      %v327 = vadd.s32 %v319, 64
      %v328 = vadd.s32 %v319, 72
      %vm329 = vcmp.lt.s32.totalorder %v319, 0
      %v330 = vsub.s32 0, %v319
      %v331 = vsel %vm329, %v330, %v319
      %v332 = vand.u32 %v331, 65535
      %v333 = vshrl.u32 %v331, 16
      %v335 = vmul.u32 %v332, 52429
      %v336 = vmul.u32 %v332, 52428
      %v337 = vmul.u32 %v333, 52429
      %v338 = vmul.u32 %v333, 52428
      %v339 = vshll.u32 %v336, 16
      %v340 = vshrl.u32 %v336, 16
      %v341 = vshll.u32 %v337, 16
      %v342 = vshrl.u32 %v337, 16
      %vm343 = vc.u32 %v335, %v339
      %v344 = vsel %vm343, 1, 0
      %v345 = vadd.s32 %v335, %v339
      %v346 = vadd.s32 %v338, %v344
      %vm347 = vc.u32 %v345, %v341
      %v348 = vsel %vm347, 1, 0
      %v349 = vadd.s32 %v345, %v341
      %v350 = vadd.s32 %v346, %v348
      %v351 = vadd.s32 %v350, %v340
      %v352 = vadd.s32 %v351, %v342
      %v353 = vshrl.u32 %v352, 3
      %v354 = vmul.u32 %v353, 10
      %v355 = vsub.s32 %v331, %v354
      %v356 = vsub.s32 0, %v355
      %v357 = vsel %vm329, %v356, %v355
      %vm358 = vcmp.lt.s32.totalorder %v320, 0
      %v359 = vsub.s32 0, %v320
      %v360 = vsel %vm358, %v359, %v320
      %v361 = vand.u32 %v360, 65535
      %v362 = vshrl.u32 %v360, 16
      %v364 = vmul.u32 %v361, 52429
      %v365 = vmul.u32 %v361, 52428
      %v366 = vmul.u32 %v362, 52429
      %v367 = vmul.u32 %v362, 52428
      %v368 = vshll.u32 %v365, 16
      %v369 = vshrl.u32 %v365, 16
      %v370 = vshll.u32 %v366, 16
      %v371 = vshrl.u32 %v366, 16
      %vm372 = vc.u32 %v364, %v368
      %v373 = vsel %vm372, 1, 0
      %v374 = vadd.s32 %v364, %v368
      %v375 = vadd.s32 %v367, %v373
      %vm376 = vc.u32 %v374, %v370
      %v377 = vsel %vm376, 1, 0
      %v378 = vadd.s32 %v374, %v370
      %v379 = vadd.s32 %v375, %v377
      %v380 = vadd.s32 %v379, %v369
      %v381 = vadd.s32 %v380, %v371
      %v382 = vshrl.u32 %v381, 3
      %v383 = vmul.u32 %v382, 10
      %v384 = vsub.s32 %v360, %v383
      %v385 = vsub.s32 0, %v384
      %v386 = vsel %vm358, %v385, %v384
      %vm387 = vcmp.lt.s32.totalorder %v321, 0
      %v388 = vsub.s32 0, %v321
      %v389 = vsel %vm387, %v388, %v321
      %v390 = vand.u32 %v389, 65535
      %v391 = vshrl.u32 %v389, 16
      %v393 = vmul.u32 %v390, 52429
      %v394 = vmul.u32 %v390, 52428
      %v395 = vmul.u32 %v391, 52429
      %v396 = vmul.u32 %v391, 52428
      %v397 = vshll.u32 %v394, 16
      %v398 = vshrl.u32 %v394, 16
      %v399 = vshll.u32 %v395, 16
      %v400 = vshrl.u32 %v395, 16
      %vm401 = vc.u32 %v393, %v397
      %v402 = vsel %vm401, 1, 0
      %v403 = vadd.s32 %v393, %v397
      %v404 = vadd.s32 %v396, %v402
      %vm405 = vc.u32 %v403, %v399
      %v406 = vsel %vm405, 1, 0
      %v407 = vadd.s32 %v403, %v399
      %v408 = vadd.s32 %v404, %v406
      %v409 = vadd.s32 %v408, %v398
      %v410 = vadd.s32 %v409, %v400
      %v411 = vshrl.u32 %v410, 3
      %v412 = vmul.u32 %v411, 10
      %v413 = vsub.s32 %v389, %v412
      %v414 = vsub.s32 0, %v413
      %v415 = vsel %vm387, %v414, %v413
      %vm416 = vcmp.lt.s32.totalorder %v322, 0
      %v417 = vsub.s32 0, %v322
      %v418 = vsel %vm416, %v417, %v322
      %v419 = vand.u32 %v418, 65535
      %v420 = vshrl.u32 %v418, 16
      %v422 = vmul.u32 %v419, 52429
      %v423 = vmul.u32 %v419, 52428
      %v424 = vmul.u32 %v420, 52429
      %v425 = vmul.u32 %v420, 52428
      %v426 = vshll.u32 %v423, 16
      %v427 = vshrl.u32 %v423, 16
      %v428 = vshll.u32 %v424, 16
      %v429 = vshrl.u32 %v424, 16
      %vm430 = vc.u32 %v422, %v426
      %v431 = vsel %vm430, 1, 0
      %v432 = vadd.s32 %v422, %v426
      %v433 = vadd.s32 %v425, %v431
      %vm434 = vc.u32 %v432, %v428
      %v435 = vsel %vm434, 1, 0
      %v436 = vadd.s32 %v432, %v428
      %v437 = vadd.s32 %v433, %v435
      %v438 = vadd.s32 %v437, %v427
      %v439 = vadd.s32 %v438, %v429
      %v440 = vshrl.u32 %v439, 3
      %v441 = vmul.u32 %v440, 10
      %v442 = vsub.s32 %v418, %v441
      %v443 = vsub.s32 0, %v442
      %v444 = vsel %vm416, %v443, %v442
      %vm445 = vcmp.lt.s32.totalorder %v323, 0
      %v446 = vsub.s32 0, %v323
      %v447 = vsel %vm445, %v446, %v323
      %v448 = vand.u32 %v447, 65535
      %v449 = vshrl.u32 %v447, 16
      %v451 = vmul.u32 %v448, 52429
      %v452 = vmul.u32 %v448, 52428
      %v453 = vmul.u32 %v449, 52429
      %v454 = vmul.u32 %v449, 52428
      %v455 = vshll.u32 %v452, 16
      %v456 = vshrl.u32 %v452, 16
      %v457 = vshll.u32 %v453, 16
      %v458 = vshrl.u32 %v453, 16
      %vm459 = vc.u32 %v451, %v455
      %v460 = vsel %vm459, 1, 0
      %v461 = vadd.s32 %v451, %v455
      %v462 = vadd.s32 %v454, %v460
      %vm463 = vc.u32 %v461, %v457
      %v464 = vsel %vm463, 1, 0
      %v465 = vadd.s32 %v461, %v457
      %v466 = vadd.s32 %v462, %v464
      %v467 = vadd.s32 %v466, %v456
      %v468 = vadd.s32 %v467, %v458
      %v469 = vshrl.u32 %v468, 3
      %v470 = vmul.u32 %v469, 10
      %v471 = vsub.s32 %v447, %v470
      %v472 = vsub.s32 0, %v471
      %v473 = vsel %vm445, %v472, %v471
      %vm474 = vcmp.lt.s32.totalorder %v324, 0
      %v475 = vsub.s32 0, %v324
      %v476 = vsel %vm474, %v475, %v324
      %v477 = vand.u32 %v476, 65535
      %v478 = vshrl.u32 %v476, 16
      %v480 = vmul.u32 %v477, 52429
      %v481 = vmul.u32 %v477, 52428
      %v482 = vmul.u32 %v478, 52429
      %v483 = vmul.u32 %v478, 52428
      %v484 = vshll.u32 %v481, 16
      %v485 = vshrl.u32 %v481, 16
      %v486 = vshll.u32 %v482, 16
      %v487 = vshrl.u32 %v482, 16
      %vm488 = vc.u32 %v480, %v484
      %v489 = vsel %vm488, 1, 0
      %v490 = vadd.s32 %v480, %v484
      %v491 = vadd.s32 %v483, %v489
      %vm492 = vc.u32 %v490, %v486
      %v493 = vsel %vm492, 1, 0
      %v494 = vadd.s32 %v490, %v486
      %v495 = vadd.s32 %v491, %v493
      %v496 = vadd.s32 %v495, %v485
      %v497 = vadd.s32 %v496, %v487
      %v498 = vshrl.u32 %v497, 3
      %v499 = vmul.u32 %v498, 10
      %v500 = vsub.s32 %v476, %v499
      %v501 = vsub.s32 0, %v500
      %v502 = vsel %vm474, %v501, %v500
      %vm503 = vcmp.lt.s32.totalorder %v325, 0
      %v504 = vsub.s32 0, %v325
      %v505 = vsel %vm503, %v504, %v325
      %v506 = vand.u32 %v505, 65535
      %v507 = vshrl.u32 %v505, 16
      %v509 = vmul.u32 %v506, 52429
      %v510 = vmul.u32 %v506, 52428
      %v511 = vmul.u32 %v507, 52429
      %v512 = vmul.u32 %v507, 52428
      %v513 = vshll.u32 %v510, 16
      %v514 = vshrl.u32 %v510, 16
      %v515 = vshll.u32 %v511, 16
      %v516 = vshrl.u32 %v511, 16
      %vm517 = vc.u32 %v509, %v513
      %v518 = vsel %vm517, 1, 0
      %v519 = vadd.s32 %v509, %v513
      %v520 = vadd.s32 %v512, %v518
      %vm521 = vc.u32 %v519, %v515
      %v522 = vsel %vm521, 1, 0
      %v523 = vadd.s32 %v519, %v515
      %v524 = vadd.s32 %v520, %v522
      %v525 = vadd.s32 %v524, %v514
      %v526 = vadd.s32 %v525, %v516
      %v527 = vshrl.u32 %v526, 3
      %v528 = vmul.u32 %v527, 10
      %v529 = vsub.s32 %v505, %v528
      %v530 = vsub.s32 0, %v529
      %v531 = vsel %vm503, %v530, %v529
      %vm532 = vcmp.lt.s32.totalorder %v326, 0
      %v533 = vsub.s32 0, %v326
      %v534 = vsel %vm532, %v533, %v326
      %v535 = vand.u32 %v534, 65535
      %v536 = vshrl.u32 %v534, 16
      %v538 = vmul.u32 %v535, 52429
      %v539 = vmul.u32 %v535, 52428
      %v540 = vmul.u32 %v536, 52429
      %v541 = vmul.u32 %v536, 52428
      %v542 = vshll.u32 %v539, 16
      %v543 = vshrl.u32 %v539, 16
      %v544 = vshll.u32 %v540, 16
      %v545 = vshrl.u32 %v540, 16
      %vm546 = vc.u32 %v538, %v542
      %v547 = vsel %vm546, 1, 0
      %v548 = vadd.s32 %v538, %v542
      %v549 = vadd.s32 %v541, %v547
      %vm550 = vc.u32 %v548, %v544
      %v551 = vsel %vm550, 1, 0
      %v552 = vadd.s32 %v548, %v544
      %v553 = vadd.s32 %v549, %v551
      %v554 = vadd.s32 %v553, %v543
      %v555 = vadd.s32 %v554, %v545
      %v556 = vshrl.u32 %v555, 3
      %v557 = vmul.u32 %v556, 10
      %v558 = vsub.s32 %v534, %v557
      %v559 = vsub.s32 0, %v558
      %v560 = vsel %vm532, %v559, %v558
      %vm561 = vcmp.lt.s32.totalorder %v327, 0
      %v562 = vsub.s32 0, %v327
      %v563 = vsel %vm561, %v562, %v327
      %v564 = vand.u32 %v563, 65535
      %v565 = vshrl.u32 %v563, 16
      %v567 = vmul.u32 %v564, 52429
      %v568 = vmul.u32 %v564, 52428
      %v569 = vmul.u32 %v565, 52429
      %v570 = vmul.u32 %v565, 52428
      %v571 = vshll.u32 %v568, 16
      %v572 = vshrl.u32 %v568, 16
      %v573 = vshll.u32 %v569, 16
      %v574 = vshrl.u32 %v569, 16
      %vm575 = vc.u32 %v567, %v571
      %v576 = vsel %vm575, 1, 0
      %v577 = vadd.s32 %v567, %v571
      %v578 = vadd.s32 %v570, %v576
      %vm579 = vc.u32 %v577, %v573
      %v580 = vsel %vm579, 1, 0
      %v581 = vadd.s32 %v577, %v573
      %v582 = vadd.s32 %v578, %v580
      %v583 = vadd.s32 %v582, %v572
      %v584 = vadd.s32 %v583, %v574
      %v585 = vshrl.u32 %v584, 3
      %v586 = vmul.u32 %v585, 10
      %v587 = vsub.s32 %v563, %v586
      %v588 = vsub.s32 0, %v587
      %v589 = vsel %vm561, %v588, %v587
      %vm590 = vcmp.lt.s32.totalorder %v328, 0
      %v591 = vsub.s32 0, %v328
      %v592 = vsel %vm590, %v591, %v328
      %v593 = vand.u32 %v592, 65535
      %v594 = vshrl.u32 %v592, 16
      %v596 = vmul.u32 %v593, 52429
      %v597 = vmul.u32 %v593, 52428
      %v598 = vmul.u32 %v594, 52429
      %v599 = vmul.u32 %v594, 52428
      %v600 = vshll.u32 %v597, 16
      %v601 = vshrl.u32 %v597, 16
      %v602 = vshll.u32 %v598, 16
      %v603 = vshrl.u32 %v598, 16
      %vm604 = vc.u32 %v596, %v600
      %v605 = vsel %vm604, 1, 0
      %v606 = vadd.s32 %v596, %v600
      %v607 = vadd.s32 %v599, %v605
      %vm608 = vc.u32 %v606, %v602
      %v609 = vsel %vm608, 1, 0
      %v610 = vadd.s32 %v606, %v602
      %v611 = vadd.s32 %v607, %v609
      %v612 = vadd.s32 %v611, %v601
      %v613 = vadd.s32 %v612, %v603
      %v614 = vshrl.u32 %v613, 3
      %v615 = vmul.u32 %v614, 10
      %v616 = vsub.s32 %v592, %v615
      %v617 = vsub.s32 0, %v616
      %v618 = vsel %vm590, %v617, %v616
      %vm619 = vcmp.ne.s32.totalorder %v357, 0
      %vm620 = vcmp.ne.s32.totalorder %v386, 0
      %vm621 = vcmp.ne.s32.totalorder %v415, 0
      %vm622 = vcmp.ne.s32.totalorder %v444, 0
      %vm623 = vcmp.ne.s32.totalorder %v473, 0
      %vm624 = vcmp.ne.s32.totalorder %v502, 0
      %vm625 = vcmp.ne.s32.totalorder %v531, 0
      %vm626 = vcmp.ne.s32.totalorder %v560, 0
      %vm627 = vcmp.ne.s32.totalorder %v589, 0
      %vm628 = vcmp.ne.s32.totalorder %v618, 0
      %vm629 = vcmp.lt.s32.totalorder %v357, 0
      %vm630 = vcmp.lt.s32.totalorder %v386, 0
      %vm631 = vcmp.lt.s32.totalorder %v415, 0
      %vm632 = vcmp.lt.s32.totalorder %v444, 0
      %vm633 = vcmp.lt.s32.totalorder %v473, 0
      %vm634 = vcmp.lt.s32.totalorder %v502, 0
      %vm635 = vcmp.lt.s32.totalorder %v531, 0
      %vm636 = vcmp.lt.s32.totalorder %v560, 0
      %vm637 = vcmp.lt.s32.totalorder %v589, 0
      %vm638 = vcmp.lt.s32.totalorder %v618, 0
      %vm639 = vmand %vm629, %vm619
      %vm640 = vmand %vm630, %vm620
      %vm641 = vmand %vm631, %vm621
      %vm642 = vmand %vm632, %vm622
      %vm643 = vmand %vm633, %vm623
      %vm644 = vmand %vm634, %vm624
      %vm645 = vmand %vm635, %vm625
      %vm646 = vmand %vm636, %vm626
      %vm647 = vmand %vm637, %vm627
      %vm648 = vmand %vm638, %vm628
      %v649 = vadd.s32 %v357, 10
      %v650 = vadd.s32 %v386, 10
      %v651 = vadd.s32 %v415, 10
      %v652 = vadd.s32 %v444, 10
      %v653 = vadd.s32 %v473, 10
      %v654 = vadd.s32 %v502, 10
      %v655 = vadd.s32 %v531, 10
      %v656 = vadd.s32 %v560, 10
      %v657 = vadd.s32 %v589, 10
      %v658 = vadd.s32 %v618, 10
      %v659 = vsel %vm639, %v649, %v357
      %v660 = vsel %vm640, %v650, %v386
      %v661 = vsel %vm641, %v651, %v415
      %v662 = vsel %vm642, %v652, %v444
      %v663 = vsel %vm643, %v653, %v473
      %v664 = vsel %vm644, %v654, %v502
      %v665 = vsel %vm645, %v655, %v531
      %v666 = vsel %vm646, %v656, %v560
      %v667 = vsel %vm647, %v657, %v589
      %v668 = vsel %vm648, %v658, %v618
      %vm669 = vcmp.lt.s32.totalorder %v659, 8
      %vm670 = vcmp.lt.s32.totalorder %v660, 8
      %vm671 = vcmp.lt.s32.totalorder %v661, 8
      %vm672 = vcmp.lt.s32.totalorder %v662, 8
      %vm673 = vcmp.lt.s32.totalorder %v663, 8
      %vm674 = vcmp.lt.s32.totalorder %v664, 8
      %vm675 = vcmp.lt.s32.totalorder %v665, 8
      %vm676 = vcmp.lt.s32.totalorder %v666, 8
      %vm677 = vcmp.lt.s32.totalorder %v667, 8
      %vm678 = vcmp.lt.s32.totalorder %v668, 8
      %vm679 = vcmask 261120
      %680 = vst.msk [vmem:[#allocation2] sm:$0xff] %vm679, 0.0
      %vm681 = vcmask 256000
      %682 = vst.msk [vmem:[#allocation2 + $0x8] sm:$0x7] %vm681, 0.0
      %683 = vst.msk [vmem:[#allocation2 + $0x5b] sm:$0xff] %vm679, 0.0
      %684 = vst.msk [vmem:[#allocation2 + $0x63] sm:$0xff] %vm679, 0.0
      %685 = vst.msk [vmem:[#allocation2 + $0x6b] sm:$0x7] %vm681, 0.0
      %v686 = vld [vmem:[%s307] sm:$0xff]
      %v687 = vld [vmem:[%s307 + $0x8] sm:$0xff]
      %v688 = vld [vmem:[%s307 + $0x10] sm:$0xff]
      %v689 = vld [vmem:[%s307 + $0x18] sm:$0xff]
      %v690 = vld [vmem:[%s307 + $0x20] sm:$0xff]
      %v691 = vld [vmem:[%s307 + $0x28] sm:$0xff]
      %v692 = vld [vmem:[%s307 + $0x30] sm:$0xff]
      %v693 = vld [vmem:[%s307 + $0x38] sm:$0xff]
      %v694 = vld [vmem:[%s307 + $0x40] sm:$0xff]
      %v695 = vld [vmem:[%s307 + $0x48] sm:$0xff]
      %v696 = vld [vmem:[%s307 + $0x50] sm:$0xff]
      %v697 = vld [vmem:[%s307 + $0x58] sm:$0xff]
      %v698 = vld [vmem:[%s307 + $0x60] sm:$0xff]
      %v699 = vld [vmem:[%s307 + $0x68] sm:$0xff]
      %v700 = vld [vmem:[%s307 + $0x70] sm:$0xff]
      %v701 = vld [vmem:[%s307 + $0x78] sm:$0xff]
      %v702 = vld [vmem:[%s307 + $0x80] sm:$0xff]
      %v703 = vld [vmem:[%s307 + $0x88] sm:$0xff]
      %v704 = vld [vmem:[%s307 + $0x90] sm:$0xff]
      %v705 = vld [vmem:[%s307 + $0x98] sm:$0xff]
      %v706 = vpack.c.bf16 %v688, %v686
      %v707 = vpack.c.bf16 %v689, %v687
      %v708 = vpack.c.bf16 %v692, %v690
      %v709 = vpack.c.bf16 %v693, %v691
      %v710 = vpack.c.bf16 %v696, %v694
      %v711 = vpack.c.bf16 %v697, %v695
      %v712 = vpack.c.bf16 %v700, %v698
      %v713 = vpack.c.bf16 %v701, %v699
      %v714 = vpack.c.bf16 %v704, %v702
      %v715 = vpack.c.bf16 %v705, %v703
      %v716 = vld [vmem:[%s1] sm:$0xf]
      %v717 = vld [vmem:[%s1 + $0x4] sm:$0xf]
      %v718 = vld [vmem:[%s1 + $0x8] sm:$0xf]
      %v719 = vld [vmem:[%s1 + $0xc] sm:$0xf]
      %v720 = vld [vmem:[%s1 + $0x10] sm:$0xf]
      %v721 = vld [vmem:[%s1 + $0x14] sm:$0xf]
      %v722 = vld [vmem:[%s1 + $0x18] sm:$0xf]
      %v723 = vld [vmem:[%s1 + $0x1c] sm:$0xf]
      %v724 = vld [vmem:[%s1 + $0x20] sm:$0xf]
      %v725 = vld [vmem:[%s1 + $0x24] sm:$0xf]
      %v726 = vld [vmem:[%s1 + $0x28] sm:$0xf]
      %v727 = vld [vmem:[%s1 + $0x2c] sm:$0xf]
      %v728 = vld [vmem:[%s1 + $0x30] sm:$0xf]
      %v729 = vld [vmem:[%s1 + $0x34] sm:$0xf]
      %v730 = vld [vmem:[%s1 + $0x38] sm:$0xf]
      %v731 = vld [vmem:[%s1 + $0x3c] sm:$0xf]
      %v732 = vld [vmem:[%s1 + $0x40] sm:$0xf]
      %v733 = vld [vmem:[%s1 + $0x44] sm:$0xf]
      %v734 = vld [vmem:[%s1 + $0x48] sm:$0xf]
      %v735 = vld [vmem:[%s1 + $0x4c] sm:$0xf]
      %v736 = vld [vmem:[%s1 + $0x50] sm:$0xf]
      %v737 = vld [vmem:[%s1 + $0x54] sm:$0xf]
      %v738 = vld [vmem:[%s307] sm:$0xfe]
      %v739 = vld [vmem:[%s307 + $0x8] sm:$0xfe]
      %v740 = vld [vmem:[%s307 + $0xa0] sm:$0x1]
      %v741 = vld [vmem:[%s307 + $0xa8] sm:$0x1]
      %v742 = vpack.c.bf16 %v688, %v738
      %v743 = vpack.c.bf16 %v689, %v739
      %v744 = vpack.c.bf16 %v740, %v740
      %v745 = vpack.c.bf16 %v741, %v741
      %s746 = scalar_lea.vmem %s1, 88
      %v747 = vld [vmem:[%s746] sm:$0xf]
      %v748 = vld [vmem:[%s746 + $0x4] sm:$0xf]
      %v749 = vld [vmem:[%s746 + $0x8] sm:$0xf]
      %v750 = vld [vmem:[%s746 + $0xc] sm:$0xf]
      %v751 = vld [vmem:[%s746 + $0x10] sm:$0xf]
      %v752 = vld [vmem:[%s746 + $0x14] sm:$0xf]
      %v753 = vld [vmem:[%s746 + $0x18] sm:$0xf]
      %v754 = vld [vmem:[%s746 + $0x1c] sm:$0xf]
      %v755 = vld [vmem:[%s746 + $0x20] sm:$0xf]
      %v756 = vld [vmem:[%s746 + $0x24] sm:$0xf]
      %v757 = vld [vmem:[%s746 + $0x28] sm:$0xf]
      %v758 = vld [vmem:[%s746 + $0x2c] sm:$0xf]
      %v759 = vld [vmem:[%s746 + $0x30] sm:$0xf]
      %v760 = vld [vmem:[%s746 + $0x34] sm:$0xf]
      %v761 = vld [vmem:[%s746 + $0x38] sm:$0xf]
      %v762 = vld [vmem:[%s746 + $0x3c] sm:$0xf]
      %v763 = vld [vmem:[%s746 + $0x40] sm:$0xf]
      %v764 = vld [vmem:[%s746 + $0x44] sm:$0xf]
      %v765 = vld [vmem:[%s746 + $0x48] sm:$0xf]
      %v766 = vld [vmem:[%s746 + $0x4c] sm:$0xf]
      %v767 = vld [vmem:[%s746 + $0x50] sm:$0xf]
      %v768 = vld [vmem:[%s746 + $0x54] sm:$0xf]
      %vm769 = vsmask.f32 7424
      %v771 = vshrl.u32 %v742, 16
      %v773 = vshll.u32 %v742, 16
      %v775 = vrot.slane %v773, 1
      %v776 = vor.u32 %v771, %v775
      %v778 = vshll.u32 %v708, 16
      %v780 = vrot.slane %v778, 1
      %v781 = vsel %vm769, %v776, %v780
      %v783 = vshrl.u32 %v743, 16
      %v785 = vshll.u32 %v743, 16
      %v787 = vrot.slane %v785, 1
      %v788 = vor.u32 %v783, %v787
      %v790 = vshll.u32 %v709, 16
      %v792 = vrot.slane %v790, 1
      %v793 = vsel %vm769, %v788, %v792
      %v794 = vshrl.u32 %v708, 16
      %v796 = vor.u32 %v794, %v780
      %v798 = vshll.u32 %v710, 16
      %v800 = vrot.slane %v798, 1
      %v801 = vsel %vm769, %v796, %v800
      %v802 = vshrl.u32 %v709, 16
      %v804 = vor.u32 %v802, %v792
      %v806 = vshll.u32 %v711, 16
      %v808 = vrot.slane %v806, 1
      %v809 = vsel %vm769, %v804, %v808
      %v810 = vshrl.u32 %v710, 16
      %v812 = vor.u32 %v810, %v800
      %v814 = vshll.u32 %v712, 16
      %v816 = vrot.slane %v814, 1
      %v817 = vsel %vm769, %v812, %v816
      %v818 = vshrl.u32 %v711, 16
      %v820 = vor.u32 %v818, %v808
      %v822 = vshll.u32 %v713, 16
      %v824 = vrot.slane %v822, 1
      %v825 = vsel %vm769, %v820, %v824
      %v826 = vshrl.u32 %v712, 16
      %v828 = vor.u32 %v826, %v816
      %v830 = vshll.u32 %v714, 16
      %v832 = vrot.slane %v830, 1
      %v833 = vsel %vm769, %v828, %v832
      %v834 = vshrl.u32 %v713, 16
      %v836 = vor.u32 %v834, %v824
      %v838 = vshll.u32 %v715, 16
      %v840 = vrot.slane %v838, 1
      %v841 = vsel %vm769, %v836, %v840
      %v842 = vshrl.u32 %v714, 16
      %v844 = vor.u32 %v842, %v832
      %v846 = vshll.u32 %v744, 16
      %v848 = vrot.slane %v846, 1
      %v849 = vsel %vm769, %v844, %v848
      %v850 = vshrl.u32 %v715, 16
      %v852 = vor.u32 %v850, %v840
      %v854 = vshll.u32 %v745, 16
      %v856 = vrot.slane %v854, 1
      %v857 = vsel %vm769, %v852, %v856
      %v885 = vunpack.c.l.b16 %v747
      %v886 = vunpack.c.l.b16 %v748
      %v887 = vunpack.c.l.b16 %v749
      %v888 = vunpack.c.l.b16 %v750
      %v889 = vunpack.c.l.b16 %v751
      %v890 = vunpack.c.l.b16 %v752
      %v891 = vunpack.c.l.b16 %v753
      %v892 = vunpack.c.l.b16 %v754
      %v893 = vunpack.c.l.b16 %v755
      %v894 = vunpack.c.l.b16 %v756
      %v895 = vunpack.c.l.b16 %v757
      %v896 = vunpack.c.l.b16 %v758
      %v897 = vunpack.c.l.b16 %v759
      %v898 = vunpack.c.l.b16 %v760
      %v899 = vunpack.c.l.b16 %v761
      %v900 = vunpack.c.l.b16 %v762
      %v901 = vunpack.c.l.b16 %v763
      %v902 = vunpack.c.l.b16 %v764
      %v903 = vunpack.c.l.b16 %v765
      %v904 = vunpack.c.l.b16 %v766
      %v905 = vunpack.c.l.b16 %v767
      %v906 = vunpack.c.l.b16 %v768
      %v907 = vpack.c.b16 %v886, %v885
      %v908 = vpack.c.b16 %v888, %v887
      %v909 = vpack.c.b16 %v890, %v889
      %v910 = vpack.c.b16 %v892, %v891
      %v911 = vpack.c.b16 %v894, %v893
      %v912 = vpack.c.b16 %v896, %v895
      %v913 = vpack.c.b16 %v898, %v897
      %v914 = vpack.c.b16 %v900, %v899
      %v915 = vpack.c.b16 %v902, %v901
      %v916 = vpack.c.b16 %v904, %v903
      %v917 = vpack.c.b16 %v906, %v905
      %vm929 = vcmask 392192
      %v931 = vsel %vm929, %v793, 0
      %v934 = vsel %vm929, %v809, 0
      %v937 = vsel %vm929, %v825, 0
      %v940 = vsel %vm929, %v841, 0
      %v943 = vsel %vm929, %v857, 0
      %945 = vmatpush.bf16.msra.mxu0 %v914
      %946 = vmatpush.bf16.msra.mxu0 %v913
      %947 = vmatpush.bf16.msra.mxu0 %v912
      %948 = vmatpush.bf16.msra.mxu0 %v911
      %949 = vmatpush.bf16.msra.mxu0 %v910
      %950 = vmatpush.bf16.msra.mxu0 %v909
      %951 = vmatpush.bf16.msra.mxu0 %v908
      %952 = vmatpush.bf16.msra.mxu0 %v907
      %953 = vmatmul.bf16.gmra.mxu0 %v781
      %v954 = vpop.f32.mrf.mxu0
      %v955 = vadd.f32 0.0, %v954
      %v956 = vpop.f32.mrf.mxu0
      %v957 = vadd.f32 0.0, %v956
      %958 = vmatmul.bf16.gmra.mxu0 %v801
      %v959 = vpop.f32.mrf.mxu0
      %v960 = vadd.f32 0.0, %v959
      %v961 = vpop.f32.mrf.mxu0
      %v962 = vadd.f32 0.0, %v961
      %963 = vmatmul.bf16.gmra.mxu0 %v817
      %v964 = vpop.f32.mrf.mxu0
      %v965 = vadd.f32 0.0, %v964
      %v966 = vpop.f32.mrf.mxu0
      %v967 = vadd.f32 0.0, %v966
      %968 = vmatmul.bf16.gmra.mxu0 %v833
      %v969 = vpop.f32.mrf.mxu0
      %v970 = vadd.f32 0.0, %v969
      %v971 = vpop.f32.mrf.mxu0
      %v972 = vadd.f32 0.0, %v971
      %973 = vmatmul.bf16.gmra.mxu0 %v849
      %v974 = vpop.f32.mrf.mxu0
      %v975 = vadd.f32 0.0, %v974
      %v976 = vpop.f32.mrf.mxu0
      %v977 = vadd.f32 0.0, %v976
      %978 = vdwg.mxu0
      %979 = vmatpush.bf16.msra.mxu0 0
      %980 = vmatpush.bf16.msra.mxu0 0
      %981 = vmatpush.bf16.msra.mxu0 0
      %982 = vmatpush.bf16.msra.mxu0 0
      %983 = vmatpush.bf16.msra.mxu0 0
      %984 = vmatpush.bf16.msra.mxu0 %v917
      %985 = vmatpush.bf16.msra.mxu0 %v916
      %986 = vmatpush.bf16.msra.mxu0 %v915
      %987 = vmatmul.bf16.gmra.mxu0 %v931
      %v988 = vpop.f32.mrf.mxu0
      %v989 = vadd.f32 %v955, %v988
      %v990 = vpop.f32.mrf.mxu0
      %v991 = vadd.f32 %v957, %v990
      %992 = vmatmul.bf16.gmra.mxu0 %v934
      %v993 = vpop.f32.mrf.mxu0
      %v994 = vadd.f32 %v960, %v993
      %v995 = vpop.f32.mrf.mxu0
      %v996 = vadd.f32 %v962, %v995
      %997 = vmatmul.bf16.gmra.mxu0 %v937
      %v998 = vpop.f32.mrf.mxu0
      %v999 = vadd.f32 %v965, %v998
      %v1000 = vpop.f32.mrf.mxu0
      %v1001 = vadd.f32 %v967, %v1000
      %1002 = vmatmul.bf16.gmra.mxu0 %v940
      %v1003 = vpop.f32.mrf.mxu0
      %v1004 = vadd.f32 %v970, %v1003
      %v1005 = vpop.f32.mrf.mxu0
      %v1006 = vadd.f32 %v972, %v1005
      %1007 = vmatmul.bf16.gmra.mxu0 %v943
      %v1008 = vpop.f32.mrf.mxu0
      %v1009 = vadd.f32 %v975, %v1008
      %v1010 = vpop.f32.mrf.mxu0
      %v1011 = vadd.f32 %v977, %v1010
      %1012 = vdwg.mxu0
      %v1035 = vunpack.c.l.b16 %v716
      %v1036 = vunpack.c.l.b16 %v717
      %v1037 = vunpack.c.l.b16 %v718
      %v1038 = vunpack.c.l.b16 %v719
      %v1039 = vunpack.c.l.b16 %v720
      %v1040 = vunpack.c.l.b16 %v721
      %v1041 = vunpack.c.l.b16 %v722
      %v1042 = vunpack.c.l.b16 %v723
      %v1043 = vunpack.c.l.b16 %v724
      %v1044 = vunpack.c.l.b16 %v725
      %v1045 = vunpack.c.l.b16 %v726
      %v1046 = vunpack.c.l.b16 %v727
      %v1047 = vunpack.c.l.b16 %v728
      %v1048 = vunpack.c.l.b16 %v729
      %v1049 = vunpack.c.l.b16 %v730
      %v1050 = vunpack.c.l.b16 %v731
      %v1051 = vunpack.c.l.b16 %v732
      %v1052 = vunpack.c.l.b16 %v733
      %v1053 = vunpack.c.l.b16 %v734
      %v1054 = vunpack.c.l.b16 %v735
      %v1055 = vunpack.c.l.b16 %v736
      %v1056 = vunpack.c.l.b16 %v737
      %v1057 = vpack.c.b16 %v1036, %v1035
      %v1058 = vpack.c.b16 %v1038, %v1037
      %v1059 = vpack.c.b16 %v1040, %v1039
      %v1060 = vpack.c.b16 %v1042, %v1041
      %v1061 = vpack.c.b16 %v1044, %v1043
      %v1062 = vpack.c.b16 %v1046, %v1045
      %v1063 = vpack.c.b16 %v1048, %v1047
      %v1064 = vpack.c.b16 %v1050, %v1049
      %v1065 = vpack.c.b16 %v1052, %v1051
      %v1066 = vpack.c.b16 %v1054, %v1053
      %v1067 = vpack.c.b16 %v1056, %v1055
      %v1080 = vsel %vm929, %v707, 0
      %v1082 = vsel %vm929, %v709, 0
      %v1084 = vsel %vm929, %v711, 0
      %v1086 = vsel %vm929, %v713, 0
      %v1088 = vsel %vm929, %v715, 0
      %1090 = vmatpush.bf16.msra.mxu0 %v1064
      %1091 = vmatpush.bf16.msra.mxu0 %v1063
      %1092 = vmatpush.bf16.msra.mxu0 %v1062
      %1093 = vmatpush.bf16.msra.mxu0 %v1061
      %1094 = vmatpush.bf16.msra.mxu0 %v1060
      %1095 = vmatpush.bf16.msra.mxu0 %v1059
      %1096 = vmatpush.bf16.msra.mxu0 %v1058
      %1097 = vmatpush.bf16.msra.mxu0 %v1057
      %1098 = vmatmul.bf16.gmra.mxu0 %v706
      %v1099 = vpop.f32.mrf.mxu0
      %v1100 = vadd.f32 %v989, %v1099
      %v1101 = vpop.f32.mrf.mxu0
      %v1102 = vadd.f32 %v991, %v1101
      %1103 = vmatmul.bf16.gmra.mxu0 %v708
      %v1104 = vpop.f32.mrf.mxu0
      %v1105 = vadd.f32 %v994, %v1104
      %v1106 = vpop.f32.mrf.mxu0
      %v1107 = vadd.f32 %v996, %v1106
      %1108 = vmatmul.bf16.gmra.mxu0 %v710
      %v1109 = vpop.f32.mrf.mxu0
      %v1110 = vadd.f32 %v999, %v1109
      %v1111 = vpop.f32.mrf.mxu0
      %v1112 = vadd.f32 %v1001, %v1111
      %1113 = vmatmul.bf16.gmra.mxu0 %v712
      %v1114 = vpop.f32.mrf.mxu0
      %v1115 = vadd.f32 %v1004, %v1114
      %v1116 = vpop.f32.mrf.mxu0
      %v1117 = vadd.f32 %v1006, %v1116
      %1118 = vmatmul.bf16.gmra.mxu0 %v714
      %v1119 = vpop.f32.mrf.mxu0
      %v1120 = vadd.f32 %v1009, %v1119
      %v1121 = vpop.f32.mrf.mxu0
      %v1122 = vadd.f32 %v1011, %v1121
      %1123 = vdwg.mxu0
      %1124 = vmatpush.bf16.msra.mxu0 0
      %1125 = vmatpush.bf16.msra.mxu0 0
      %1126 = vmatpush.bf16.msra.mxu0 0
      %1127 = vmatpush.bf16.msra.mxu0 0
      %1128 = vmatpush.bf16.msra.mxu0 0
      %1129 = vmatpush.bf16.msra.mxu0 %v1067
      %1130 = vmatpush.bf16.msra.mxu0 %v1066
      %1131 = vmatpush.bf16.msra.mxu0 %v1065
      %1132 = vmatmul.bf16.gmra.mxu0 %v1080
      %v1133 = vpop.f32.mrf.mxu0
      %v1134 = vadd.f32 %v1100, %v1133
      %v1135 = vpop.f32.mrf.mxu0
      %v1136 = vadd.f32 %v1102, %v1135
      %1137 = vmatmul.bf16.gmra.mxu0 %v1082
      %v1138 = vpop.f32.mrf.mxu0
      %v1139 = vadd.f32 %v1105, %v1138
      %v1140 = vpop.f32.mrf.mxu0
      %v1141 = vadd.f32 %v1107, %v1140
      %1142 = vmatmul.bf16.gmra.mxu0 %v1084
      %v1143 = vpop.f32.mrf.mxu0
      %v1144 = vadd.f32 %v1110, %v1143
      %v1145 = vpop.f32.mrf.mxu0
      %v1146 = vadd.f32 %v1112, %v1145
      %1147 = vmatmul.bf16.gmra.mxu0 %v1086
      %v1148 = vpop.f32.mrf.mxu0
      %v1149 = vadd.f32 %v1115, %v1148
      %v1150 = vpop.f32.mrf.mxu0
      %v1151 = vadd.f32 %v1117, %v1150
      %1152 = vmatmul.bf16.gmra.mxu0 %v1088
      %v1153 = vpop.f32.mrf.mxu0
      %v1154 = vadd.f32 %v1120, %v1153
      %v1155 = vpop.f32.mrf.mxu0
      %v1156 = vadd.f32 %v1122, %v1155
      %1157 = vdwg.mxu0
      %v1158 = vld [vmem:[%s307] sm:$0xfc]
      %v1159 = vld [vmem:[%s307 + $0x8] sm:$0xfc]
      %v1160 = vld [vmem:[%s307 + $0xa0] sm:$0x3]
      %v1161 = vld [vmem:[%s307 + $0xa8] sm:$0x3]
      %v1162 = vpack.c.bf16 %v688, %v1158
      %v1163 = vpack.c.bf16 %v689, %v1159
      %v1164 = vpack.c.bf16 %v1160, %v1160
      %v1165 = vpack.c.bf16 %v1161, %v1161
      %s1166 = scalar_lea.vmem %s1, 176
      %v1167 = vld [vmem:[%s1166] sm:$0xf]
      %v1168 = vld [vmem:[%s1166 + $0x4] sm:$0xf]
      %v1169 = vld [vmem:[%s1166 + $0x8] sm:$0xf]
      %v1170 = vld [vmem:[%s1166 + $0xc] sm:$0xf]
      %v1171 = vld [vmem:[%s1166 + $0x10] sm:$0xf]
      %v1172 = vld [vmem:[%s1166 + $0x14] sm:$0xf]
      %v1173 = vld [vmem:[%s1166 + $0x18] sm:$0xf]
      %v1174 = vld [vmem:[%s1166 + $0x1c] sm:$0xf]
      %v1175 = vld [vmem:[%s1166 + $0x20] sm:$0xf]
      %v1176 = vld [vmem:[%s1166 + $0x24] sm:$0xf]
      %v1177 = vld [vmem:[%s1166 + $0x28] sm:$0xf]
      %v1178 = vld [vmem:[%s1166 + $0x2c] sm:$0xf]
      %v1179 = vld [vmem:[%s1166 + $0x30] sm:$0xf]
      %v1180 = vld [vmem:[%s1166 + $0x34] sm:$0xf]
      %v1181 = vld [vmem:[%s1166 + $0x38] sm:$0xf]
      %v1182 = vld [vmem:[%s1166 + $0x3c] sm:$0xf]
      %v1183 = vld [vmem:[%s1166 + $0x40] sm:$0xf]
      %v1184 = vld [vmem:[%s1166 + $0x44] sm:$0xf]
      %v1185 = vld [vmem:[%s1166 + $0x48] sm:$0xf]
      %v1186 = vld [vmem:[%s1166 + $0x4c] sm:$0xf]
      %v1187 = vld [vmem:[%s1166 + $0x50] sm:$0xf]
      %v1188 = vld [vmem:[%s1166 + $0x54] sm:$0xf]
      %vm1201 = vcmask 1046528
      %v1202 = vrot.slane %v1162, 1
      %v1203 = vrot.slane %v708, 1
      %v1204 = vsel %vm1201, %v1202, %v1203
      %v1205 = vrot.slane %v1163, 1
      %v1206 = vrot.slane %v709, 1
      %v1207 = vsel %vm1201, %v1205, %v1206
      %v1208 = vrot.slane %v710, 1
      %v1209 = vsel %vm1201, %v1203, %v1208
      %v1210 = vrot.slane %v711, 1
      %v1211 = vsel %vm1201, %v1206, %v1210
      %v1212 = vrot.slane %v712, 1
      %v1213 = vsel %vm1201, %v1208, %v1212
      %v1214 = vrot.slane %v713, 1
      %v1215 = vsel %vm1201, %v1210, %v1214
      %v1216 = vrot.slane %v714, 1
      %v1217 = vsel %vm1201, %v1212, %v1216
      %v1218 = vrot.slane %v715, 1
      %v1219 = vsel %vm1201, %v1214, %v1218
      %v1220 = vrot.slane %v1164, 1
      %v1221 = vsel %vm1201, %v1216, %v1220
      %v1222 = vrot.slane %v1165, 1
      %v1223 = vsel %vm1201, %v1218, %v1222
      %v1251 = vunpack.c.l.b16 %v1167
      %v1252 = vunpack.c.l.b16 %v1168
      %v1253 = vunpack.c.l.b16 %v1169
      %v1254 = vunpack.c.l.b16 %v1170
      %v1255 = vunpack.c.l.b16 %v1171
      %v1256 = vunpack.c.l.b16 %v1172
      %v1257 = vunpack.c.l.b16 %v1173
      %v1258 = vunpack.c.l.b16 %v1174
      %v1259 = vunpack.c.l.b16 %v1175
      %v1260 = vunpack.c.l.b16 %v1176
      %v1261 = vunpack.c.l.b16 %v1177
      %v1262 = vunpack.c.l.b16 %v1178
      %v1263 = vunpack.c.l.b16 %v1179
      %v1264 = vunpack.c.l.b16 %v1180
      %v1265 = vunpack.c.l.b16 %v1181
      %v1266 = vunpack.c.l.b16 %v1182
      %v1267 = vunpack.c.l.b16 %v1183
      %v1268 = vunpack.c.l.b16 %v1184
      %v1269 = vunpack.c.l.b16 %v1185
      %v1270 = vunpack.c.l.b16 %v1186
      %v1271 = vunpack.c.l.b16 %v1187
      %v1272 = vunpack.c.l.b16 %v1188
      %v1273 = vpack.c.b16 %v1252, %v1251
      %v1274 = vpack.c.b16 %v1254, %v1253
      %v1275 = vpack.c.b16 %v1256, %v1255
      %v1276 = vpack.c.b16 %v1258, %v1257
      %v1277 = vpack.c.b16 %v1260, %v1259
      %v1278 = vpack.c.b16 %v1262, %v1261
      %v1279 = vpack.c.b16 %v1264, %v1263
      %v1280 = vpack.c.b16 %v1266, %v1265
      %v1281 = vpack.c.b16 %v1268, %v1267
      %v1282 = vpack.c.b16 %v1270, %v1269
      %v1283 = vpack.c.b16 %v1272, %v1271
      %v1296 = vsel %vm929, %v1207, 0
      %v1299 = vsel %vm929, %v1211, 0
      %v1302 = vsel %vm929, %v1215, 0
      %v1305 = vsel %vm929, %v1219, 0
      %v1308 = vsel %vm929, %v1223, 0
      %1310 = vmatpush.bf16.msra.mxu0 %v1280
      %1311 = vmatpush.bf16.msra.mxu0 %v1279
      %1312 = vmatpush.bf16.msra.mxu0 %v1278
      %1313 = vmatpush.bf16.msra.mxu0 %v1277
      %1314 = vmatpush.bf16.msra.mxu0 %v1276
      %1315 = vmatpush.bf16.msra.mxu0 %v1275
      %1316 = vmatpush.bf16.msra.mxu0 %v1274
      %1317 = vmatpush.bf16.msra.mxu0 %v1273
      %1318 = vmatmul.bf16.gmra.mxu0 %v1204
      %v1319 = vpop.f32.mrf.mxu0
      %v1320 = vadd.f32 0.0, %v1319
      %v1321 = vpop.f32.mrf.mxu0
      %v1322 = vadd.f32 0.0, %v1321
      %1323 = vmatmul.bf16.gmra.mxu0 %v1209
      %v1324 = vpop.f32.mrf.mxu0
      %v1325 = vadd.f32 0.0, %v1324
      %v1326 = vpop.f32.mrf.mxu0
      %v1327 = vadd.f32 0.0, %v1326
      %1328 = vmatmul.bf16.gmra.mxu0 %v1213
      %v1329 = vpop.f32.mrf.mxu0
      %v1330 = vadd.f32 0.0, %v1329
      %v1331 = vpop.f32.mrf.mxu0
      %v1332 = vadd.f32 0.0, %v1331
      %1333 = vmatmul.bf16.gmra.mxu0 %v1217
      %v1334 = vpop.f32.mrf.mxu0
      %v1335 = vadd.f32 0.0, %v1334
      %v1336 = vpop.f32.mrf.mxu0
      %v1337 = vadd.f32 0.0, %v1336
      %1338 = vmatmul.bf16.gmra.mxu0 %v1221
      %v1339 = vpop.f32.mrf.mxu0
      %v1340 = vadd.f32 0.0, %v1339
      %v1341 = vpop.f32.mrf.mxu0
      %v1342 = vadd.f32 0.0, %v1341
      %1343 = vdwg.mxu0
      %1344 = vmatpush.bf16.msra.mxu0 0
      %1345 = vmatpush.bf16.msra.mxu0 0
      %1346 = vmatpush.bf16.msra.mxu0 0
      %1347 = vmatpush.bf16.msra.mxu0 0
      %1348 = vmatpush.bf16.msra.mxu0 0
      %1349 = vmatpush.bf16.msra.mxu0 %v1283
      %1350 = vmatpush.bf16.msra.mxu0 %v1282
      %1351 = vmatpush.bf16.msra.mxu0 %v1281
      %1352 = vmatmul.bf16.gmra.mxu0 %v1296
      %v1353 = vpop.f32.mrf.mxu0
      %v1354 = vadd.f32 %v1320, %v1353
      %v1355 = vpop.f32.mrf.mxu0
      %v1356 = vadd.f32 %v1322, %v1355
      %1357 = vmatmul.bf16.gmra.mxu0 %v1299
      %v1358 = vpop.f32.mrf.mxu0
      %v1359 = vadd.f32 %v1325, %v1358
      %v1360 = vpop.f32.mrf.mxu0
      %v1361 = vadd.f32 %v1327, %v1360
      %1362 = vmatmul.bf16.gmra.mxu0 %v1302
      %v1363 = vpop.f32.mrf.mxu0
      %v1364 = vadd.f32 %v1330, %v1363
      %v1365 = vpop.f32.mrf.mxu0
      %v1366 = vadd.f32 %v1332, %v1365
      %1367 = vmatmul.bf16.gmra.mxu0 %v1305
      %v1368 = vpop.f32.mrf.mxu0
      %v1369 = vadd.f32 %v1335, %v1368
      %v1370 = vpop.f32.mrf.mxu0
      %v1371 = vadd.f32 %v1337, %v1370
      %1372 = vmatmul.bf16.gmra.mxu0 %v1308
      %v1373 = vpop.f32.mrf.mxu0
      %v1374 = vadd.f32 %v1340, %v1373
      %v1375 = vpop.f32.mrf.mxu0
      %v1376 = vadd.f32 %v1342, %v1375
      %1377 = vdwg.mxu0
      %v1378 = vadd.f32 %v1134, %v1354
      %v1379 = vadd.f32 %v1136, %v1356
      %v1380 = vadd.f32 %v1139, %v1359
      %v1381 = vadd.f32 %v1141, %v1361
      %v1382 = vadd.f32 %v1144, %v1364
      %v1383 = vadd.f32 %v1146, %v1366
      %v1384 = vadd.f32 %v1149, %v1369
      %v1385 = vadd.f32 %v1151, %v1371
      %v1386 = vadd.f32 %v1154, %v1374
      %v1387 = vadd.f32 %v1156, %v1376
      %v1388 = vld [vmem:[%s307 + $0x10] sm:$0xfc]
      %v1389 = vld [vmem:[%s307 + $0x18] sm:$0xfc]
      %v1390 = vld [vmem:[%s307 + $0x20] sm:$0xff]
      %v1391 = vld [vmem:[%s307 + $0x28] sm:$0xff]
      %v1392 = vld [vmem:[%s307 + $0x30] sm:$0xff]
      %v1393 = vld [vmem:[%s307 + $0x38] sm:$0xff]
      %v1394 = vld [vmem:[%s307 + $0x40] sm:$0xff]
      %v1395 = vld [vmem:[%s307 + $0x48] sm:$0xff]
      %v1396 = vld [vmem:[%s307 + $0x50] sm:$0xff]
      %v1397 = vld [vmem:[%s307 + $0x58] sm:$0xff]
      %v1398 = vld [vmem:[%s307 + $0x60] sm:$0xff]
      %v1399 = vld [vmem:[%s307 + $0x68] sm:$0xff]
      %v1400 = vld [vmem:[%s307 + $0x70] sm:$0xff]
      %v1401 = vld [vmem:[%s307 + $0x78] sm:$0xff]
      %v1402 = vld [vmem:[%s307 + $0x80] sm:$0xff]
      %v1403 = vld [vmem:[%s307 + $0x88] sm:$0xff]
      %v1404 = vld [vmem:[%s307 + $0x90] sm:$0xff]
      %v1405 = vld [vmem:[%s307 + $0x98] sm:$0xff]
      %v1406 = vld [vmem:[%s307 + $0xa0] sm:$0xff]
      %v1407 = vld [vmem:[%s307 + $0xa8] sm:$0xff]
      %v1408 = vld [vmem:[%s307 + $0xb0] sm:$0x3]
      %v1409 = vld [vmem:[%s307 + $0xb8] sm:$0x3]
      %v1410 = vpack.c.bf16 %v1390, %v1388
      %v1411 = vpack.c.bf16 %v1391, %v1389
      %v1412 = vpack.c.bf16 %v1394, %v1392
      %v1413 = vpack.c.bf16 %v1395, %v1393
      %v1414 = vpack.c.bf16 %v1398, %v1396
      %v1415 = vpack.c.bf16 %v1399, %v1397
      %v1416 = vpack.c.bf16 %v1402, %v1400
      %v1417 = vpack.c.bf16 %v1403, %v1401
      %v1418 = vpack.c.bf16 %v1406, %v1404
      %v1419 = vpack.c.bf16 %v1407, %v1405
      %v1420 = vpack.c.bf16 %v1408, %v1408
      %v1421 = vpack.c.bf16 %v1409, %v1409
      %s1422 = scalar_lea.vmem %s1, 264
      %v1423 = vld [vmem:[%s1422] sm:$0xf]
      %v1424 = vld [vmem:[%s1422 + $0x4] sm:$0xf]
      %v1425 = vld [vmem:[%s1422 + $0x8] sm:$0xf]
      %v1426 = vld [vmem:[%s1422 + $0xc] sm:$0xf]
      %v1427 = vld [vmem:[%s1422 + $0x10] sm:$0xf]
      %v1428 = vld [vmem:[%s1422 + $0x14] sm:$0xf]
      %v1429 = vld [vmem:[%s1422 + $0x18] sm:$0xf]
      %v1430 = vld [vmem:[%s1422 + $0x1c] sm:$0xf]
      %v1431 = vld [vmem:[%s1422 + $0x20] sm:$0xf]
      %v1432 = vld [vmem:[%s1422 + $0x24] sm:$0xf]
      %v1433 = vld [vmem:[%s1422 + $0x28] sm:$0xf]
      %v1434 = vld [vmem:[%s1422 + $0x2c] sm:$0xf]
      %v1435 = vld [vmem:[%s1422 + $0x30] sm:$0xf]
      %v1436 = vld [vmem:[%s1422 + $0x34] sm:$0xf]
      %v1437 = vld [vmem:[%s1422 + $0x38] sm:$0xf]
      %v1438 = vld [vmem:[%s1422 + $0x3c] sm:$0xf]
      %v1439 = vld [vmem:[%s1422 + $0x40] sm:$0xf]
      %v1440 = vld [vmem:[%s1422 + $0x44] sm:$0xf]
      %v1441 = vld [vmem:[%s1422 + $0x48] sm:$0xf]
      %v1442 = vld [vmem:[%s1422 + $0x4c] sm:$0xf]
      %v1443 = vld [vmem:[%s1422 + $0x50] sm:$0xf]
      %v1444 = vld [vmem:[%s1422 + $0x54] sm:$0xf]
      %v1457 = vrot.slane %v1410, 1
      %v1458 = vrot.slane %v1412, 1
      %v1459 = vsel %vm1201, %v1457, %v1458
      %v1460 = vrot.slane %v1411, 1
      %v1461 = vrot.slane %v1413, 1
      %v1462 = vsel %vm1201, %v1460, %v1461
      %v1463 = vrot.slane %v1414, 1
      %v1464 = vsel %vm1201, %v1458, %v1463
      %v1465 = vrot.slane %v1415, 1
      %v1466 = vsel %vm1201, %v1461, %v1465
      %v1467 = vrot.slane %v1416, 1
      %v1468 = vsel %vm1201, %v1463, %v1467
      %v1469 = vrot.slane %v1417, 1
      %v1470 = vsel %vm1201, %v1465, %v1469
      %v1471 = vrot.slane %v1418, 1
      %v1472 = vsel %vm1201, %v1467, %v1471
      %v1473 = vrot.slane %v1419, 1
      %v1474 = vsel %vm1201, %v1469, %v1473
      %v1475 = vrot.slane %v1420, 1
      %v1476 = vsel %vm1201, %v1471, %v1475
      %v1477 = vrot.slane %v1421, 1
      %v1478 = vsel %vm1201, %v1473, %v1477
      %v1506 = vunpack.c.l.b16 %v1423
      %v1507 = vunpack.c.l.b16 %v1424
      %v1508 = vunpack.c.l.b16 %v1425
      %v1509 = vunpack.c.l.b16 %v1426
      %v1510 = vunpack.c.l.b16 %v1427
      %v1511 = vunpack.c.l.b16 %v1428
      %v1512 = vunpack.c.l.b16 %v1429
      %v1513 = vunpack.c.l.b16 %v1430
      %v1514 = vunpack.c.l.b16 %v1431
      %v1515 = vunpack.c.l.b16 %v1432
      %v1516 = vunpack.c.l.b16 %v1433
      %v1517 = vunpack.c.l.b16 %v1434
      %v1518 = vunpack.c.l.b16 %v1435
      %v1519 = vunpack.c.l.b16 %v1436
      %v1520 = vunpack.c.l.b16 %v1437
      %v1521 = vunpack.c.l.b16 %v1438
      %v1522 = vunpack.c.l.b16 %v1439
      %v1523 = vunpack.c.l.b16 %v1440
      %v1524 = vunpack.c.l.b16 %v1441
      %v1525 = vunpack.c.l.b16 %v1442
      %v1526 = vunpack.c.l.b16 %v1443
      %v1527 = vunpack.c.l.b16 %v1444
      %v1528 = vpack.c.b16 %v1507, %v1506
      %v1529 = vpack.c.b16 %v1509, %v1508
      %v1530 = vpack.c.b16 %v1511, %v1510
      %v1531 = vpack.c.b16 %v1513, %v1512
      %v1532 = vpack.c.b16 %v1515, %v1514
      %v1533 = vpack.c.b16 %v1517, %v1516
      %v1534 = vpack.c.b16 %v1519, %v1518
      %v1535 = vpack.c.b16 %v1521, %v1520
      %v1536 = vpack.c.b16 %v1523, %v1522
      %v1537 = vpack.c.b16 %v1525, %v1524
      %v1538 = vpack.c.b16 %v1527, %v1526
      %v1551 = vsel %vm929, %v1462, 0
      %v1554 = vsel %vm929, %v1466, 0
      %v1557 = vsel %vm929, %v1470, 0
      %v1560 = vsel %vm929, %v1474, 0
      %v1563 = vsel %vm929, %v1478, 0
      %1565 = vmatpush.bf16.msra.mxu0 %v1535
      %1566 = vmatpush.bf16.msra.mxu0 %v1534
      %1567 = vmatpush.bf16.msra.mxu0 %v1533
      %1568 = vmatpush.bf16.msra.mxu0 %v1532
      %1569 = vmatpush.bf16.msra.mxu0 %v1531
      %1570 = vmatpush.bf16.msra.mxu0 %v1530
      %1571 = vmatpush.bf16.msra.mxu0 %v1529
      %1572 = vmatpush.bf16.msra.mxu0 %v1528
      %1573 = vmatmul.bf16.gmra.mxu0 %v1459
      %v1574 = vpop.f32.mrf.mxu0
      %v1575 = vadd.f32 0.0, %v1574
      %v1576 = vpop.f32.mrf.mxu0
      %v1577 = vadd.f32 0.0, %v1576
      %1578 = vmatmul.bf16.gmra.mxu0 %v1464
      %v1579 = vpop.f32.mrf.mxu0
      %v1580 = vadd.f32 0.0, %v1579
      %v1581 = vpop.f32.mrf.mxu0
      %v1582 = vadd.f32 0.0, %v1581
      %1583 = vmatmul.bf16.gmra.mxu0 %v1468
      %v1584 = vpop.f32.mrf.mxu0
      %v1585 = vadd.f32 0.0, %v1584
      %v1586 = vpop.f32.mrf.mxu0
      %v1587 = vadd.f32 0.0, %v1586
      %1588 = vmatmul.bf16.gmra.mxu0 %v1472
      %v1589 = vpop.f32.mrf.mxu0
      %v1590 = vadd.f32 0.0, %v1589
      %v1591 = vpop.f32.mrf.mxu0
      %v1592 = vadd.f32 0.0, %v1591
      %1593 = vmatmul.bf16.gmra.mxu0 %v1476
      %v1594 = vpop.f32.mrf.mxu0
      %v1595 = vadd.f32 0.0, %v1594
      %v1596 = vpop.f32.mrf.mxu0
      %v1597 = vadd.f32 0.0, %v1596
      %1598 = vdwg.mxu0
      %1599 = vmatpush.bf16.msra.mxu0 0
      %1600 = vmatpush.bf16.msra.mxu0 0
      %1601 = vmatpush.bf16.msra.mxu0 0
      %1602 = vmatpush.bf16.msra.mxu0 0
      %1603 = vmatpush.bf16.msra.mxu0 0
      %1604 = vmatpush.bf16.msra.mxu0 %v1538
      %1605 = vmatpush.bf16.msra.mxu0 %v1537
      %1606 = vmatpush.bf16.msra.mxu0 %v1536
      %1607 = vmatmul.bf16.gmra.mxu0 %v1551
      %v1608 = vpop.f32.mrf.mxu0
      %v1609 = vadd.f32 %v1575, %v1608
      %v1610 = vpop.f32.mrf.mxu0
      %v1611 = vadd.f32 %v1577, %v1610
      %1612 = vmatmul.bf16.gmra.mxu0 %v1554
      %v1613 = vpop.f32.mrf.mxu0
      %v1614 = vadd.f32 %v1580, %v1613
      %v1615 = vpop.f32.mrf.mxu0
      %v1616 = vadd.f32 %v1582, %v1615
      %1617 = vmatmul.bf16.gmra.mxu0 %v1557
      %v1618 = vpop.f32.mrf.mxu0
      %v1619 = vadd.f32 %v1585, %v1618
      %v1620 = vpop.f32.mrf.mxu0
      %v1621 = vadd.f32 %v1587, %v1620
      %1622 = vmatmul.bf16.gmra.mxu0 %v1560
      %v1623 = vpop.f32.mrf.mxu0
      %v1624 = vadd.f32 %v1590, %v1623
      %v1625 = vpop.f32.mrf.mxu0
      %v1626 = vadd.f32 %v1592, %v1625
      %1627 = vmatmul.bf16.gmra.mxu0 %v1563
      %v1628 = vpop.f32.mrf.mxu0
      %v1629 = vadd.f32 %v1595, %v1628
      %v1630 = vpop.f32.mrf.mxu0
      %v1631 = vadd.f32 %v1597, %v1630
      %1632 = vdwg.mxu0
      %v1633 = vadd.f32 %v1378, %v1609
      %v1634 = vadd.f32 %v1379, %v1611
      %v1635 = vadd.f32 %v1380, %v1614
      %v1636 = vadd.f32 %v1381, %v1616
      %v1637 = vadd.f32 %v1382, %v1619
      %v1638 = vadd.f32 %v1383, %v1621
      %v1639 = vadd.f32 %v1384, %v1624
      %v1640 = vadd.f32 %v1385, %v1626
      %v1641 = vadd.f32 %v1386, %v1629
      %v1642 = vadd.f32 %v1387, %v1631
      %v1643 = vld [vmem:[%s307 + $0x10] sm:$0xf8]
      %v1644 = vld [vmem:[%s307 + $0x18] sm:$0xf8]
      %v1645 = vld [vmem:[%s307 + $0xb0] sm:$0x7]
      %v1646 = vld [vmem:[%s307 + $0xb8] sm:$0x7]
      %v1647 = vpack.c.bf16 %v1390, %v1643
      %v1648 = vpack.c.bf16 %v1391, %v1644
      %v1649 = vpack.c.bf16 %v1645, %v1645
      %v1650 = vpack.c.bf16 %v1646, %v1646
      %s1651 = scalar_lea.vmem %s1, 352
      %v1652 = vld [vmem:[%s1651] sm:$0xf]
      %v1653 = vld [vmem:[%s1651 + $0x4] sm:$0xf]
      %v1654 = vld [vmem:[%s1651 + $0x8] sm:$0xf]
      %v1655 = vld [vmem:[%s1651 + $0xc] sm:$0xf]
      %v1656 = vld [vmem:[%s1651 + $0x10] sm:$0xf]
      %v1657 = vld [vmem:[%s1651 + $0x14] sm:$0xf]
      %v1658 = vld [vmem:[%s1651 + $0x18] sm:$0xf]
      %v1659 = vld [vmem:[%s1651 + $0x1c] sm:$0xf]
      %v1660 = vld [vmem:[%s1651 + $0x20] sm:$0xf]
      %v1661 = vld [vmem:[%s1651 + $0x24] sm:$0xf]
      %v1662 = vld [vmem:[%s1651 + $0x28] sm:$0xf]
      %v1663 = vld [vmem:[%s1651 + $0x2c] sm:$0xf]
      %v1664 = vld [vmem:[%s1651 + $0x30] sm:$0xf]
      %v1665 = vld [vmem:[%s1651 + $0x34] sm:$0xf]
      %v1666 = vld [vmem:[%s1651 + $0x38] sm:$0xf]
      %v1667 = vld [vmem:[%s1651 + $0x3c] sm:$0xf]
      %v1668 = vld [vmem:[%s1651 + $0x40] sm:$0xf]
      %v1669 = vld [vmem:[%s1651 + $0x44] sm:$0xf]
      %v1670 = vld [vmem:[%s1651 + $0x48] sm:$0xf]
      %v1671 = vld [vmem:[%s1651 + $0x4c] sm:$0xf]
      %v1672 = vld [vmem:[%s1651 + $0x50] sm:$0xf]
      %v1673 = vld [vmem:[%s1651 + $0x54] sm:$0xf]
      %vm1674 = vsmask.f32 6400
      %v1676 = vshrl.u32 %v1647, 16
      %v1678 = vrot.slane %v1676, 1
      %v1679 = vshll.u32 %v1647, 16
      %v1681 = vrot.slane %v1679, 2
      %v1682 = vor.u32 %v1678, %v1681
      %v1684 = vshrl.u32 %v1412, 16
      %v1686 = vrot.slane %v1684, 1
      %v1687 = vshll.u32 %v1412, 16
      %v1689 = vrot.slane %v1687, 2
      %v1690 = vor.u32 %v1686, %v1689
      %v1691 = vsel %vm1674, %v1682, %v1690
      %v1693 = vshrl.u32 %v1648, 16
      %v1695 = vrot.slane %v1693, 1
      %v1696 = vshll.u32 %v1648, 16
      %v1698 = vrot.slane %v1696, 2
      %v1699 = vor.u32 %v1695, %v1698
      %v1701 = vshrl.u32 %v1413, 16
      %v1703 = vrot.slane %v1701, 1
      %v1704 = vshll.u32 %v1413, 16
      %v1706 = vrot.slane %v1704, 2
      %v1707 = vor.u32 %v1703, %v1706
      %v1708 = vsel %vm1674, %v1699, %v1707
      %v1710 = vshrl.u32 %v1414, 16
      %v1712 = vrot.slane %v1710, 1
      %v1713 = vshll.u32 %v1414, 16
      %v1715 = vrot.slane %v1713, 2
      %v1716 = vor.u32 %v1712, %v1715
      %v1717 = vsel %vm1674, %v1690, %v1716
      %v1719 = vshrl.u32 %v1415, 16
      %v1721 = vrot.slane %v1719, 1
      %v1722 = vshll.u32 %v1415, 16
      %v1724 = vrot.slane %v1722, 2
      %v1725 = vor.u32 %v1721, %v1724
      %v1726 = vsel %vm1674, %v1707, %v1725
      %v1728 = vshrl.u32 %v1416, 16
      %v1730 = vrot.slane %v1728, 1
      %v1731 = vshll.u32 %v1416, 16
      %v1733 = vrot.slane %v1731, 2
      %v1734 = vor.u32 %v1730, %v1733
      %v1735 = vsel %vm1674, %v1716, %v1734
      %v1737 = vshrl.u32 %v1417, 16
      %v1739 = vrot.slane %v1737, 1
      %v1740 = vshll.u32 %v1417, 16
      %v1742 = vrot.slane %v1740, 2
      %v1743 = vor.u32 %v1739, %v1742
      %v1744 = vsel %vm1674, %v1725, %v1743
      %v1746 = vshrl.u32 %v1418, 16
      %v1748 = vrot.slane %v1746, 1
      %v1749 = vshll.u32 %v1418, 16
      %v1751 = vrot.slane %v1749, 2
      %v1752 = vor.u32 %v1748, %v1751
      %v1753 = vsel %vm1674, %v1734, %v1752
      %v1755 = vshrl.u32 %v1419, 16
      %v1757 = vrot.slane %v1755, 1
      %v1758 = vshll.u32 %v1419, 16
      %v1760 = vrot.slane %v1758, 2
      %v1761 = vor.u32 %v1757, %v1760
      %v1762 = vsel %vm1674, %v1743, %v1761
      %v1764 = vshrl.u32 %v1649, 16
      %v1766 = vrot.slane %v1764, 1
      %v1767 = vshll.u32 %v1649, 16
      %v1769 = vrot.slane %v1767, 2
      %v1770 = vor.u32 %v1766, %v1769
      %v1771 = vsel %vm1674, %v1752, %v1770
      %v1773 = vshrl.u32 %v1650, 16
      %v1775 = vrot.slane %v1773, 1
      %v1776 = vshll.u32 %v1650, 16
      %v1778 = vrot.slane %v1776, 2
      %v1779 = vor.u32 %v1775, %v1778
      %v1780 = vsel %vm1674, %v1761, %v1779
      %v1808 = vunpack.c.l.b16 %v1652
      %v1809 = vunpack.c.l.b16 %v1653
      %v1810 = vunpack.c.l.b16 %v1654
      %v1811 = vunpack.c.l.b16 %v1655
      %v1812 = vunpack.c.l.b16 %v1656
      %v1813 = vunpack.c.l.b16 %v1657
      %v1814 = vunpack.c.l.b16 %v1658
      %v1815 = vunpack.c.l.b16 %v1659
      %v1816 = vunpack.c.l.b16 %v1660
      %v1817 = vunpack.c.l.b16 %v1661
      %v1818 = vunpack.c.l.b16 %v1662
      %v1819 = vunpack.c.l.b16 %v1663
      %v1820 = vunpack.c.l.b16 %v1664
      %v1821 = vunpack.c.l.b16 %v1665
      %v1822 = vunpack.c.l.b16 %v1666
      %v1823 = vunpack.c.l.b16 %v1667
      %v1824 = vunpack.c.l.b16 %v1668
      %v1825 = vunpack.c.l.b16 %v1669
      %v1826 = vunpack.c.l.b16 %v1670
      %v1827 = vunpack.c.l.b16 %v1671
      %v1828 = vunpack.c.l.b16 %v1672
      %v1829 = vunpack.c.l.b16 %v1673
      %v1830 = vpack.c.b16 %v1809, %v1808
      %v1831 = vpack.c.b16 %v1811, %v1810
      %v1832 = vpack.c.b16 %v1813, %v1812
      %v1833 = vpack.c.b16 %v1815, %v1814
      %v1834 = vpack.c.b16 %v1817, %v1816
      %v1835 = vpack.c.b16 %v1819, %v1818
      %v1836 = vpack.c.b16 %v1821, %v1820
      %v1837 = vpack.c.b16 %v1823, %v1822
      %v1838 = vpack.c.b16 %v1825, %v1824
      %v1839 = vpack.c.b16 %v1827, %v1826
      %v1840 = vpack.c.b16 %v1829, %v1828
      %v1853 = vsel %vm929, %v1708, 0
      %v1856 = vsel %vm929, %v1726, 0
      %v1859 = vsel %vm929, %v1744, 0
      %v1862 = vsel %vm929, %v1762, 0
      %v1865 = vsel %vm929, %v1780, 0
      %1867 = vmatpush.bf16.msra.mxu0 %v1837
      %1868 = vmatpush.bf16.msra.mxu0 %v1836
      %1869 = vmatpush.bf16.msra.mxu0 %v1835
      %1870 = vmatpush.bf16.msra.mxu0 %v1834
      %1871 = vmatpush.bf16.msra.mxu0 %v1833
      %1872 = vmatpush.bf16.msra.mxu0 %v1832
      %1873 = vmatpush.bf16.msra.mxu0 %v1831
      %1874 = vmatpush.bf16.msra.mxu0 %v1830
      %1875 = vmatmul.bf16.gmra.mxu0 %v1691
      %v1876 = vpop.f32.mrf.mxu0
      %v1877 = vadd.f32 0.0, %v1876
      %v1878 = vpop.f32.mrf.mxu0
      %v1879 = vadd.f32 0.0, %v1878
      %1880 = vmatmul.bf16.gmra.mxu0 %v1717
      %v1881 = vpop.f32.mrf.mxu0
      %v1882 = vadd.f32 0.0, %v1881
      %v1883 = vpop.f32.mrf.mxu0
      %v1884 = vadd.f32 0.0, %v1883
      %1885 = vmatmul.bf16.gmra.mxu0 %v1735
      %v1886 = vpop.f32.mrf.mxu0
      %v1887 = vadd.f32 0.0, %v1886
      %v1888 = vpop.f32.mrf.mxu0
      %v1889 = vadd.f32 0.0, %v1888
      %1890 = vmatmul.bf16.gmra.mxu0 %v1753
      %v1891 = vpop.f32.mrf.mxu0
      %v1892 = vadd.f32 0.0, %v1891
      %v1893 = vpop.f32.mrf.mxu0
      %v1894 = vadd.f32 0.0, %v1893
      %1895 = vmatmul.bf16.gmra.mxu0 %v1771
      %v1896 = vpop.f32.mrf.mxu0
      %v1897 = vadd.f32 0.0, %v1896
      %v1898 = vpop.f32.mrf.mxu0
      %v1899 = vadd.f32 0.0, %v1898
      %1900 = vdwg.mxu0
      %1901 = vmatpush.bf16.msra.mxu0 0
      %1902 = vmatpush.bf16.msra.mxu0 0
      %1903 = vmatpush.bf16.msra.mxu0 0
      %1904 = vmatpush.bf16.msra.mxu0 0
      %1905 = vmatpush.bf16.msra.mxu0 0
      %1906 = vmatpush.bf16.msra.mxu0 %v1840
      %1907 = vmatpush.bf16.msra.mxu0 %v1839
      %1908 = vmatpush.bf16.msra.mxu0 %v1838
      %1909 = vmatmul.bf16.gmra.mxu0 %v1853
      %v1910 = vpop.f32.mrf.mxu0
      %v1911 = vadd.f32 %v1877, %v1910
      %v1912 = vpop.f32.mrf.mxu0
      %v1913 = vadd.f32 %v1879, %v1912
      %1914 = vmatmul.bf16.gmra.mxu0 %v1856
      %v1915 = vpop.f32.mrf.mxu0
      %v1916 = vadd.f32 %v1882, %v1915
      %v1917 = vpop.f32.mrf.mxu0
      %v1918 = vadd.f32 %v1884, %v1917
      %1919 = vmatmul.bf16.gmra.mxu0 %v1859
      %v1920 = vpop.f32.mrf.mxu0
      %v1921 = vadd.f32 %v1887, %v1920
      %v1922 = vpop.f32.mrf.mxu0
      %v1923 = vadd.f32 %v1889, %v1922
      %1924 = vmatmul.bf16.gmra.mxu0 %v1862
      %v1925 = vpop.f32.mrf.mxu0
      %v1926 = vadd.f32 %v1892, %v1925
      %v1927 = vpop.f32.mrf.mxu0
      %v1928 = vadd.f32 %v1894, %v1927
      %1929 = vmatmul.bf16.gmra.mxu0 %v1865
      %v1930 = vpop.f32.mrf.mxu0
      %v1931 = vadd.f32 %v1897, %v1930
      %v1932 = vpop.f32.mrf.mxu0
      %v1933 = vadd.f32 %v1899, %v1932
      %1934 = vdwg.mxu0
      %v1935 = vadd.f32 %v1633, %v1911
      %v1936 = vadd.f32 %v1634, %v1913
      %v1937 = vadd.f32 %v1635, %v1916
      %v1938 = vadd.f32 %v1636, %v1918
      %v1939 = vadd.f32 %v1637, %v1921
      %v1940 = vadd.f32 %v1638, %v1923
      %v1941 = vadd.f32 %v1639, %v1926
      %v1942 = vadd.f32 %v1640, %v1928
      %v1943 = vadd.f32 %v1641, %v1931
      %v1944 = vadd.f32 %v1642, %v1933
      %v1945 = vld [vmem:[%s307 + $0x10] sm:$0xf0]
      %v1946 = vld [vmem:[%s307 + $0x18] sm:$0xf0]
      %v1947 = vld [vmem:[%s307 + $0xb0] sm:$0xf]
      %v1948 = vld [vmem:[%s307 + $0xb8] sm:$0xf]
      %v1949 = vpack.c.bf16 %v1390, %v1945
      %v1950 = vpack.c.bf16 %v1391, %v1946
      %v1951 = vpack.c.bf16 %v1947, %v1947
      %v1952 = vpack.c.bf16 %v1948, %v1948
      %s1953 = scalar_lea.vmem %s1, 440
      %v1954 = vld [vmem:[%s1953] sm:$0xf]
      %v1955 = vld [vmem:[%s1953 + $0x4] sm:$0xf]
      %v1956 = vld [vmem:[%s1953 + $0x8] sm:$0xf]
      %v1957 = vld [vmem:[%s1953 + $0xc] sm:$0xf]
      %v1958 = vld [vmem:[%s1953 + $0x10] sm:$0xf]
      %v1959 = vld [vmem:[%s1953 + $0x14] sm:$0xf]
      %v1960 = vld [vmem:[%s1953 + $0x18] sm:$0xf]
      %v1961 = vld [vmem:[%s1953 + $0x1c] sm:$0xf]
      %v1962 = vld [vmem:[%s1953 + $0x20] sm:$0xf]
      %v1963 = vld [vmem:[%s1953 + $0x24] sm:$0xf]
      %v1964 = vld [vmem:[%s1953 + $0x28] sm:$0xf]
      %v1965 = vld [vmem:[%s1953 + $0x2c] sm:$0xf]
      %v1966 = vld [vmem:[%s1953 + $0x30] sm:$0xf]
      %v1967 = vld [vmem:[%s1953 + $0x34] sm:$0xf]
      %v1968 = vld [vmem:[%s1953 + $0x38] sm:$0xf]
      %v1969 = vld [vmem:[%s1953 + $0x3c] sm:$0xf]
      %v1970 = vld [vmem:[%s1953 + $0x40] sm:$0xf]
      %v1971 = vld [vmem:[%s1953 + $0x44] sm:$0xf]
      %v1972 = vld [vmem:[%s1953 + $0x48] sm:$0xf]
      %v1973 = vld [vmem:[%s1953 + $0x4c] sm:$0xf]
      %v1974 = vld [vmem:[%s1953 + $0x50] sm:$0xf]
      %v1975 = vld [vmem:[%s1953 + $0x54] sm:$0xf]
      %vm1980 = vcmask 1045504
      %v1981 = vrot.slane %v1949, 2
      %v1982 = vrot.slane %v1412, 2
      %v1983 = vsel %vm1980, %v1981, %v1982
      %v1984 = vrot.slane %v1950, 2
      %v1985 = vrot.slane %v1413, 2
      %v1986 = vsel %vm1980, %v1984, %v1985
      %v1987 = vrot.slane %v1414, 2
      %v1988 = vsel %vm1980, %v1982, %v1987
      %v1989 = vrot.slane %v1415, 2
      %v1990 = vsel %vm1980, %v1985, %v1989
      %v1991 = vrot.slane %v1416, 2
      %v1992 = vsel %vm1980, %v1987, %v1991
      %v1993 = vrot.slane %v1417, 2
      %v1994 = vsel %vm1980, %v1989, %v1993
      %v1995 = vrot.slane %v1418, 2
      %v1996 = vsel %vm1980, %v1991, %v1995
      %v1997 = vrot.slane %v1419, 2
      %v1998 = vsel %vm1980, %v1993, %v1997
      %v1999 = vrot.slane %v1951, 2
      %v2000 = vsel %vm1980, %v1995, %v1999
      %v2001 = vrot.slane %v1952, 2
      %v2002 = vsel %vm1980, %v1997, %v2001
      %v2030 = vunpack.c.l.b16 %v1954
      %v2031 = vunpack.c.l.b16 %v1955
      %v2032 = vunpack.c.l.b16 %v1956
      %v2033 = vunpack.c.l.b16 %v1957
      %v2034 = vunpack.c.l.b16 %v1958
      %v2035 = vunpack.c.l.b16 %v1959
      %v2036 = vunpack.c.l.b16 %v1960
      %v2037 = vunpack.c.l.b16 %v1961
      %v2038 = vunpack.c.l.b16 %v1962
      %v2039 = vunpack.c.l.b16 %v1963
      %v2040 = vunpack.c.l.b16 %v1964
      %v2041 = vunpack.c.l.b16 %v1965
      %v2042 = vunpack.c.l.b16 %v1966
      %v2043 = vunpack.c.l.b16 %v1967
      %v2044 = vunpack.c.l.b16 %v1968
      %v2045 = vunpack.c.l.b16 %v1969
      %v2046 = vunpack.c.l.b16 %v1970
      %v2047 = vunpack.c.l.b16 %v1971
      %v2048 = vunpack.c.l.b16 %v1972
      %v2049 = vunpack.c.l.b16 %v1973
      %v2050 = vunpack.c.l.b16 %v1974
      %v2051 = vunpack.c.l.b16 %v1975
      %v2052 = vpack.c.b16 %v2031, %v2030
      %v2053 = vpack.c.b16 %v2033, %v2032
      %v2054 = vpack.c.b16 %v2035, %v2034
      %v2055 = vpack.c.b16 %v2037, %v2036
      %v2056 = vpack.c.b16 %v2039, %v2038
      %v2057 = vpack.c.b16 %v2041, %v2040
      %v2058 = vpack.c.b16 %v2043, %v2042
      %v2059 = vpack.c.b16 %v2045, %v2044
      %v2060 = vpack.c.b16 %v2047, %v2046
      %v2061 = vpack.c.b16 %v2049, %v2048
      %v2062 = vpack.c.b16 %v2051, %v2050
      %v2075 = vsel %vm929, %v1986, 0
      %v2078 = vsel %vm929, %v1990, 0
      %v2081 = vsel %vm929, %v1994, 0
      %v2084 = vsel %vm929, %v1998, 0
      %v2087 = vsel %vm929, %v2002, 0
      %2089 = vmatpush.bf16.msra.mxu0 %v2059
      %2090 = vmatpush.bf16.msra.mxu0 %v2058
      %2091 = vmatpush.bf16.msra.mxu0 %v2057
      %2092 = vmatpush.bf16.msra.mxu0 %v2056
      %2093 = vmatpush.bf16.msra.mxu0 %v2055
      %2094 = vmatpush.bf16.msra.mxu0 %v2054
      %2095 = vmatpush.bf16.msra.mxu0 %v2053
      %2096 = vmatpush.bf16.msra.mxu0 %v2052
      %2097 = vmatmul.bf16.gmra.mxu0 %v1983
      %v2098 = vpop.f32.mrf.mxu0
      %v2099 = vadd.f32 0.0, %v2098
      %v2100 = vpop.f32.mrf.mxu0
      %v2101 = vadd.f32 0.0, %v2100
      %2102 = vmatmul.bf16.gmra.mxu0 %v1988
      %v2103 = vpop.f32.mrf.mxu0
      %v2104 = vadd.f32 0.0, %v2103
      %v2105 = vpop.f32.mrf.mxu0
      %v2106 = vadd.f32 0.0, %v2105
      %2107 = vmatmul.bf16.gmra.mxu0 %v1992
      %v2108 = vpop.f32.mrf.mxu0
      %v2109 = vadd.f32 0.0, %v2108
      %v2110 = vpop.f32.mrf.mxu0
      %v2111 = vadd.f32 0.0, %v2110
      %2112 = vmatmul.bf16.gmra.mxu0 %v1996
      %v2113 = vpop.f32.mrf.mxu0
      %v2114 = vadd.f32 0.0, %v2113
      %v2115 = vpop.f32.mrf.mxu0
      %v2116 = vadd.f32 0.0, %v2115
      %2117 = vmatmul.bf16.gmra.mxu0 %v2000
      %v2118 = vpop.f32.mrf.mxu0
      %v2119 = vadd.f32 0.0, %v2118
      %v2120 = vpop.f32.mrf.mxu0
      %v2121 = vadd.f32 0.0, %v2120
      %2122 = vdwg.mxu0
      %2123 = vmatpush.bf16.msra.mxu0 0
      %2124 = vmatpush.bf16.msra.mxu0 0
      %2125 = vmatpush.bf16.msra.mxu0 0
      %2126 = vmatpush.bf16.msra.mxu0 0
      %2127 = vmatpush.bf16.msra.mxu0 0
      %2128 = vmatpush.bf16.msra.mxu0 %v2062
      %2129 = vmatpush.bf16.msra.mxu0 %v2061
      %2130 = vmatpush.bf16.msra.mxu0 %v2060
      %2131 = vmatmul.bf16.gmra.mxu0 %v2075
      %v2132 = vpop.f32.mrf.mxu0
      %v2133 = vadd.f32 %v2099, %v2132
      %v2134 = vpop.f32.mrf.mxu0
      %v2135 = vadd.f32 %v2101, %v2134
      %2136 = vmatmul.bf16.gmra.mxu0 %v2078
      %v2137 = vpop.f32.mrf.mxu0
      %v2138 = vadd.f32 %v2104, %v2137
      %v2139 = vpop.f32.mrf.mxu0
      %v2140 = vadd.f32 %v2106, %v2139
      %2141 = vmatmul.bf16.gmra.mxu0 %v2081
      %v2142 = vpop.f32.mrf.mxu0
      %v2143 = vadd.f32 %v2109, %v2142
      %v2144 = vpop.f32.mrf.mxu0
      %v2145 = vadd.f32 %v2111, %v2144
      %2146 = vmatmul.bf16.gmra.mxu0 %v2084
      %v2147 = vpop.f32.mrf.mxu0
      %v2148 = vadd.f32 %v2114, %v2147
      %v2149 = vpop.f32.mrf.mxu0
      %v2150 = vadd.f32 %v2116, %v2149
      %2151 = vmatmul.bf16.gmra.mxu0 %v2087
      %v2152 = vpop.f32.mrf.mxu0
      %v2153 = vadd.f32 %v2119, %v2152
      %v2154 = vpop.f32.mrf.mxu0
      %v2155 = vadd.f32 %v2121, %v2154
      %2156 = vdwg.mxu0
      %v2157 = vadd.f32 %v1935, %v2133
      %v2158 = vadd.f32 %v1936, %v2135
      %v2159 = vadd.f32 %v1937, %v2138
      %v2160 = vadd.f32 %v1938, %v2140
      %v2161 = vadd.f32 %v1939, %v2143
      %v2162 = vadd.f32 %v1940, %v2145
      %v2163 = vadd.f32 %v1941, %v2148
      %v2164 = vadd.f32 %v1942, %v2150
      %v2165 = vadd.f32 %v1943, %v2153
      %v2166 = vadd.f32 %v1944, %v2155
      %v2167 = vld [vmem:[%s307 + $0x20] sm:$0xf0]
      %v2168 = vld [vmem:[%s307 + $0x28] sm:$0xf0]
      %v2169 = vld [vmem:[%s307 + $0x30] sm:$0xff]
      %v2170 = vld [vmem:[%s307 + $0x38] sm:$0xff]
      %v2171 = vld [vmem:[%s307 + $0x40] sm:$0xff]
      %v2172 = vld [vmem:[%s307 + $0x48] sm:$0xff]
      %v2173 = vld [vmem:[%s307 + $0x50] sm:$0xff]
      %v2174 = vld [vmem:[%s307 + $0x58] sm:$0xff]
      %v2175 = vld [vmem:[%s307 + $0x60] sm:$0xff]
      %v2176 = vld [vmem:[%s307 + $0x68] sm:$0xff]
      %v2177 = vld [vmem:[%s307 + $0x70] sm:$0xff]
      %v2178 = vld [vmem:[%s307 + $0x78] sm:$0xff]
      %v2179 = vld [vmem:[%s307 + $0x80] sm:$0xff]
      %v2180 = vld [vmem:[%s307 + $0x88] sm:$0xff]
      %v2181 = vld [vmem:[%s307 + $0x90] sm:$0xff]
      %v2182 = vld [vmem:[%s307 + $0x98] sm:$0xff]
      %v2183 = vld [vmem:[%s307 + $0xa0] sm:$0xff]
      %v2184 = vld [vmem:[%s307 + $0xa8] sm:$0xff]
      %v2185 = vld [vmem:[%s307 + $0xb0] sm:$0xff]
      %v2186 = vld [vmem:[%s307 + $0xb8] sm:$0xff]
      %v2187 = vld [vmem:[%s307 + $0xc0] sm:$0xf]
      %v2188 = vld [vmem:[%s307 + $0xc8] sm:$0xf]
      %v2189 = vpack.c.bf16 %v2169, %v2167
      %v2190 = vpack.c.bf16 %v2170, %v2168
      %v2191 = vpack.c.bf16 %v2173, %v2171
      %v2192 = vpack.c.bf16 %v2174, %v2172
      %v2193 = vpack.c.bf16 %v2177, %v2175
      %v2194 = vpack.c.bf16 %v2178, %v2176
      %v2195 = vpack.c.bf16 %v2181, %v2179
      %v2196 = vpack.c.bf16 %v2182, %v2180
      %v2197 = vpack.c.bf16 %v2185, %v2183
      %v2198 = vpack.c.bf16 %v2186, %v2184
      %v2199 = vpack.c.bf16 %v2187, %v2187
      %v2200 = vpack.c.bf16 %v2188, %v2188
      %s2201 = scalar_lea.vmem %s1, 528
      %v2202 = vld [vmem:[%s2201] sm:$0xf]
      %v2203 = vld [vmem:[%s2201 + $0x4] sm:$0xf]
      %v2204 = vld [vmem:[%s2201 + $0x8] sm:$0xf]
      %v2205 = vld [vmem:[%s2201 + $0xc] sm:$0xf]
      %v2206 = vld [vmem:[%s2201 + $0x10] sm:$0xf]
      %v2207 = vld [vmem:[%s2201 + $0x14] sm:$0xf]
      %v2208 = vld [vmem:[%s2201 + $0x18] sm:$0xf]
      %v2209 = vld [vmem:[%s2201 + $0x1c] sm:$0xf]
      %v2210 = vld [vmem:[%s2201 + $0x20] sm:$0xf]
      %v2211 = vld [vmem:[%s2201 + $0x24] sm:$0xf]
      %v2212 = vld [vmem:[%s2201 + $0x28] sm:$0xf]
      %v2213 = vld [vmem:[%s2201 + $0x2c] sm:$0xf]
      %v2214 = vld [vmem:[%s2201 + $0x30] sm:$0xf]
      %v2215 = vld [vmem:[%s2201 + $0x34] sm:$0xf]
      %v2216 = vld [vmem:[%s2201 + $0x38] sm:$0xf]
      %v2217 = vld [vmem:[%s2201 + $0x3c] sm:$0xf]
      %v2218 = vld [vmem:[%s2201 + $0x40] sm:$0xf]
      %v2219 = vld [vmem:[%s2201 + $0x44] sm:$0xf]
      %v2220 = vld [vmem:[%s2201 + $0x48] sm:$0xf]
      %v2221 = vld [vmem:[%s2201 + $0x4c] sm:$0xf]
      %v2222 = vld [vmem:[%s2201 + $0x50] sm:$0xf]
      %v2223 = vld [vmem:[%s2201 + $0x54] sm:$0xf]
      %v2236 = vrot.slane %v2189, 2
      %v2237 = vrot.slane %v2191, 2
      %v2238 = vsel %vm1980, %v2236, %v2237
      %v2239 = vrot.slane %v2190, 2
      %v2240 = vrot.slane %v2192, 2
      %v2241 = vsel %vm1980, %v2239, %v2240
      %v2242 = vrot.slane %v2193, 2
      %v2243 = vsel %vm1980, %v2237, %v2242
      %v2244 = vrot.slane %v2194, 2
      %v2245 = vsel %vm1980, %v2240, %v2244
      %v2246 = vrot.slane %v2195, 2
      %v2247 = vsel %vm1980, %v2242, %v2246
      %v2248 = vrot.slane %v2196, 2
      %v2249 = vsel %vm1980, %v2244, %v2248
      %v2250 = vrot.slane %v2197, 2
      %v2251 = vsel %vm1980, %v2246, %v2250
      %v2252 = vrot.slane %v2198, 2
      %v2253 = vsel %vm1980, %v2248, %v2252
      %v2254 = vrot.slane %v2199, 2
      %v2255 = vsel %vm1980, %v2250, %v2254
      %v2256 = vrot.slane %v2200, 2
      %v2257 = vsel %vm1980, %v2252, %v2256
      %v2285 = vunpack.c.l.b16 %v2202
      %v2286 = vunpack.c.l.b16 %v2203
      %v2287 = vunpack.c.l.b16 %v2204
      %v2288 = vunpack.c.l.b16 %v2205
      %v2289 = vunpack.c.l.b16 %v2206
      %v2290 = vunpack.c.l.b16 %v2207
      %v2291 = vunpack.c.l.b16 %v2208
      %v2292 = vunpack.c.l.b16 %v2209
      %v2293 = vunpack.c.l.b16 %v2210
      %v2294 = vunpack.c.l.b16 %v2211
      %v2295 = vunpack.c.l.b16 %v2212
      %v2296 = vunpack.c.l.b16 %v2213
      %v2297 = vunpack.c.l.b16 %v2214
      %v2298 = vunpack.c.l.b16 %v2215
      %v2299 = vunpack.c.l.b16 %v2216
      %v2300 = vunpack.c.l.b16 %v2217
      %v2301 = vunpack.c.l.b16 %v2218
      %v2302 = vunpack.c.l.b16 %v2219
      %v2303 = vunpack.c.l.b16 %v2220
      %v2304 = vunpack.c.l.b16 %v2221
      %v2305 = vunpack.c.l.b16 %v2222
      %v2306 = vunpack.c.l.b16 %v2223
      %v2307 = vpack.c.b16 %v2286, %v2285
      %v2308 = vpack.c.b16 %v2288, %v2287
      %v2309 = vpack.c.b16 %v2290, %v2289
      %v2310 = vpack.c.b16 %v2292, %v2291
      %v2311 = vpack.c.b16 %v2294, %v2293
      %v2312 = vpack.c.b16 %v2296, %v2295
      %v2313 = vpack.c.b16 %v2298, %v2297
      %v2314 = vpack.c.b16 %v2300, %v2299
      %v2315 = vpack.c.b16 %v2302, %v2301
      %v2316 = vpack.c.b16 %v2304, %v2303
      %v2317 = vpack.c.b16 %v2306, %v2305
      %v2330 = vsel %vm929, %v2241, 0
      %v2333 = vsel %vm929, %v2245, 0
      %v2336 = vsel %vm929, %v2249, 0
      %v2339 = vsel %vm929, %v2253, 0
      %v2342 = vsel %vm929, %v2257, 0
      %2344 = vmatpush.bf16.msra.mxu0 %v2314
      %2345 = vmatpush.bf16.msra.mxu0 %v2313
      %2346 = vmatpush.bf16.msra.mxu0 %v2312
      %2347 = vmatpush.bf16.msra.mxu0 %v2311
      %2348 = vmatpush.bf16.msra.mxu0 %v2310
      %2349 = vmatpush.bf16.msra.mxu0 %v2309
      %2350 = vmatpush.bf16.msra.mxu0 %v2308
      %2351 = vmatpush.bf16.msra.mxu0 %v2307
      %2352 = vmatmul.bf16.gmra.mxu0 %v2238
      %v2353 = vpop.f32.mrf.mxu0
      %v2354 = vadd.f32 0.0, %v2353
      %v2355 = vpop.f32.mrf.mxu0
      %v2356 = vadd.f32 0.0, %v2355
      %2357 = vmatmul.bf16.gmra.mxu0 %v2243
      %v2358 = vpop.f32.mrf.mxu0
      %v2359 = vadd.f32 0.0, %v2358
      %v2360 = vpop.f32.mrf.mxu0
      %v2361 = vadd.f32 0.0, %v2360
      %2362 = vmatmul.bf16.gmra.mxu0 %v2247
      %v2363 = vpop.f32.mrf.mxu0
      %v2364 = vadd.f32 0.0, %v2363
      %v2365 = vpop.f32.mrf.mxu0
      %v2366 = vadd.f32 0.0, %v2365
      %2367 = vmatmul.bf16.gmra.mxu0 %v2251
      %v2368 = vpop.f32.mrf.mxu0
      %v2369 = vadd.f32 0.0, %v2368
      %v2370 = vpop.f32.mrf.mxu0
      %v2371 = vadd.f32 0.0, %v2370
      %2372 = vmatmul.bf16.gmra.mxu0 %v2255
      %v2373 = vpop.f32.mrf.mxu0
      %v2374 = vadd.f32 0.0, %v2373
      %v2375 = vpop.f32.mrf.mxu0
      %v2376 = vadd.f32 0.0, %v2375
      %2377 = vdwg.mxu0
      %2378 = vmatpush.bf16.msra.mxu0 0
      %2379 = vmatpush.bf16.msra.mxu0 0
      %2380 = vmatpush.bf16.msra.mxu0 0
      %2381 = vmatpush.bf16.msra.mxu0 0
      %2382 = vmatpush.bf16.msra.mxu0 0
      %2383 = vmatpush.bf16.msra.mxu0 %v2317
      %2384 = vmatpush.bf16.msra.mxu0 %v2316
      %2385 = vmatpush.bf16.msra.mxu0 %v2315
      %2386 = vmatmul.bf16.gmra.mxu0 %v2330
      %v2387 = vpop.f32.mrf.mxu0
      %v2388 = vadd.f32 %v2354, %v2387
      %v2389 = vpop.f32.mrf.mxu0
      %v2390 = vadd.f32 %v2356, %v2389
      %2391 = vmatmul.bf16.gmra.mxu0 %v2333
      %v2392 = vpop.f32.mrf.mxu0
      %v2393 = vadd.f32 %v2359, %v2392
      %v2394 = vpop.f32.mrf.mxu0
      %v2395 = vadd.f32 %v2361, %v2394
      %2396 = vmatmul.bf16.gmra.mxu0 %v2336
      %v2397 = vpop.f32.mrf.mxu0
      %v2398 = vadd.f32 %v2364, %v2397
      %v2399 = vpop.f32.mrf.mxu0
      %v2400 = vadd.f32 %v2366, %v2399
      %2401 = vmatmul.bf16.gmra.mxu0 %v2339
      %v2402 = vpop.f32.mrf.mxu0
      %v2403 = vadd.f32 %v2369, %v2402
      %v2404 = vpop.f32.mrf.mxu0
      %v2405 = vadd.f32 %v2371, %v2404
      %2406 = vmatmul.bf16.gmra.mxu0 %v2342
      %v2407 = vpop.f32.mrf.mxu0
      %v2408 = vadd.f32 %v2374, %v2407
      %v2409 = vpop.f32.mrf.mxu0
      %v2410 = vadd.f32 %v2376, %v2409
      %2411 = vdwg.mxu0
      %v2412 = vadd.f32 %v2157, %v2388
      %v2413 = vadd.f32 %v2158, %v2390
      %v2414 = vadd.f32 %v2159, %v2393
      %v2415 = vadd.f32 %v2160, %v2395
      %v2416 = vadd.f32 %v2161, %v2398
      %v2417 = vadd.f32 %v2162, %v2400
      %v2418 = vadd.f32 %v2163, %v2403
      %v2419 = vadd.f32 %v2164, %v2405
      %v2420 = vadd.f32 %v2165, %v2408
      %v2421 = vadd.f32 %v2166, %v2410
      %v2422 = vld [vmem:[%s307 + $0x20] sm:$0xe0]
      %v2423 = vld [vmem:[%s307 + $0x28] sm:$0xe0]
      %v2424 = vld [vmem:[%s307 + $0xc0] sm:$0x1f]
      %v2425 = vld [vmem:[%s307 + $0xc8] sm:$0x1f]
      %v2426 = vpack.c.bf16 %v2169, %v2422
      %v2427 = vpack.c.bf16 %v2170, %v2423
      %v2428 = vpack.c.bf16 %v2424, %v2424
      %v2429 = vpack.c.bf16 %v2425, %v2425
      %s2430 = scalar_lea.vmem %s1, 616
      %v2431 = vld [vmem:[%s2430] sm:$0xf]
      %v2432 = vld [vmem:[%s2430 + $0x4] sm:$0xf]
      %v2433 = vld [vmem:[%s2430 + $0x8] sm:$0xf]
      %v2434 = vld [vmem:[%s2430 + $0xc] sm:$0xf]
      %v2435 = vld [vmem:[%s2430 + $0x10] sm:$0xf]
      %v2436 = vld [vmem:[%s2430 + $0x14] sm:$0xf]
      %v2437 = vld [vmem:[%s2430 + $0x18] sm:$0xf]
      %v2438 = vld [vmem:[%s2430 + $0x1c] sm:$0xf]
      %v2439 = vld [vmem:[%s2430 + $0x20] sm:$0xf]
      %v2440 = vld [vmem:[%s2430 + $0x24] sm:$0xf]
      %v2441 = vld [vmem:[%s2430 + $0x28] sm:$0xf]
      %v2442 = vld [vmem:[%s2430 + $0x2c] sm:$0xf]
      %v2443 = vld [vmem:[%s2430 + $0x30] sm:$0xf]
      %v2444 = vld [vmem:[%s2430 + $0x34] sm:$0xf]
      %v2445 = vld [vmem:[%s2430 + $0x38] sm:$0xf]
      %v2446 = vld [vmem:[%s2430 + $0x3c] sm:$0xf]
      %v2447 = vld [vmem:[%s2430 + $0x40] sm:$0xf]
      %v2448 = vld [vmem:[%s2430 + $0x44] sm:$0xf]
      %v2449 = vld [vmem:[%s2430 + $0x48] sm:$0xf]
      %v2450 = vld [vmem:[%s2430 + $0x4c] sm:$0xf]
      %v2451 = vld [vmem:[%s2430 + $0x50] sm:$0xf]
      %v2452 = vld [vmem:[%s2430 + $0x54] sm:$0xf]
      %vm2453 = vsmask.f32 5376
      %v2455 = vshrl.u32 %v2426, 16
      %v2457 = vrot.slane %v2455, 2
      %v2458 = vshll.u32 %v2426, 16
      %v2460 = vrot.slane %v2458, 3
      %v2461 = vor.u32 %v2457, %v2460
      %v2463 = vshrl.u32 %v2191, 16
      %v2465 = vrot.slane %v2463, 2
      %v2466 = vshll.u32 %v2191, 16
      %v2468 = vrot.slane %v2466, 3
      %v2469 = vor.u32 %v2465, %v2468
      %v2470 = vsel %vm2453, %v2461, %v2469
      %v2472 = vshrl.u32 %v2427, 16
      %v2474 = vrot.slane %v2472, 2
      %v2475 = vshll.u32 %v2427, 16
      %v2477 = vrot.slane %v2475, 3
      %v2478 = vor.u32 %v2474, %v2477
      %v2480 = vshrl.u32 %v2192, 16
      %v2482 = vrot.slane %v2480, 2
      %v2483 = vshll.u32 %v2192, 16
      %v2485 = vrot.slane %v2483, 3
      %v2486 = vor.u32 %v2482, %v2485
      %v2487 = vsel %vm2453, %v2478, %v2486
      %v2489 = vshrl.u32 %v2193, 16
      %v2491 = vrot.slane %v2489, 2
      %v2492 = vshll.u32 %v2193, 16
      %v2494 = vrot.slane %v2492, 3
      %v2495 = vor.u32 %v2491, %v2494
      %v2496 = vsel %vm2453, %v2469, %v2495
      %v2498 = vshrl.u32 %v2194, 16
      %v2500 = vrot.slane %v2498, 2
      %v2501 = vshll.u32 %v2194, 16
      %v2503 = vrot.slane %v2501, 3
      %v2504 = vor.u32 %v2500, %v2503
      %v2505 = vsel %vm2453, %v2486, %v2504
      %v2507 = vshrl.u32 %v2195, 16
      %v2509 = vrot.slane %v2507, 2
      %v2510 = vshll.u32 %v2195, 16
      %v2512 = vrot.slane %v2510, 3
      %v2513 = vor.u32 %v2509, %v2512
      %v2514 = vsel %vm2453, %v2495, %v2513
      %v2516 = vshrl.u32 %v2196, 16
      %v2518 = vrot.slane %v2516, 2
      %v2519 = vshll.u32 %v2196, 16
      %v2521 = vrot.slane %v2519, 3
      %v2522 = vor.u32 %v2518, %v2521
      %v2523 = vsel %vm2453, %v2504, %v2522
      %v2525 = vshrl.u32 %v2197, 16
      %v2527 = vrot.slane %v2525, 2
      %v2528 = vshll.u32 %v2197, 16
      %v2530 = vrot.slane %v2528, 3
      %v2531 = vor.u32 %v2527, %v2530
      %v2532 = vsel %vm2453, %v2513, %v2531
      %v2534 = vshrl.u32 %v2198, 16
      %v2536 = vrot.slane %v2534, 2
      %v2537 = vshll.u32 %v2198, 16
      %v2539 = vrot.slane %v2537, 3
      %v2540 = vor.u32 %v2536, %v2539
      %v2541 = vsel %vm2453, %v2522, %v2540
      %v2543 = vshrl.u32 %v2428, 16
      %v2545 = vrot.slane %v2543, 2
      %v2546 = vshll.u32 %v2428, 16
      %v2548 = vrot.slane %v2546, 3
      %v2549 = vor.u32 %v2545, %v2548
      %v2550 = vsel %vm2453, %v2531, %v2549
      %v2552 = vshrl.u32 %v2429, 16
      %v2554 = vrot.slane %v2552, 2
      %v2555 = vshll.u32 %v2429, 16
      %v2557 = vrot.slane %v2555, 3
      %v2558 = vor.u32 %v2554, %v2557
      %v2559 = vsel %vm2453, %v2540, %v2558
      %v2587 = vunpack.c.l.b16 %v2431
      %v2588 = vunpack.c.l.b16 %v2432
      %v2589 = vunpack.c.l.b16 %v2433
      %v2590 = vunpack.c.l.b16 %v2434
      %v2591 = vunpack.c.l.b16 %v2435
      %v2592 = vunpack.c.l.b16 %v2436
      %v2593 = vunpack.c.l.b16 %v2437
      %v2594 = vunpack.c.l.b16 %v2438
      %v2595 = vunpack.c.l.b16 %v2439
      %v2596 = vunpack.c.l.b16 %v2440
      %v2597 = vunpack.c.l.b16 %v2441
      %v2598 = vunpack.c.l.b16 %v2442
      %v2599 = vunpack.c.l.b16 %v2443
      %v2600 = vunpack.c.l.b16 %v2444
      %v2601 = vunpack.c.l.b16 %v2445
      %v2602 = vunpack.c.l.b16 %v2446
      %v2603 = vunpack.c.l.b16 %v2447
      %v2604 = vunpack.c.l.b16 %v2448
      %v2605 = vunpack.c.l.b16 %v2449
      %v2606 = vunpack.c.l.b16 %v2450
      %v2607 = vunpack.c.l.b16 %v2451
      %v2608 = vunpack.c.l.b16 %v2452
      %v2609 = vpack.c.b16 %v2588, %v2587
      %v2610 = vpack.c.b16 %v2590, %v2589
      %v2611 = vpack.c.b16 %v2592, %v2591
      %v2612 = vpack.c.b16 %v2594, %v2593
      %v2613 = vpack.c.b16 %v2596, %v2595
      %v2614 = vpack.c.b16 %v2598, %v2597
      %v2615 = vpack.c.b16 %v2600, %v2599
      %v2616 = vpack.c.b16 %v2602, %v2601
      %v2617 = vpack.c.b16 %v2604, %v2603
      %v2618 = vpack.c.b16 %v2606, %v2605
      %v2619 = vpack.c.b16 %v2608, %v2607
      %v2632 = vsel %vm929, %v2487, 0
      %v2635 = vsel %vm929, %v2505, 0
      %v2638 = vsel %vm929, %v2523, 0
      %v2641 = vsel %vm929, %v2541, 0
      %v2644 = vsel %vm929, %v2559, 0
      %2646 = vmatpush.bf16.msra.mxu0 %v2616
      %2647 = vmatpush.bf16.msra.mxu0 %v2615
      %2648 = vmatpush.bf16.msra.mxu0 %v2614
      %2649 = vmatpush.bf16.msra.mxu0 %v2613
      %2650 = vmatpush.bf16.msra.mxu0 %v2612
      %2651 = vmatpush.bf16.msra.mxu0 %v2611
      %2652 = vmatpush.bf16.msra.mxu0 %v2610
      %2653 = vmatpush.bf16.msra.mxu0 %v2609
      %2654 = vmatmul.bf16.gmra.mxu0 %v2470
      %v2655 = vpop.f32.mrf.mxu0
      %v2656 = vadd.f32 0.0, %v2655
      %v2657 = vpop.f32.mrf.mxu0
      %v2658 = vadd.f32 0.0, %v2657
      %2659 = vmatmul.bf16.gmra.mxu0 %v2496
      %v2660 = vpop.f32.mrf.mxu0
      %v2661 = vadd.f32 0.0, %v2660
      %v2662 = vpop.f32.mrf.mxu0
      %v2663 = vadd.f32 0.0, %v2662
      %2664 = vmatmul.bf16.gmra.mxu0 %v2514
      %v2665 = vpop.f32.mrf.mxu0
      %v2666 = vadd.f32 0.0, %v2665
      %v2667 = vpop.f32.mrf.mxu0
      %v2668 = vadd.f32 0.0, %v2667
      %2669 = vmatmul.bf16.gmra.mxu0 %v2532
      %v2670 = vpop.f32.mrf.mxu0
      %v2671 = vadd.f32 0.0, %v2670
      %v2672 = vpop.f32.mrf.mxu0
      %v2673 = vadd.f32 0.0, %v2672
      %2674 = vmatmul.bf16.gmra.mxu0 %v2550
      %v2675 = vpop.f32.mrf.mxu0
      %v2676 = vadd.f32 0.0, %v2675
      %v2677 = vpop.f32.mrf.mxu0
      %v2678 = vadd.f32 0.0, %v2677
      %2679 = vdwg.mxu0
      %2680 = vmatpush.bf16.msra.mxu0 0
      %2681 = vmatpush.bf16.msra.mxu0 0
      %2682 = vmatpush.bf16.msra.mxu0 0
      %2683 = vmatpush.bf16.msra.mxu0 0
      %2684 = vmatpush.bf16.msra.mxu0 0
      %2685 = vmatpush.bf16.msra.mxu0 %v2619
      %2686 = vmatpush.bf16.msra.mxu0 %v2618
      %2687 = vmatpush.bf16.msra.mxu0 %v2617
      %2688 = vmatmul.bf16.gmra.mxu0 %v2632
      %v2689 = vpop.f32.mrf.mxu0
      %v2690 = vadd.f32 %v2656, %v2689
      %v2691 = vpop.f32.mrf.mxu0
      %v2692 = vadd.f32 %v2658, %v2691
      %2693 = vmatmul.bf16.gmra.mxu0 %v2635
      %v2694 = vpop.f32.mrf.mxu0
      %v2695 = vadd.f32 %v2661, %v2694
      %v2696 = vpop.f32.mrf.mxu0
      %v2697 = vadd.f32 %v2663, %v2696
      %2698 = vmatmul.bf16.gmra.mxu0 %v2638
      %v2699 = vpop.f32.mrf.mxu0
      %v2700 = vadd.f32 %v2666, %v2699
      %v2701 = vpop.f32.mrf.mxu0
      %v2702 = vadd.f32 %v2668, %v2701
      %2703 = vmatmul.bf16.gmra.mxu0 %v2641
      %v2704 = vpop.f32.mrf.mxu0
      %v2705 = vadd.f32 %v2671, %v2704
      %v2706 = vpop.f32.mrf.mxu0
      %v2707 = vadd.f32 %v2673, %v2706
      %2708 = vmatmul.bf16.gmra.mxu0 %v2644
      %v2709 = vpop.f32.mrf.mxu0
      %v2710 = vadd.f32 %v2676, %v2709
      %v2711 = vpop.f32.mrf.mxu0
      %v2712 = vadd.f32 %v2678, %v2711
      %2713 = vdwg.mxu0
      %v2714 = vadd.f32 %v2412, %v2690
      %v2715 = vadd.f32 %v2413, %v2692
      %v2716 = vadd.f32 %v2414, %v2695
      %v2717 = vadd.f32 %v2415, %v2697
      %v2718 = vadd.f32 %v2416, %v2700
      %v2719 = vadd.f32 %v2417, %v2702
      %v2720 = vadd.f32 %v2418, %v2705
      %v2721 = vadd.f32 %v2419, %v2707
      %v2722 = vadd.f32 %v2420, %v2710
      %v2723 = vadd.f32 %v2421, %v2712
      %v2724 = vld [vmem:[%s307 + $0x20] sm:$0xc0]
      %v2725 = vld [vmem:[%s307 + $0x28] sm:$0xc0]
      %v2726 = vld [vmem:[%s307 + $0xc0] sm:$0x3f]
      %v2727 = vld [vmem:[%s307 + $0xc8] sm:$0x3f]
      %v2728 = vpack.c.bf16 %v2169, %v2724
      %v2729 = vpack.c.bf16 %v2170, %v2725
      %v2730 = vpack.c.bf16 %v2726, %v2726
      %v2731 = vpack.c.bf16 %v2727, %v2727
      %s2732 = scalar_lea.vmem %s1, 704
      %v2733 = vld [vmem:[%s2732] sm:$0xf]
      %v2734 = vld [vmem:[%s2732 + $0x4] sm:$0xf]
      %v2735 = vld [vmem:[%s2732 + $0x8] sm:$0xf]
      %v2736 = vld [vmem:[%s2732 + $0xc] sm:$0xf]
      %v2737 = vld [vmem:[%s2732 + $0x10] sm:$0xf]
      %v2738 = vld [vmem:[%s2732 + $0x14] sm:$0xf]
      %v2739 = vld [vmem:[%s2732 + $0x18] sm:$0xf]
      %v2740 = vld [vmem:[%s2732 + $0x1c] sm:$0xf]
      %v2741 = vld [vmem:[%s2732 + $0x20] sm:$0xf]
      %v2742 = vld [vmem:[%s2732 + $0x24] sm:$0xf]
      %v2743 = vld [vmem:[%s2732 + $0x28] sm:$0xf]
      %v2744 = vld [vmem:[%s2732 + $0x2c] sm:$0xf]
      %v2745 = vld [vmem:[%s2732 + $0x30] sm:$0xf]
      %v2746 = vld [vmem:[%s2732 + $0x34] sm:$0xf]
      %v2747 = vld [vmem:[%s2732 + $0x38] sm:$0xf]
      %v2748 = vld [vmem:[%s2732 + $0x3c] sm:$0xf]
      %v2749 = vld [vmem:[%s2732 + $0x40] sm:$0xf]
      %v2750 = vld [vmem:[%s2732 + $0x44] sm:$0xf]
      %v2751 = vld [vmem:[%s2732 + $0x48] sm:$0xf]
      %v2752 = vld [vmem:[%s2732 + $0x4c] sm:$0xf]
      %v2753 = vld [vmem:[%s2732 + $0x50] sm:$0xf]
      %v2754 = vld [vmem:[%s2732 + $0x54] sm:$0xf]
      %vm2759 = vcmask 1044480
      %v2760 = vrot.slane %v2728, 3
      %v2761 = vrot.slane %v2191, 3
      %v2762 = vsel %vm2759, %v2760, %v2761
      %v2763 = vrot.slane %v2729, 3
      %v2764 = vrot.slane %v2192, 3
      %v2765 = vsel %vm2759, %v2763, %v2764
      %v2766 = vrot.slane %v2193, 3
      %v2767 = vsel %vm2759, %v2761, %v2766
      %v2768 = vrot.slane %v2194, 3
      %v2769 = vsel %vm2759, %v2764, %v2768
      %v2770 = vrot.slane %v2195, 3
      %v2771 = vsel %vm2759, %v2766, %v2770
      %v2772 = vrot.slane %v2196, 3
      %v2773 = vsel %vm2759, %v2768, %v2772
      %v2774 = vrot.slane %v2197, 3
      %v2775 = vsel %vm2759, %v2770, %v2774
      %v2776 = vrot.slane %v2198, 3
      %v2777 = vsel %vm2759, %v2772, %v2776
      %v2778 = vrot.slane %v2730, 3
      %v2779 = vsel %vm2759, %v2774, %v2778
      %v2780 = vrot.slane %v2731, 3
      %v2781 = vsel %vm2759, %v2776, %v2780
      %v2809 = vunpack.c.l.b16 %v2733
      %v2810 = vunpack.c.l.b16 %v2734
      %v2811 = vunpack.c.l.b16 %v2735
      %v2812 = vunpack.c.l.b16 %v2736
      %v2813 = vunpack.c.l.b16 %v2737
      %v2814 = vunpack.c.l.b16 %v2738
      %v2815 = vunpack.c.l.b16 %v2739
      %v2816 = vunpack.c.l.b16 %v2740
      %v2817 = vunpack.c.l.b16 %v2741
      %v2818 = vunpack.c.l.b16 %v2742
      %v2819 = vunpack.c.l.b16 %v2743
      %v2820 = vunpack.c.l.b16 %v2744
      %v2821 = vunpack.c.l.b16 %v2745
      %v2822 = vunpack.c.l.b16 %v2746
      %v2823 = vunpack.c.l.b16 %v2747
      %v2824 = vunpack.c.l.b16 %v2748
      %v2825 = vunpack.c.l.b16 %v2749
      %v2826 = vunpack.c.l.b16 %v2750
      %v2827 = vunpack.c.l.b16 %v2751
      %v2828 = vunpack.c.l.b16 %v2752
      %v2829 = vunpack.c.l.b16 %v2753
      %v2830 = vunpack.c.l.b16 %v2754
      %v2831 = vpack.c.b16 %v2810, %v2809
      %v2832 = vpack.c.b16 %v2812, %v2811
      %v2833 = vpack.c.b16 %v2814, %v2813
      %v2834 = vpack.c.b16 %v2816, %v2815
      %v2835 = vpack.c.b16 %v2818, %v2817
      %v2836 = vpack.c.b16 %v2820, %v2819
      %v2837 = vpack.c.b16 %v2822, %v2821
      %v2838 = vpack.c.b16 %v2824, %v2823
      %v2839 = vpack.c.b16 %v2826, %v2825
      %v2840 = vpack.c.b16 %v2828, %v2827
      %v2841 = vpack.c.b16 %v2830, %v2829
      %v2854 = vsel %vm929, %v2765, 0
      %v2857 = vsel %vm929, %v2769, 0
      %v2860 = vsel %vm929, %v2773, 0
      %v2863 = vsel %vm929, %v2777, 0
      %v2866 = vsel %vm929, %v2781, 0
      %2868 = vmatpush.bf16.msra.mxu0 %v2838
      %2869 = vmatpush.bf16.msra.mxu0 %v2837
      %2870 = vmatpush.bf16.msra.mxu0 %v2836
      %2871 = vmatpush.bf16.msra.mxu0 %v2835
      %2872 = vmatpush.bf16.msra.mxu0 %v2834
      %2873 = vmatpush.bf16.msra.mxu0 %v2833
      %2874 = vmatpush.bf16.msra.mxu0 %v2832
      %2875 = vmatpush.bf16.msra.mxu0 %v2831
      %2876 = vmatmul.bf16.gmra.mxu0 %v2762
      %v2877 = vpop.f32.mrf.mxu0
      %v2878 = vadd.f32 0.0, %v2877
      %v2879 = vpop.f32.mrf.mxu0
      %v2880 = vadd.f32 0.0, %v2879
      %2881 = vmatmul.bf16.gmra.mxu0 %v2767
      %v2882 = vpop.f32.mrf.mxu0
      %v2883 = vadd.f32 0.0, %v2882
      %v2884 = vpop.f32.mrf.mxu0
      %v2885 = vadd.f32 0.0, %v2884
      %2886 = vmatmul.bf16.gmra.mxu0 %v2771
      %v2887 = vpop.f32.mrf.mxu0
      %v2888 = vadd.f32 0.0, %v2887
      %v2889 = vpop.f32.mrf.mxu0
      %v2890 = vadd.f32 0.0, %v2889
      %2891 = vmatmul.bf16.gmra.mxu0 %v2775
      %v2892 = vpop.f32.mrf.mxu0
      %v2893 = vadd.f32 0.0, %v2892
      %v2894 = vpop.f32.mrf.mxu0
      %v2895 = vadd.f32 0.0, %v2894
      %2896 = vmatmul.bf16.gmra.mxu0 %v2779
      %v2897 = vpop.f32.mrf.mxu0
      %v2898 = vadd.f32 0.0, %v2897
      %v2899 = vpop.f32.mrf.mxu0
      %v2900 = vadd.f32 0.0, %v2899
      %2901 = vdwg.mxu0
      %2902 = vmatpush.bf16.msra.mxu0 0
      %2903 = vmatpush.bf16.msra.mxu0 0
      %2904 = vmatpush.bf16.msra.mxu0 0
      %2905 = vmatpush.bf16.msra.mxu0 0
      %2906 = vmatpush.bf16.msra.mxu0 0
      %2907 = vmatpush.bf16.msra.mxu0 %v2841
      %2908 = vmatpush.bf16.msra.mxu0 %v2840
      %2909 = vmatpush.bf16.msra.mxu0 %v2839
      %2910 = vmatmul.bf16.gmra.mxu0 %v2854
      %v2911 = vpop.f32.mrf.mxu0
      %v2912 = vadd.f32 %v2878, %v2911
      %v2913 = vpop.f32.mrf.mxu0
      %v2914 = vadd.f32 %v2880, %v2913
      %2915 = vmatmul.bf16.gmra.mxu0 %v2857
      %v2916 = vpop.f32.mrf.mxu0
      %v2917 = vadd.f32 %v2883, %v2916
      %v2918 = vpop.f32.mrf.mxu0
      %v2919 = vadd.f32 %v2885, %v2918
      %2920 = vmatmul.bf16.gmra.mxu0 %v2860
      %v2921 = vpop.f32.mrf.mxu0
      %v2922 = vadd.f32 %v2888, %v2921
      %v2923 = vpop.f32.mrf.mxu0
      %v2924 = vadd.f32 %v2890, %v2923
      %2925 = vmatmul.bf16.gmra.mxu0 %v2863
      %v2926 = vpop.f32.mrf.mxu0
      %v2927 = vadd.f32 %v2893, %v2926
      %v2928 = vpop.f32.mrf.mxu0
      %v2929 = vadd.f32 %v2895, %v2928
      %2930 = vmatmul.bf16.gmra.mxu0 %v2866
      %v2931 = vpop.f32.mrf.mxu0
      %v2932 = vadd.f32 %v2898, %v2931
      %v2933 = vpop.f32.mrf.mxu0
      %v2934 = vadd.f32 %v2900, %v2933
      %2935 = vdwg.mxu0
      %v2936 = vadd.f32 %v2714, %v2912
      %v2937 = vadd.f32 %v2715, %v2914
      %v2938 = vadd.f32 %v2716, %v2917
      %v2939 = vadd.f32 %v2717, %v2919
      %v2940 = vadd.f32 %v2718, %v2922
      %v2941 = vadd.f32 %v2719, %v2924
      %v2942 = vadd.f32 %v2720, %v2927
      %v2943 = vadd.f32 %v2721, %v2929
      %v2944 = vadd.f32 %v2722, %v2932
      %v2945 = vadd.f32 %v2723, %v2934
      %v2946 = vld [vmem:[%s2] sm:$0x1]
      %v2948 = vperm.slane %v2946, 0
      %v2950 = vadd.f32 %v2936, %v2948
      %v2951 = vadd.f32 %v2937, %v2948
      %v2952 = vadd.f32 %v2938, %v2948
      %v2953 = vadd.f32 %v2939, %v2948
      %v2954 = vadd.f32 %v2940, %v2948
      %v2955 = vadd.f32 %v2941, %v2948
      %v2956 = vadd.f32 %v2942, %v2948
      %v2957 = vadd.f32 %v2943, %v2948
      %v2958 = vadd.f32 %v2944, %v2948
      %v2959 = vadd.f32 %v2945, %v2948
      %v2960 = vmax.f32 %v2950, 0.0
      %v2961 = vmax.f32 %v2951, 0.0
      %v2962 = vmax.f32 %v2952, 0.0
      %v2963 = vmax.f32 %v2953, 0.0
      %v2964 = vmax.f32 %v2954, 0.0
      %v2965 = vmax.f32 %v2955, 0.0
      %v2966 = vmax.f32 %v2956, 0.0
      %v2967 = vmax.f32 %v2957, 0.0
      %v2968 = vmax.f32 %v2958, 0.0
      %v2969 = vmax.f32 %v2959, 0.0
      %v2970 = vsel %vm669, 1, 0
      %v2971 = vsel %vm670, 1, 0
      %v2972 = vsel %vm671, 1, 0
      %v2973 = vsel %vm672, 1, 0
      %v2974 = vsel %vm673, 1, 0
      %v2975 = vsel %vm674, 1, 0
      %v2976 = vsel %vm675, 1, 0
      %v2977 = vsel %vm676, 1, 0
      %v2978 = vsel %vm677, 1, 0
      %v2979 = vsel %vm678, 1, 0
      %vm2980 = vcmp.eq.s32.totalorder %v2970, 1
      %vm2981 = vcmp.eq.s32.totalorder %v2971, 1
      %vm2982 = vcmp.eq.s32.totalorder %v2972, 1
      %vm2983 = vcmp.eq.s32.totalorder %v2973, 1
      %vm2984 = vcmp.eq.s32.totalorder %v2974, 1
      %vm2985 = vcmp.eq.s32.totalorder %v2975, 1
      %vm2986 = vcmp.eq.s32.totalorder %v2976, 1
      %vm2987 = vcmp.eq.s32.totalorder %v2977, 1
      %vm2988 = vcmp.eq.s32.totalorder %v2978, 1
      %vm2989 = vcmp.eq.s32.totalorder %v2979, 1
      %v2990 = vsel %vm2980, %v2960, 0.0
      %v2991 = vsel %vm2981, %v2961, 0.0
      %v2992 = vsel %vm2982, %v2962, 0.0
      %v2993 = vsel %vm2983, %v2963, 0.0
      %v2994 = vsel %vm2984, %v2964, 0.0
      %v2995 = vsel %vm2985, %v2965, 0.0
      %v2996 = vsel %vm2986, %v2966, 0.0
      %v2997 = vsel %vm2987, %v2967, 0.0
      %v2998 = vsel %vm2988, %v2968, 0.0
      %v2999 = vsel %vm2989, %v2969, 0.0
      %3000 = vst.msk [vmem:[#allocation2 + $0xb] sm:$0xff] %vm679, %v2990
      %3001 = vst.msk [vmem:[#allocation2 + $0x13] sm:$0xff] %vm679, %v2991
      %3002 = vst.msk [vmem:[#allocation2 + $0x1b] sm:$0xff] %vm679, %v2992
      %3003 = vst.msk [vmem:[#allocation2 + $0x23] sm:$0xff] %vm679, %v2993
      %3004 = vst.msk [vmem:[#allocation2 + $0x2b] sm:$0xff] %vm679, %v2994
      %3005 = vst.msk [vmem:[#allocation2 + $0x33] sm:$0xff] %vm679, %v2995
      %3006 = vst.msk [vmem:[#allocation2 + $0x3b] sm:$0xff] %vm679, %v2996
      %3007 = vst.msk [vmem:[#allocation2 + $0x43] sm:$0xff] %vm679, %v2997
      %3008 = vst.msk [vmem:[#allocation2 + $0x4b] sm:$0xff] %vm679, %v2998
      %3009 = vst.msk [vmem:[#allocation2 + $0x53] sm:$0xff] %vm679, %v2999
      %v3010 = vld [vmem:[#allocation2] sm:$0xff]
      %v3011 = vld [vmem:[#allocation2 + $0x8] sm:$0xff]
      %v3012 = vld [vmem:[#allocation2 + $0x10] sm:$0xff]
      %v3013 = vld [vmem:[#allocation2 + $0x18] sm:$0xff]
      %v3014 = vld [vmem:[#allocation2 + $0x20] sm:$0xff]
      %v3015 = vld [vmem:[#allocation2 + $0x28] sm:$0xff]
      %v3016 = vld [vmem:[#allocation2 + $0x30] sm:$0xff]
      %v3017 = vld [vmem:[#allocation2 + $0x38] sm:$0xff]
      %v3018 = vld [vmem:[#allocation2 + $0x40] sm:$0xff]
      %v3019 = vld [vmem:[#allocation2 + $0x48] sm:$0xff]
      %v3020 = vpack.c.bf16 %v3011, %v3010
      %v3021 = vpack.c.bf16 %v3013, %v3012
      %v3022 = vpack.c.bf16 %v3015, %v3014
      %v3023 = vpack.c.bf16 %v3017, %v3016
      %v3024 = vpack.c.bf16 %v3019, %v3018
      %v3025 = vld [vmem:[%s3] sm:$0xf]
      %v3026 = vld [vmem:[%s3 + $0x4] sm:$0xf]
      %v3027 = vld [vmem:[%s3 + $0x8] sm:$0xf]
      %v3028 = vld [vmem:[%s3 + $0xc] sm:$0xf]
      %v3029 = vld [vmem:[#allocation2 + $0x1] sm:$0xff]
      %v3030 = vld [vmem:[#allocation2 + $0x9] sm:$0xff]
      %v3031 = vld [vmem:[#allocation2 + $0x11] sm:$0xff]
      %v3032 = vld [vmem:[#allocation2 + $0x19] sm:$0xff]
      %v3033 = vld [vmem:[#allocation2 + $0x21] sm:$0xff]
      %v3034 = vld [vmem:[#allocation2 + $0x29] sm:$0xff]
      %v3035 = vld [vmem:[#allocation2 + $0x31] sm:$0xff]
      %v3036 = vld [vmem:[#allocation2 + $0x39] sm:$0xff]
      %v3037 = vld [vmem:[#allocation2 + $0x41] sm:$0xff]
      %v3038 = vld [vmem:[#allocation2 + $0x49] sm:$0xff]
      %v3039 = vpack.c.bf16 %v3030, %v3029
      %v3040 = vpack.c.bf16 %v3032, %v3031
      %v3041 = vpack.c.bf16 %v3034, %v3033
      %v3042 = vpack.c.bf16 %v3036, %v3035
      %v3043 = vpack.c.bf16 %v3038, %v3037
      %s3044 = scalar_lea.vmem %s3, 16
      %v3045 = vld [vmem:[%s3044] sm:$0xf]
      %v3046 = vld [vmem:[%s3044 + $0x4] sm:$0xf]
      %v3047 = vld [vmem:[%s3044 + $0x8] sm:$0xf]
      %v3048 = vld [vmem:[%s3044 + $0xc] sm:$0xf]
      %v3053 = vunpack.c.l.b16 %v3045
      %v3054 = vunpack.c.l.b16 %v3046
      %v3055 = vunpack.c.l.b16 %v3047
      %v3056 = vunpack.c.l.b16 %v3048
      %v3057 = vpack.c.b16 %v3054, %v3053
      %v3058 = vpack.c.b16 %v3056, %v3055
      %v3062 = vsel %vm679, %v3039, 0
      %v3065 = vsel %vm679, %v3040, 0
      %v3068 = vsel %vm679, %v3041, 0
      %v3071 = vsel %vm679, %v3042, 0
      %v3074 = vsel %vm679, %v3043, 0
      %3076 = vmatpush.bf16.msra.mxu0 0
      %3077 = vmatpush.bf16.msra.mxu0 0
      %3078 = vmatpush.bf16.msra.mxu0 0
      %3079 = vmatpush.bf16.msra.mxu0 0
      %3080 = vmatpush.bf16.msra.mxu0 0
      %3081 = vmatpush.bf16.msra.mxu0 0
      %3082 = vmatpush.bf16.msra.mxu0 %v3058
      %3083 = vmatpush.bf16.msra.mxu0 %v3057
      %3084 = vmatmul.bf16.gmra.mxu0 %v3062
      %v3085 = vpop.f32.mrf.mxu0
      %v3086 = vadd.f32 0.0, %v3085
      %v3087 = vpop.f32.mrf.mxu0
      %v3088 = vadd.f32 0.0, %v3087
      %3089 = vmatmul.bf16.gmra.mxu0 %v3065
      %v3090 = vpop.f32.mrf.mxu0
      %v3091 = vadd.f32 0.0, %v3090
      %v3092 = vpop.f32.mrf.mxu0
      %v3093 = vadd.f32 0.0, %v3092
      %3094 = vmatmul.bf16.gmra.mxu0 %v3068
      %v3095 = vpop.f32.mrf.mxu0
      %v3096 = vadd.f32 0.0, %v3095
      %v3097 = vpop.f32.mrf.mxu0
      %v3098 = vadd.f32 0.0, %v3097
      %3099 = vmatmul.bf16.gmra.mxu0 %v3071
      %v3100 = vpop.f32.mrf.mxu0
      %v3101 = vadd.f32 0.0, %v3100
      %v3102 = vpop.f32.mrf.mxu0
      %v3103 = vadd.f32 0.0, %v3102
      %3104 = vmatmul.bf16.gmra.mxu0 %v3074
      %v3105 = vpop.f32.mrf.mxu0
      %v3106 = vadd.f32 0.0, %v3105
      %v3107 = vpop.f32.mrf.mxu0
      %v3108 = vadd.f32 0.0, %v3107
      %3109 = vdwg.mxu0
      %v3114 = vunpack.c.l.b16 %v3025
      %v3115 = vunpack.c.l.b16 %v3026
      %v3116 = vunpack.c.l.b16 %v3027
      %v3117 = vunpack.c.l.b16 %v3028
      %v3118 = vpack.c.b16 %v3115, %v3114
      %v3119 = vpack.c.b16 %v3117, %v3116
      %v3123 = vsel %vm679, %v3020, 0
      %v3126 = vsel %vm679, %v3021, 0
      %v3129 = vsel %vm679, %v3022, 0
      %v3132 = vsel %vm679, %v3023, 0
      %v3135 = vsel %vm679, %v3024, 0
      %3137 = vmatpush.bf16.msra.mxu0 0
      %3138 = vmatpush.bf16.msra.mxu0 0
      %3139 = vmatpush.bf16.msra.mxu0 0
      %3140 = vmatpush.bf16.msra.mxu0 0
      %3141 = vmatpush.bf16.msra.mxu0 0
      %3142 = vmatpush.bf16.msra.mxu0 0
      %3143 = vmatpush.bf16.msra.mxu0 %v3119
      %3144 = vmatpush.bf16.msra.mxu0 %v3118
      %3145 = vmatmul.bf16.gmra.mxu0 %v3123
      %v3146 = vpop.f32.mrf.mxu0
      %v3147 = vadd.f32 %v3086, %v3146
      %v3148 = vpop.f32.mrf.mxu0
      %v3149 = vadd.f32 %v3088, %v3148
      %3150 = vmatmul.bf16.gmra.mxu0 %v3126
      %v3151 = vpop.f32.mrf.mxu0
      %v3152 = vadd.f32 %v3091, %v3151
      %v3153 = vpop.f32.mrf.mxu0
      %v3154 = vadd.f32 %v3093, %v3153
      %3155 = vmatmul.bf16.gmra.mxu0 %v3129
      %v3156 = vpop.f32.mrf.mxu0
      %v3157 = vadd.f32 %v3096, %v3156
      %v3158 = vpop.f32.mrf.mxu0
      %v3159 = vadd.f32 %v3098, %v3158
      %3160 = vmatmul.bf16.gmra.mxu0 %v3132
      %v3161 = vpop.f32.mrf.mxu0
      %v3162 = vadd.f32 %v3101, %v3161
      %v3163 = vpop.f32.mrf.mxu0
      %v3164 = vadd.f32 %v3103, %v3163
      %3165 = vmatmul.bf16.gmra.mxu0 %v3135
      %v3166 = vpop.f32.mrf.mxu0
      %v3167 = vadd.f32 %v3106, %v3166
      %v3168 = vpop.f32.mrf.mxu0
      %v3169 = vadd.f32 %v3108, %v3168
      %3170 = vdwg.mxu0
      %v3171 = vld [vmem:[#allocation2 + $0x2] sm:$0xff]
      %v3172 = vld [vmem:[#allocation2 + $0xa] sm:$0xff]
      %v3173 = vld [vmem:[#allocation2 + $0x12] sm:$0xff]
      %v3174 = vld [vmem:[#allocation2 + $0x1a] sm:$0xff]
      %v3175 = vld [vmem:[#allocation2 + $0x22] sm:$0xff]
      %v3176 = vld [vmem:[#allocation2 + $0x2a] sm:$0xff]
      %v3177 = vld [vmem:[#allocation2 + $0x32] sm:$0xff]
      %v3178 = vld [vmem:[#allocation2 + $0x3a] sm:$0xff]
      %v3179 = vld [vmem:[#allocation2 + $0x42] sm:$0xff]
      %v3180 = vld [vmem:[#allocation2 + $0x4a] sm:$0xff]
      %v3181 = vpack.c.bf16 %v3172, %v3171
      %v3182 = vpack.c.bf16 %v3174, %v3173
      %v3183 = vpack.c.bf16 %v3176, %v3175
      %v3184 = vpack.c.bf16 %v3178, %v3177
      %v3185 = vpack.c.bf16 %v3180, %v3179
      %s3186 = scalar_lea.vmem %s3, 32
      %v3187 = vld [vmem:[%s3186] sm:$0xf]
      %v3188 = vld [vmem:[%s3186 + $0x4] sm:$0xf]
      %v3189 = vld [vmem:[%s3186 + $0x8] sm:$0xf]
      %v3190 = vld [vmem:[%s3186 + $0xc] sm:$0xf]
      %v3195 = vunpack.c.l.b16 %v3187
      %v3196 = vunpack.c.l.b16 %v3188
      %v3197 = vunpack.c.l.b16 %v3189
      %v3198 = vunpack.c.l.b16 %v3190
      %v3199 = vpack.c.b16 %v3196, %v3195
      %v3200 = vpack.c.b16 %v3198, %v3197
      %v3204 = vsel %vm679, %v3181, 0
      %v3207 = vsel %vm679, %v3182, 0
      %v3210 = vsel %vm679, %v3183, 0
      %v3213 = vsel %vm679, %v3184, 0
      %v3216 = vsel %vm679, %v3185, 0
      %3218 = vmatpush.bf16.msra.mxu0 0
      %3219 = vmatpush.bf16.msra.mxu0 0
      %3220 = vmatpush.bf16.msra.mxu0 0
      %3221 = vmatpush.bf16.msra.mxu0 0
      %3222 = vmatpush.bf16.msra.mxu0 0
      %3223 = vmatpush.bf16.msra.mxu0 0
      %3224 = vmatpush.bf16.msra.mxu0 %v3200
      %3225 = vmatpush.bf16.msra.mxu0 %v3199
      %3226 = vmatmul.bf16.gmra.mxu0 %v3204
      %v3227 = vpop.f32.mrf.mxu0
      %v3228 = vadd.f32 0.0, %v3227
      %v3229 = vpop.f32.mrf.mxu0
      %v3230 = vadd.f32 0.0, %v3229
      %3231 = vmatmul.bf16.gmra.mxu0 %v3207
      %v3232 = vpop.f32.mrf.mxu0
      %v3233 = vadd.f32 0.0, %v3232
      %v3234 = vpop.f32.mrf.mxu0
      %v3235 = vadd.f32 0.0, %v3234
      %3236 = vmatmul.bf16.gmra.mxu0 %v3210
      %v3237 = vpop.f32.mrf.mxu0
      %v3238 = vadd.f32 0.0, %v3237
      %v3239 = vpop.f32.mrf.mxu0
      %v3240 = vadd.f32 0.0, %v3239
      %3241 = vmatmul.bf16.gmra.mxu0 %v3213
      %v3242 = vpop.f32.mrf.mxu0
      %v3243 = vadd.f32 0.0, %v3242
      %v3244 = vpop.f32.mrf.mxu0
      %v3245 = vadd.f32 0.0, %v3244
      %3246 = vmatmul.bf16.gmra.mxu0 %v3216
      %v3247 = vpop.f32.mrf.mxu0
      %v3248 = vadd.f32 0.0, %v3247
      %v3249 = vpop.f32.mrf.mxu0
      %v3250 = vadd.f32 0.0, %v3249
      %3251 = vdwg.mxu0
      %v3252 = vadd.f32 %v3147, %v3228
      %v3253 = vadd.f32 %v3149, %v3230
      %v3254 = vadd.f32 %v3152, %v3233
      %v3255 = vadd.f32 %v3154, %v3235
      %v3256 = vadd.f32 %v3157, %v3238
      %v3257 = vadd.f32 %v3159, %v3240
      %v3258 = vadd.f32 %v3162, %v3243
      %v3259 = vadd.f32 %v3164, %v3245
      %v3260 = vadd.f32 %v3167, %v3248
      %v3261 = vadd.f32 %v3169, %v3250
      %v3262 = vld [vmem:[#allocation2 + $0xa] sm:$0xff]
      %v3263 = vld [vmem:[#allocation2 + $0x12] sm:$0xff]
      %v3264 = vld [vmem:[#allocation2 + $0x1a] sm:$0xff]
      %v3265 = vld [vmem:[#allocation2 + $0x22] sm:$0xff]
      %v3266 = vld [vmem:[#allocation2 + $0x2a] sm:$0xff]
      %v3267 = vld [vmem:[#allocation2 + $0x32] sm:$0xff]
      %v3268 = vld [vmem:[#allocation2 + $0x3a] sm:$0xff]
      %v3269 = vld [vmem:[#allocation2 + $0x42] sm:$0xff]
      %v3270 = vld [vmem:[#allocation2 + $0x4a] sm:$0xff]
      %v3271 = vld [vmem:[#allocation2 + $0x52] sm:$0xff]
      %v3272 = vpack.c.bf16 %v3263, %v3262
      %v3273 = vpack.c.bf16 %v3265, %v3264
      %v3274 = vpack.c.bf16 %v3267, %v3266
      %v3275 = vpack.c.bf16 %v3269, %v3268
      %v3276 = vpack.c.bf16 %v3271, %v3270
      %s3277 = scalar_lea.vmem %s3, 48
      %v3278 = vld [vmem:[%s3277] sm:$0xf]
      %v3279 = vld [vmem:[%s3277 + $0x4] sm:$0xf]
      %v3280 = vld [vmem:[%s3277 + $0x8] sm:$0xf]
      %v3281 = vld [vmem:[%s3277 + $0xc] sm:$0xf]
      %v3286 = vunpack.c.l.b16 %v3278
      %v3287 = vunpack.c.l.b16 %v3279
      %v3288 = vunpack.c.l.b16 %v3280
      %v3289 = vunpack.c.l.b16 %v3281
      %v3290 = vpack.c.b16 %v3287, %v3286
      %v3291 = vpack.c.b16 %v3289, %v3288
      %v3295 = vsel %vm679, %v3272, 0
      %v3298 = vsel %vm679, %v3273, 0
      %v3301 = vsel %vm679, %v3274, 0
      %v3304 = vsel %vm679, %v3275, 0
      %v3307 = vsel %vm679, %v3276, 0
      %3309 = vmatpush.bf16.msra.mxu0 0
      %3310 = vmatpush.bf16.msra.mxu0 0
      %3311 = vmatpush.bf16.msra.mxu0 0
      %3312 = vmatpush.bf16.msra.mxu0 0
      %3313 = vmatpush.bf16.msra.mxu0 0
      %3314 = vmatpush.bf16.msra.mxu0 0
      %3315 = vmatpush.bf16.msra.mxu0 %v3291
      %3316 = vmatpush.bf16.msra.mxu0 %v3290
      %3317 = vmatmul.bf16.gmra.mxu0 %v3295
      %v3318 = vpop.f32.mrf.mxu0
      %v3319 = vadd.f32 0.0, %v3318
      %v3320 = vpop.f32.mrf.mxu0
      %v3321 = vadd.f32 0.0, %v3320
      %3322 = vmatmul.bf16.gmra.mxu0 %v3298
      %v3323 = vpop.f32.mrf.mxu0
      %v3324 = vadd.f32 0.0, %v3323
      %v3325 = vpop.f32.mrf.mxu0
      %v3326 = vadd.f32 0.0, %v3325
      %3327 = vmatmul.bf16.gmra.mxu0 %v3301
      %v3328 = vpop.f32.mrf.mxu0
      %v3329 = vadd.f32 0.0, %v3328
      %v3330 = vpop.f32.mrf.mxu0
      %v3331 = vadd.f32 0.0, %v3330
      %3332 = vmatmul.bf16.gmra.mxu0 %v3304
      %v3333 = vpop.f32.mrf.mxu0
      %v3334 = vadd.f32 0.0, %v3333
      %v3335 = vpop.f32.mrf.mxu0
      %v3336 = vadd.f32 0.0, %v3335
      %3337 = vmatmul.bf16.gmra.mxu0 %v3307
      %v3338 = vpop.f32.mrf.mxu0
      %v3339 = vadd.f32 0.0, %v3338
      %v3340 = vpop.f32.mrf.mxu0
      %v3341 = vadd.f32 0.0, %v3340
      %3342 = vdwg.mxu0
      %v3343 = vadd.f32 %v3252, %v3319
      %v3344 = vadd.f32 %v3253, %v3321
      %v3345 = vadd.f32 %v3254, %v3324
      %v3346 = vadd.f32 %v3255, %v3326
      %v3347 = vadd.f32 %v3256, %v3329
      %v3348 = vadd.f32 %v3257, %v3331
      %v3349 = vadd.f32 %v3258, %v3334
      %v3350 = vadd.f32 %v3259, %v3336
      %v3351 = vadd.f32 %v3260, %v3339
      %v3352 = vadd.f32 %v3261, %v3341
      %v3353 = vld [vmem:[#allocation2 + $0xb] sm:$0xff]
      %v3354 = vld [vmem:[#allocation2 + $0x13] sm:$0xff]
      %v3355 = vld [vmem:[#allocation2 + $0x1b] sm:$0xff]
      %v3356 = vld [vmem:[#allocation2 + $0x23] sm:$0xff]
      %v3357 = vld [vmem:[#allocation2 + $0x2b] sm:$0xff]
      %v3358 = vld [vmem:[#allocation2 + $0x33] sm:$0xff]
      %v3359 = vld [vmem:[#allocation2 + $0x3b] sm:$0xff]
      %v3360 = vld [vmem:[#allocation2 + $0x43] sm:$0xff]
      %v3361 = vld [vmem:[#allocation2 + $0x4b] sm:$0xff]
      %v3362 = vld [vmem:[#allocation2 + $0x53] sm:$0xff]
      %v3363 = vpack.c.bf16 %v3354, %v3353
      %v3364 = vpack.c.bf16 %v3356, %v3355
      %v3365 = vpack.c.bf16 %v3358, %v3357
      %v3366 = vpack.c.bf16 %v3360, %v3359
      %v3367 = vpack.c.bf16 %v3362, %v3361
      %s3368 = scalar_lea.vmem %s3, 64
      %v3369 = vld [vmem:[%s3368] sm:$0xf]
      %v3370 = vld [vmem:[%s3368 + $0x4] sm:$0xf]
      %v3371 = vld [vmem:[%s3368 + $0x8] sm:$0xf]
      %v3372 = vld [vmem:[%s3368 + $0xc] sm:$0xf]
      %v3377 = vunpack.c.l.b16 %v3369
      %v3378 = vunpack.c.l.b16 %v3370
      %v3379 = vunpack.c.l.b16 %v3371
      %v3380 = vunpack.c.l.b16 %v3372
      %v3381 = vpack.c.b16 %v3378, %v3377
      %v3382 = vpack.c.b16 %v3380, %v3379
      %v3386 = vsel %vm679, %v3363, 0
      %v3389 = vsel %vm679, %v3364, 0
      %v3392 = vsel %vm679, %v3365, 0
      %v3395 = vsel %vm679, %v3366, 0
      %v3398 = vsel %vm679, %v3367, 0
      %3400 = vmatpush.bf16.msra.mxu0 0
      %3401 = vmatpush.bf16.msra.mxu0 0
      %3402 = vmatpush.bf16.msra.mxu0 0
      %3403 = vmatpush.bf16.msra.mxu0 0
      %3404 = vmatpush.bf16.msra.mxu0 0
      %3405 = vmatpush.bf16.msra.mxu0 0
      %3406 = vmatpush.bf16.msra.mxu0 %v3382
      %3407 = vmatpush.bf16.msra.mxu0 %v3381
      %3408 = vmatmul.bf16.gmra.mxu0 %v3386
      %v3409 = vpop.f32.mrf.mxu0
      %v3410 = vadd.f32 0.0, %v3409
      %v3411 = vpop.f32.mrf.mxu0
      %v3412 = vadd.f32 0.0, %v3411
      %3413 = vmatmul.bf16.gmra.mxu0 %v3389
      %v3414 = vpop.f32.mrf.mxu0
      %v3415 = vadd.f32 0.0, %v3414
      %v3416 = vpop.f32.mrf.mxu0
      %v3417 = vadd.f32 0.0, %v3416
      %3418 = vmatmul.bf16.gmra.mxu0 %v3392
      %v3419 = vpop.f32.mrf.mxu0
      %v3420 = vadd.f32 0.0, %v3419
      %v3421 = vpop.f32.mrf.mxu0
      %v3422 = vadd.f32 0.0, %v3421
      %3423 = vmatmul.bf16.gmra.mxu0 %v3395
      %v3424 = vpop.f32.mrf.mxu0
      %v3425 = vadd.f32 0.0, %v3424
      %v3426 = vpop.f32.mrf.mxu0
      %v3427 = vadd.f32 0.0, %v3426
      %3428 = vmatmul.bf16.gmra.mxu0 %v3398
      %v3429 = vpop.f32.mrf.mxu0
      %v3430 = vadd.f32 0.0, %v3429
      %v3431 = vpop.f32.mrf.mxu0
      %v3432 = vadd.f32 0.0, %v3431
      %3433 = vdwg.mxu0
      %v3434 = vadd.f32 %v3343, %v3410
      %v3435 = vadd.f32 %v3344, %v3412
      %v3436 = vadd.f32 %v3345, %v3415
      %v3437 = vadd.f32 %v3346, %v3417
      %v3438 = vadd.f32 %v3347, %v3420
      %v3439 = vadd.f32 %v3348, %v3422
      %v3440 = vadd.f32 %v3349, %v3425
      %v3441 = vadd.f32 %v3350, %v3427
      %v3442 = vadd.f32 %v3351, %v3430
      %v3443 = vadd.f32 %v3352, %v3432
      %v3444 = vld [vmem:[#allocation2 + $0xc] sm:$0xff]
      %v3445 = vld [vmem:[#allocation2 + $0x14] sm:$0xff]
      %v3446 = vld [vmem:[#allocation2 + $0x1c] sm:$0xff]
      %v3447 = vld [vmem:[#allocation2 + $0x24] sm:$0xff]
      %v3448 = vld [vmem:[#allocation2 + $0x2c] sm:$0xff]
      %v3449 = vld [vmem:[#allocation2 + $0x34] sm:$0xff]
      %v3450 = vld [vmem:[#allocation2 + $0x3c] sm:$0xff]
      %v3451 = vld [vmem:[#allocation2 + $0x44] sm:$0xff]
      %v3452 = vld [vmem:[#allocation2 + $0x4c] sm:$0xff]
      %v3453 = vld [vmem:[#allocation2 + $0x54] sm:$0xff]
      %v3454 = vpack.c.bf16 %v3445, %v3444
      %v3455 = vpack.c.bf16 %v3447, %v3446
      %v3456 = vpack.c.bf16 %v3449, %v3448
      %v3457 = vpack.c.bf16 %v3451, %v3450
      %v3458 = vpack.c.bf16 %v3453, %v3452
      %s3459 = scalar_lea.vmem %s3, 80
      %v3460 = vld [vmem:[%s3459] sm:$0xf]
      %v3461 = vld [vmem:[%s3459 + $0x4] sm:$0xf]
      %v3462 = vld [vmem:[%s3459 + $0x8] sm:$0xf]
      %v3463 = vld [vmem:[%s3459 + $0xc] sm:$0xf]
      %v3468 = vunpack.c.l.b16 %v3460
      %v3469 = vunpack.c.l.b16 %v3461
      %v3470 = vunpack.c.l.b16 %v3462
      %v3471 = vunpack.c.l.b16 %v3463
      %v3472 = vpack.c.b16 %v3469, %v3468
      %v3473 = vpack.c.b16 %v3471, %v3470
      %v3477 = vsel %vm679, %v3454, 0
      %v3480 = vsel %vm679, %v3455, 0
      %v3483 = vsel %vm679, %v3456, 0
      %v3486 = vsel %vm679, %v3457, 0
      %v3489 = vsel %vm679, %v3458, 0
      %3491 = vmatpush.bf16.msra.mxu0 0
      %3492 = vmatpush.bf16.msra.mxu0 0
      %3493 = vmatpush.bf16.msra.mxu0 0
      %3494 = vmatpush.bf16.msra.mxu0 0
      %3495 = vmatpush.bf16.msra.mxu0 0
      %3496 = vmatpush.bf16.msra.mxu0 0
      %3497 = vmatpush.bf16.msra.mxu0 %v3473
      %3498 = vmatpush.bf16.msra.mxu0 %v3472
      %3499 = vmatmul.bf16.gmra.mxu0 %v3477
      %v3500 = vpop.f32.mrf.mxu0
      %v3501 = vadd.f32 0.0, %v3500
      %v3502 = vpop.f32.mrf.mxu0
      %v3503 = vadd.f32 0.0, %v3502
      %3504 = vmatmul.bf16.gmra.mxu0 %v3480
      %v3505 = vpop.f32.mrf.mxu0
      %v3506 = vadd.f32 0.0, %v3505
      %v3507 = vpop.f32.mrf.mxu0
      %v3508 = vadd.f32 0.0, %v3507
      %3509 = vmatmul.bf16.gmra.mxu0 %v3483
      %v3510 = vpop.f32.mrf.mxu0
      %v3511 = vadd.f32 0.0, %v3510
      %v3512 = vpop.f32.mrf.mxu0
      %v3513 = vadd.f32 0.0, %v3512
      %3514 = vmatmul.bf16.gmra.mxu0 %v3486
      %v3515 = vpop.f32.mrf.mxu0
      %v3516 = vadd.f32 0.0, %v3515
      %v3517 = vpop.f32.mrf.mxu0
      %v3518 = vadd.f32 0.0, %v3517
      %3519 = vmatmul.bf16.gmra.mxu0 %v3489
      %v3520 = vpop.f32.mrf.mxu0
      %v3521 = vadd.f32 0.0, %v3520
      %v3522 = vpop.f32.mrf.mxu0
      %v3523 = vadd.f32 0.0, %v3522
      %3524 = vdwg.mxu0
      %v3525 = vadd.f32 %v3434, %v3501
      %v3526 = vadd.f32 %v3435, %v3503
      %v3527 = vadd.f32 %v3436, %v3506
      %v3528 = vadd.f32 %v3437, %v3508
      %v3529 = vadd.f32 %v3438, %v3511
      %v3530 = vadd.f32 %v3439, %v3513
      %v3531 = vadd.f32 %v3440, %v3516
      %v3532 = vadd.f32 %v3441, %v3518
      %v3533 = vadd.f32 %v3442, %v3521
      %v3534 = vadd.f32 %v3443, %v3523
      %v3535 = vld [vmem:[#allocation2 + $0x14] sm:$0xff]
      %v3536 = vld [vmem:[#allocation2 + $0x1c] sm:$0xff]
      %v3537 = vld [vmem:[#allocation2 + $0x24] sm:$0xff]
      %v3538 = vld [vmem:[#allocation2 + $0x2c] sm:$0xff]
      %v3539 = vld [vmem:[#allocation2 + $0x34] sm:$0xff]
      %v3540 = vld [vmem:[#allocation2 + $0x3c] sm:$0xff]
      %v3541 = vld [vmem:[#allocation2 + $0x44] sm:$0xff]
      %v3542 = vld [vmem:[#allocation2 + $0x4c] sm:$0xff]
      %v3543 = vld [vmem:[#allocation2 + $0x54] sm:$0xff]
      %v3544 = vld [vmem:[#allocation2 + $0x5c] sm:$0xff]
      %v3545 = vpack.c.bf16 %v3536, %v3535
      %v3546 = vpack.c.bf16 %v3538, %v3537
      %v3547 = vpack.c.bf16 %v3540, %v3539
      %v3548 = vpack.c.bf16 %v3542, %v3541
      %v3549 = vpack.c.bf16 %v3544, %v3543
      %s3550 = scalar_lea.vmem %s3, 96
      %v3551 = vld [vmem:[%s3550] sm:$0xf]
      %v3552 = vld [vmem:[%s3550 + $0x4] sm:$0xf]
      %v3553 = vld [vmem:[%s3550 + $0x8] sm:$0xf]
      %v3554 = vld [vmem:[%s3550 + $0xc] sm:$0xf]
      %v3559 = vunpack.c.l.b16 %v3551
      %v3560 = vunpack.c.l.b16 %v3552
      %v3561 = vunpack.c.l.b16 %v3553
      %v3562 = vunpack.c.l.b16 %v3554
      %v3563 = vpack.c.b16 %v3560, %v3559
      %v3564 = vpack.c.b16 %v3562, %v3561
      %v3568 = vsel %vm679, %v3545, 0
      %v3571 = vsel %vm679, %v3546, 0
      %v3574 = vsel %vm679, %v3547, 0
      %v3577 = vsel %vm679, %v3548, 0
      %v3580 = vsel %vm679, %v3549, 0
      %3582 = vmatpush.bf16.msra.mxu0 0
      %3583 = vmatpush.bf16.msra.mxu0 0
      %3584 = vmatpush.bf16.msra.mxu0 0
      %3585 = vmatpush.bf16.msra.mxu0 0
      %3586 = vmatpush.bf16.msra.mxu0 0
      %3587 = vmatpush.bf16.msra.mxu0 0
      %3588 = vmatpush.bf16.msra.mxu0 %v3564
      %3589 = vmatpush.bf16.msra.mxu0 %v3563
      %3590 = vmatmul.bf16.gmra.mxu0 %v3568
      %v3591 = vpop.f32.mrf.mxu0
      %v3592 = vadd.f32 0.0, %v3591
      %v3593 = vpop.f32.mrf.mxu0
      %v3594 = vadd.f32 0.0, %v3593
      %3595 = vmatmul.bf16.gmra.mxu0 %v3571
      %v3596 = vpop.f32.mrf.mxu0
      %v3597 = vadd.f32 0.0, %v3596
      %v3598 = vpop.f32.mrf.mxu0
      %v3599 = vadd.f32 0.0, %v3598
      %3600 = vmatmul.bf16.gmra.mxu0 %v3574
      %v3601 = vpop.f32.mrf.mxu0
      %v3602 = vadd.f32 0.0, %v3601
      %v3603 = vpop.f32.mrf.mxu0
      %v3604 = vadd.f32 0.0, %v3603
      %3605 = vmatmul.bf16.gmra.mxu0 %v3577
      %v3606 = vpop.f32.mrf.mxu0
      %v3607 = vadd.f32 0.0, %v3606
      %v3608 = vpop.f32.mrf.mxu0
      %v3609 = vadd.f32 0.0, %v3608
      %3610 = vmatmul.bf16.gmra.mxu0 %v3580
      %v3611 = vpop.f32.mrf.mxu0
      %v3612 = vadd.f32 0.0, %v3611
      %v3613 = vpop.f32.mrf.mxu0
      %v3614 = vadd.f32 0.0, %v3613
      %3615 = vdwg.mxu0
      %v3616 = vadd.f32 %v3525, %v3592
      %v3617 = vadd.f32 %v3526, %v3594
      %v3618 = vadd.f32 %v3527, %v3597
      %v3619 = vadd.f32 %v3528, %v3599
      %v3620 = vadd.f32 %v3529, %v3602
      %v3621 = vadd.f32 %v3530, %v3604
      %v3622 = vadd.f32 %v3531, %v3607
      %v3623 = vadd.f32 %v3532, %v3609
      %v3624 = vadd.f32 %v3533, %v3612
      %v3625 = vadd.f32 %v3534, %v3614
      %v3626 = vld [vmem:[#allocation2 + $0x15] sm:$0xff]
      %v3627 = vld [vmem:[#allocation2 + $0x1d] sm:$0xff]
      %v3628 = vld [vmem:[#allocation2 + $0x25] sm:$0xff]
      %v3629 = vld [vmem:[#allocation2 + $0x2d] sm:$0xff]
      %v3630 = vld [vmem:[#allocation2 + $0x35] sm:$0xff]
      %v3631 = vld [vmem:[#allocation2 + $0x3d] sm:$0xff]
      %v3632 = vld [vmem:[#allocation2 + $0x45] sm:$0xff]
      %v3633 = vld [vmem:[#allocation2 + $0x4d] sm:$0xff]
      %v3634 = vld [vmem:[#allocation2 + $0x55] sm:$0xff]
      %v3635 = vld [vmem:[#allocation2 + $0x5d] sm:$0xff]
      %v3636 = vpack.c.bf16 %v3627, %v3626
      %v3637 = vpack.c.bf16 %v3629, %v3628
      %v3638 = vpack.c.bf16 %v3631, %v3630
      %v3639 = vpack.c.bf16 %v3633, %v3632
      %v3640 = vpack.c.bf16 %v3635, %v3634
      %s3641 = scalar_lea.vmem %s3, 112
      %v3642 = vld [vmem:[%s3641] sm:$0xf]
      %v3643 = vld [vmem:[%s3641 + $0x4] sm:$0xf]
      %v3644 = vld [vmem:[%s3641 + $0x8] sm:$0xf]
      %v3645 = vld [vmem:[%s3641 + $0xc] sm:$0xf]
      %v3650 = vunpack.c.l.b16 %v3642
      %v3651 = vunpack.c.l.b16 %v3643
      %v3652 = vunpack.c.l.b16 %v3644
      %v3653 = vunpack.c.l.b16 %v3645
      %v3654 = vpack.c.b16 %v3651, %v3650
      %v3655 = vpack.c.b16 %v3653, %v3652
      %v3659 = vsel %vm679, %v3636, 0
      %v3662 = vsel %vm679, %v3637, 0
      %v3665 = vsel %vm679, %v3638, 0
      %v3668 = vsel %vm679, %v3639, 0
      %v3671 = vsel %vm679, %v3640, 0
      %3673 = vmatpush.bf16.msra.mxu0 0
      %3674 = vmatpush.bf16.msra.mxu0 0
      %3675 = vmatpush.bf16.msra.mxu0 0
      %3676 = vmatpush.bf16.msra.mxu0 0
      %3677 = vmatpush.bf16.msra.mxu0 0
      %3678 = vmatpush.bf16.msra.mxu0 0
      %3679 = vmatpush.bf16.msra.mxu0 %v3655
      %3680 = vmatpush.bf16.msra.mxu0 %v3654
      %3681 = vmatmul.bf16.gmra.mxu0 %v3659
      %v3682 = vpop.f32.mrf.mxu0
      %v3683 = vadd.f32 0.0, %v3682
      %v3684 = vpop.f32.mrf.mxu0
      %v3685 = vadd.f32 0.0, %v3684
      %3686 = vmatmul.bf16.gmra.mxu0 %v3662
      %v3687 = vpop.f32.mrf.mxu0
      %v3688 = vadd.f32 0.0, %v3687
      %v3689 = vpop.f32.mrf.mxu0
      %v3690 = vadd.f32 0.0, %v3689
      %3691 = vmatmul.bf16.gmra.mxu0 %v3665
      %v3692 = vpop.f32.mrf.mxu0
      %v3693 = vadd.f32 0.0, %v3692
      %v3694 = vpop.f32.mrf.mxu0
      %v3695 = vadd.f32 0.0, %v3694
      %3696 = vmatmul.bf16.gmra.mxu0 %v3668
      %v3697 = vpop.f32.mrf.mxu0
      %v3698 = vadd.f32 0.0, %v3697
      %v3699 = vpop.f32.mrf.mxu0
      %v3700 = vadd.f32 0.0, %v3699
      %3701 = vmatmul.bf16.gmra.mxu0 %v3671
      %v3702 = vpop.f32.mrf.mxu0
      %v3703 = vadd.f32 0.0, %v3702
      %v3704 = vpop.f32.mrf.mxu0
      %v3705 = vadd.f32 0.0, %v3704
      %3706 = vdwg.mxu0
      %v3707 = vadd.f32 %v3616, %v3683
      %v3708 = vadd.f32 %v3617, %v3685
      %v3709 = vadd.f32 %v3618, %v3688
      %v3710 = vadd.f32 %v3619, %v3690
      %v3711 = vadd.f32 %v3620, %v3693
      %v3712 = vadd.f32 %v3621, %v3695
      %v3713 = vadd.f32 %v3622, %v3698
      %v3714 = vadd.f32 %v3623, %v3700
      %v3715 = vadd.f32 %v3624, %v3703
      %v3716 = vadd.f32 %v3625, %v3705
      %v3717 = vld [vmem:[#allocation2 + $0x16] sm:$0xff]
      %v3718 = vld [vmem:[#allocation2 + $0x1e] sm:$0xff]
      %v3719 = vld [vmem:[#allocation2 + $0x26] sm:$0xff]
      %v3720 = vld [vmem:[#allocation2 + $0x2e] sm:$0xff]
      %v3721 = vld [vmem:[#allocation2 + $0x36] sm:$0xff]
      %v3722 = vld [vmem:[#allocation2 + $0x3e] sm:$0xff]
      %v3723 = vld [vmem:[#allocation2 + $0x46] sm:$0xff]
      %v3724 = vld [vmem:[#allocation2 + $0x4e] sm:$0xff]
      %v3725 = vld [vmem:[#allocation2 + $0x56] sm:$0xff]
      %v3726 = vld [vmem:[#allocation2 + $0x5e] sm:$0xff]
      %v3727 = vpack.c.bf16 %v3718, %v3717
      %v3728 = vpack.c.bf16 %v3720, %v3719
      %v3729 = vpack.c.bf16 %v3722, %v3721
      %v3730 = vpack.c.bf16 %v3724, %v3723
      %v3731 = vpack.c.bf16 %v3726, %v3725
      %s3732 = scalar_lea.vmem %s3, 128
      %v3733 = vld [vmem:[%s3732] sm:$0xf]
      %v3734 = vld [vmem:[%s3732 + $0x4] sm:$0xf]
      %v3735 = vld [vmem:[%s3732 + $0x8] sm:$0xf]
      %v3736 = vld [vmem:[%s3732 + $0xc] sm:$0xf]
      %v3741 = vunpack.c.l.b16 %v3733
      %v3742 = vunpack.c.l.b16 %v3734
      %v3743 = vunpack.c.l.b16 %v3735
      %v3744 = vunpack.c.l.b16 %v3736
      %v3745 = vpack.c.b16 %v3742, %v3741
      %v3746 = vpack.c.b16 %v3744, %v3743
      %v3750 = vsel %vm679, %v3727, 0
      %v3753 = vsel %vm679, %v3728, 0
      %v3756 = vsel %vm679, %v3729, 0
      %v3759 = vsel %vm679, %v3730, 0
      %v3762 = vsel %vm679, %v3731, 0
      %3764 = vmatpush.bf16.msra.mxu0 0
      %3765 = vmatpush.bf16.msra.mxu0 0
      %3766 = vmatpush.bf16.msra.mxu0 0
      %3767 = vmatpush.bf16.msra.mxu0 0
      %3768 = vmatpush.bf16.msra.mxu0 0
      %3769 = vmatpush.bf16.msra.mxu0 0
      %3770 = vmatpush.bf16.msra.mxu0 %v3746
      %3771 = vmatpush.bf16.msra.mxu0 %v3745
      %3772 = vmatmul.bf16.gmra.mxu0 %v3750
      %v3773 = vpop.f32.mrf.mxu0
      %v3774 = vadd.f32 0.0, %v3773
      %v3775 = vpop.f32.mrf.mxu0
      %v3776 = vadd.f32 0.0, %v3775
      %3777 = vmatmul.bf16.gmra.mxu0 %v3753
      %v3778 = vpop.f32.mrf.mxu0
      %v3779 = vadd.f32 0.0, %v3778
      %v3780 = vpop.f32.mrf.mxu0
      %v3781 = vadd.f32 0.0, %v3780
      %3782 = vmatmul.bf16.gmra.mxu0 %v3756
      %v3783 = vpop.f32.mrf.mxu0
      %v3784 = vadd.f32 0.0, %v3783
      %v3785 = vpop.f32.mrf.mxu0
      %v3786 = vadd.f32 0.0, %v3785
      %3787 = vmatmul.bf16.gmra.mxu0 %v3759
      %v3788 = vpop.f32.mrf.mxu0
      %v3789 = vadd.f32 0.0, %v3788
      %v3790 = vpop.f32.mrf.mxu0
      %v3791 = vadd.f32 0.0, %v3790
      %3792 = vmatmul.bf16.gmra.mxu0 %v3762
      %v3793 = vpop.f32.mrf.mxu0
      %v3794 = vadd.f32 0.0, %v3793
      %v3795 = vpop.f32.mrf.mxu0
      %v3796 = vadd.f32 0.0, %v3795
      %3797 = vdwg.mxu0
      %v3798 = vadd.f32 %v3707, %v3774
      %v3799 = vadd.f32 %v3708, %v3776
      %v3800 = vadd.f32 %v3709, %v3779
      %v3801 = vadd.f32 %v3710, %v3781
      %v3802 = vadd.f32 %v3711, %v3784
      %v3803 = vadd.f32 %v3712, %v3786
      %v3804 = vadd.f32 %v3713, %v3789
      %v3805 = vadd.f32 %v3714, %v3791
      %v3806 = vadd.f32 %v3715, %v3794
      %v3807 = vadd.f32 %v3716, %v3796
      %v3808 = vld [vmem:[%s4] sm:$0x1]
      %v3810 = vperm.slane %v3808, 0
      %v3812 = vadd.f32 %v3798, %v3810
      %v3813 = vadd.f32 %v3799, %v3810
      %v3814 = vadd.f32 %v3800, %v3810
      %v3815 = vadd.f32 %v3801, %v3810
      %v3816 = vadd.f32 %v3802, %v3810
      %v3817 = vadd.f32 %v3803, %v3810
      %v3818 = vadd.f32 %v3804, %v3810
      %v3819 = vadd.f32 %v3805, %v3810
      %v3820 = vadd.f32 %v3806, %v3810
      %v3821 = vadd.f32 %v3807, %v3810
      %v3822 = vmax.f32 %v3812, 0.0
      %v3823 = vmax.f32 %v3813, 0.0
      %v3824 = vmax.f32 %v3814, 0.0
      %v3825 = vmax.f32 %v3815, 0.0
      %v3826 = vmax.f32 %v3816, 0.0
      %v3827 = vmax.f32 %v3817, 0.0
      %v3828 = vmax.f32 %v3818, 0.0
      %v3829 = vmax.f32 %v3819, 0.0
      %v3830 = vmax.f32 %v3820, 0.0
      %v3831 = vmax.f32 %v3821, 0.0
      %v3832 = vpack.c.bf16 %v3822, %v3822
      %v3833 = vpack.c.bf16 %v3823, %v3823
      %v3834 = vpack.c.bf16 %v3824, %v3824
      %v3835 = vpack.c.bf16 %v3825, %v3825
      %v3836 = vpack.c.bf16 %v3826, %v3826
      %v3837 = vpack.c.bf16 %v3827, %v3827
      %v3838 = vpack.c.bf16 %v3828, %v3828
      %v3839 = vpack.c.bf16 %v3829, %v3829
      %v3840 = vpack.c.bf16 %v3830, %v3830
      %v3841 = vpack.c.bf16 %v3831, %v3831
      %vm3842 = vcmask 257024
      %3843 = vst.msk [vmem:[%s312] sm:$0xf] %vm3842, %v3832
      %3844 = vst.msk [vmem:[%s312 + $0x4] sm:$0xf] %vm3842, %v3833
      %3845 = vst.msk [vmem:[%s312 + $0x8] sm:$0xf] %vm3842, %v3834
      %3846 = vst.msk [vmem:[%s312 + $0xc] sm:$0xf] %vm3842, %v3835
      %3847 = vst.msk [vmem:[%s312 + $0x10] sm:$0xf] %vm3842, %v3836
      %3848 = vst.msk [vmem:[%s312 + $0x14] sm:$0xf] %vm3842, %v3837
      %3849 = vst.msk [vmem:[%s312 + $0x18] sm:$0xf] %vm3842, %v3838
      %3850 = vst.msk [vmem:[%s312 + $0x1c] sm:$0xf] %vm3842, %v3839
      %3851 = vst.msk [vmem:[%s312 + $0x20] sm:$0xf] %vm3842, %v3840
      %3852 = vst.msk [vmem:[%s312 + $0x24] sm:$0xf] %vm3842, %v3841
      %v3853 = vld [vmem:[%s5] sm:$0x1f]
      %v3854 = vld [vmem:[%s5 + $0x8] sm:$0x1f]
      %v3855 = vld [vmem:[%s6] sm:$0x1f]
      %3857 = vset.pattern.permute.xlu0 0
      %3858 = vperm.xlu0 %3857, %v3855
      %v3859 = vpop.permute.xlu0 %3858
      %vm3883 = vcmask 1044480
      %v3884 = vrot.slane %v1643, 3
      %v3885 = vrot.slane %v1390, 3
      %v3886 = vsel %vm3883, %v3884, %v3885
      %v3887 = vrot.slane %v1644, 3
      %v3888 = vrot.slane %v1391, 3
      %v3889 = vsel %vm3883, %v3887, %v3888
      %v3890 = vrot.slane %v1392, 3
      %v3891 = vsel %vm3883, %v3885, %v3890
      %v3892 = vrot.slane %v1393, 3
      %v3893 = vsel %vm3883, %v3888, %v3892
      %v3894 = vrot.slane %v1394, 3
      %v3895 = vsel %vm3883, %v3890, %v3894
      %v3896 = vrot.slane %v1395, 3
      %v3897 = vsel %vm3883, %v3892, %v3896
      %v3898 = vrot.slane %v1396, 3
      %v3899 = vsel %vm3883, %v3894, %v3898
      %v3900 = vrot.slane %v1397, 3
      %v3901 = vsel %vm3883, %v3896, %v3900
      %v3902 = vrot.slane %v1398, 3
      %v3903 = vsel %vm3883, %v3898, %v3902
      %v3904 = vrot.slane %v1399, 3
      %v3905 = vsel %vm3883, %v3900, %v3904
      %v3906 = vrot.slane %v1400, 3
      %v3907 = vsel %vm3883, %v3902, %v3906
      %v3908 = vrot.slane %v1401, 3
      %v3909 = vsel %vm3883, %v3904, %v3908
      %v3910 = vrot.slane %v1402, 3
      %v3911 = vsel %vm3883, %v3906, %v3910
      %v3912 = vrot.slane %v1403, 3
      %v3913 = vsel %vm3883, %v3908, %v3912
      %v3914 = vrot.slane %v1404, 3
      %v3915 = vsel %vm3883, %v3910, %v3914
      %v3916 = vrot.slane %v1405, 3
      %v3917 = vsel %vm3883, %v3912, %v3916
      %v3918 = vrot.slane %v1406, 3
      %v3919 = vsel %vm3883, %v3914, %v3918
      %v3920 = vrot.slane %v1407, 3
      %v3921 = vsel %vm3883, %v3916, %v3920
      %v3922 = vrot.slane %v1645, 3
      %v3923 = vsel %vm3883, %v3918, %v3922
      %v3924 = vrot.slane %v1646, 3
      %v3925 = vsel %vm3883, %v3920, %v3924
      %v3937 = vsel %vm929, %v3854, 0
      %v3939 = vsel %vm929, %v3889, 0
      %v3941 = vsel %vm929, %v3893, 0
      %v3943 = vsel %vm929, %v3897, 0
      %v3945 = vsel %vm929, %v3901, 0
      %v3947 = vsel %vm929, %v3905, 0
      %v3949 = vsel %vm929, %v3909, 0
      %v3951 = vsel %vm929, %v3913, 0
      %v3953 = vsel %vm929, %v3917, 0
      %v3955 = vsel %vm929, %v3921, 0
      %v3957 = vsel %vm929, %v3925, 0
      %3959 = vmatpush.xpose.msra.mxu0 0.0
      %3960 = vmatpush.xpose.msra.mxu0 0.0
      %3961 = vmatpush.xpose.msra.mxu0 0.0
      %3962 = vmatpush.xpose.msra.mxu0 0.0
      %3963 = vmatpush.xpose.msra.mxu0 0.0
      %3964 = vmatpush.xpose.msra.mxu0 0.0
      %3965 = vmatpush.xpose.msra.mxu0 %v3923
      %3966 = vmatpush.xpose.msra.mxu0 %v3919
      %3967 = vmatpush.xpose.msra.mxu0 %v3915
      %3968 = vmatpush.xpose.msra.mxu0 %v3911
      %3969 = vmatpush.xpose.msra.mxu0 %v3907
      %3970 = vmatpush.xpose.msra.mxu0 %v3903
      %3971 = vmatpush.xpose.msra.mxu0 %v3899
      %3972 = vmatpush.xpose.msra.mxu0 %v3895
      %3973 = vmatpush.xpose.msra.mxu0 %v3891
      %3974 = vmatpush.xpose.msra.mxu0 %v3886
      %3975 = vmatmul.f32.gmra.mxu0 %v3853
      %v3976 = vpop.f32.mrf.mxu0
      %v3977 = vadd.f32 %v3859, %v3976
      %3978 = vdwg.mxu0
      %3979 = vmatpush.xpose.msra.mxu0 0.0
      %3980 = vmatpush.xpose.msra.mxu0 0.0
      %3981 = vmatpush.xpose.msra.mxu0 0.0
      %3982 = vmatpush.xpose.msra.mxu0 0.0
      %3983 = vmatpush.xpose.msra.mxu0 0.0
      %3984 = vmatpush.xpose.msra.mxu0 0.0
      %3985 = vmatpush.xpose.msra.mxu0 %v3957
      %3986 = vmatpush.xpose.msra.mxu0 %v3955
      %3987 = vmatpush.xpose.msra.mxu0 %v3953
      %3988 = vmatpush.xpose.msra.mxu0 %v3951
      %3989 = vmatpush.xpose.msra.mxu0 %v3949
      %3990 = vmatpush.xpose.msra.mxu0 %v3947
      %3991 = vmatpush.xpose.msra.mxu0 %v3945
      %3992 = vmatpush.xpose.msra.mxu0 %v3943
      %3993 = vmatpush.xpose.msra.mxu0 %v3941
      %3994 = vmatpush.xpose.msra.mxu0 %v3939
      %3995 = vmatmul.f32.gmra.mxu0 %v3937
      %v3996 = vpop.f32.mrf.mxu0
      %v3997 = vadd.f32 %v3977, %v3996
      %3998 = vdwg.mxu0
      %vm3999 = vcmask 651264
      %4000 = vst.msk [vmem:[%s316] sm:$0x1f] %vm3999, %v3997
      %p4001 = scmp.lt.s32.totalorder %s20, 1
      %s4002 = scalar_select %p4001, %s20, 1
      %s4003 = smul.addr %s4002, 10
      %s4004 = smul.addr %s4003, 4
      %s4005 = scalar_lea.vmem %s7, %s4004
      %p4006 = scmp.lt.s32.totalorder %s20, 1
      %s4007 = scalar_select %p4006, %s20, 1
      %s4008 = smul.addr %s4007, 8
      %s4009 = scalar_lea.vmem %s8, %s4008
      // Predicated region
      $region49: #{final_classifier_forward.2} parent=47 // pred_check
        %p4010 = pneg %p190
      $region50: #{final_classifier_forward.2} parent=47 // pred_check_branch
        %4012 = sbr.rel (%p4010) target = $region52
      $region51: #{final_classifier_forward.2} parent=47 // pred_region
        _
      $region52: #{final_classifier_forward.2} parent=47 // pred_fallthru
        _
      // Predicated region
      $region53: #{final_classifier_forward.2} parent=47 // pred_check
        %p4013 = pneg %p216
      $region54: #{final_classifier_forward.2} parent=47 // pred_check_branch
        %4015 = sbr.rel (%p4013) target = $region56
      $region55: #{final_classifier_forward.2} parent=47 // pred_region
        _
      $region56: #{final_classifier_forward.2} parent=47 // pred_fallthru
        _
    $region48: #{final_classifier_forward.2} parent=5 // pred_fallthru
      _
    %p4016 = scmp.le.s32.totalorder 2, %s15
    // Predicated region
    $region57: #{final_classifier_forward.2} parent=5 // pred_check
      %p4017 = pneg %p4016
    $region58: #{final_classifier_forward.2} parent=5 // pred_check_branch
      %4019 = sbr.rel (%p4017) target = $region60
    $region59: #{final_classifier_forward.2} parent=5 // pred_region
      %s4020 = ssub.s32 %s15, 2
      // Predicated region
      $region61: #{final_classifier_forward.2} parent=59 // pred_check
        %p4021 = pneg %p196
      $region62: #{final_classifier_forward.2} parent=59 // pred_check_branch
        %4023 = sbr.rel (%p4021) target = $region64
      $region63: #{final_classifier_forward.2} parent=59 // pred_region
        %p4024 = scmp.lt.s32.totalorder %s21, 1
        %s4025 = scalar_select %p4024, %s21, 1
        %s4026 = smul.addr %s4025, 10
        %s4027 = smul.addr %s4026, 4
        %s4028 = scalar_lea.vmem %s7, %s4027
      $region64: #{final_classifier_forward.2} parent=59 // pred_fallthru
        _
      // Predicated region
      $region65: #{final_classifier_forward.2} parent=59 // pred_check
        %p4029 = pneg %p222
      $region66: #{final_classifier_forward.2} parent=59 // pred_check_branch
        %4031 = sbr.rel (%p4029) target = $region68
      $region67: #{final_classifier_forward.2} parent=59 // pred_region
        %p4032 = scmp.lt.s32.totalorder %s21, 1
        %s4033 = scalar_select %p4032, %s21, 1
        %s4034 = smul.addr %s4033, 8
        %s4035 = scalar_lea.vmem %s8, %s4034
      $region68: #{final_classifier_forward.2} parent=59 // pred_fallthru
        _
    $region60: #{final_classifier_forward.2} parent=5 // pred_fallthru
      _
  $region6: #{final_classifier_forward.2} parent=0 // loop_footer
    %s19 = sadd.s32 1, %s15
  $region7: #{final_classifier_forward.2} parent=0 // loop_footer_branch
    %14 = sbr.rel target = $region3
  $region8: #{final_classifier_forward.2} parent=0 // loop_exit
    _

</llo_original>
